<compile_context>
chip_gen: v7x
topology: tpu7x:2x2x1
jax: 0.10.0
libtpu: 0.0.40
codegen_flags: <defaults>
</compile_context>

<pallas_src>
import math
import functools

import jax
import jax.numpy as jnp
from jax.experimental import pallas as pl
from jax.experimental.pallas import tpu as pltpu


def _round_up(x, m):
    return (x + m - 1) // m * m


# ----------------------------------------------------------------------------
# Kernels
# ----------------------------------------------------------------------------
def _make_fused_kernel(approximate_gelu):
    """Hidden dim untiled: one shot fc1 -> GELU -> fc2, no accumulator."""

    def kernel(x_ref, w1_ref, b1_ref, w2_ref, b2_ref, o_ref):
        # x / weights arrive already in the (bf16) compute dtype; accumulate f32.
        h = jnp.dot(x_ref[...], w1_ref[...],
                    preferred_element_type=jnp.float32)            # (tm, H) f32
        h = h + b1_ref[...].astype(jnp.float32)
        h = jax.nn.gelu(h, approximate=approximate_gelu)           # f32 on VPU/EUP
        y = jnp.dot(h.astype(w2_ref.dtype), w2_ref[...],
                    preferred_element_type=jnp.float32)            # (tm, Cout) f32
        o_ref[...] = (y + b2_ref[...].astype(jnp.float32)).astype(o_ref.dtype)

    return kernel


def _make_hidden_tiled_kernel(approximate_gelu):
    """Fallback for large hidden dims: hidden tiled on grid axis 1 with an f32
    VMEM accumulator (init at j==0, store at the last j)."""

    def kernel(x_ref, w1_ref, b1_ref, w2_ref, b2_ref, o_ref, acc_ref):
        j = pl.program_id(1)

        @pl.when(j == 0)
        def _init():
            acc_ref[...] = jnp.zeros_like(acc_ref)

        h = jnp.dot(x_ref[...], w1_ref[...],
                    preferred_element_type=jnp.float32)
        h = h + b1_ref[...].astype(jnp.float32)
        h = jax.nn.gelu(h, approximate=approximate_gelu)
        acc_ref[...] += jnp.dot(h.astype(w2_ref.dtype), w2_ref[...],
                                preferred_element_type=jnp.float32)

        @pl.when(j == pl.num_programs(1) - 1)
        def _finalize():
            o_ref[...] = (acc_ref[...]
                          + b2_ref[...].astype(jnp.float32)).astype(o_ref.dtype)

    return kernel


# ----------------------------------------------------------------------------
# Wrapper
# ----------------------------------------------------------------------------
def mlp_forward(x, w1, b1, w2, b2, *, tile_m=512, tile_h=512,
                compute_dtype=jnp.bfloat16, out_dtype=None,
                approximate_gelu=True,
                vmem_budget_bytes=24 * 1024 * 1024):
    """y = gelu(x @ w1 + b1) @ w2 + b2 for x of shape (..., Cin).

    w1: (Cin, Hidden), b1: (Hidden,), w2: (Hidden, Cout), b2: (Cout,).
    Matmul operands run in `compute_dtype` (bf16 recommended; f32 weights are
    cast, which changes numerics vs an f32 reference).  Accumulation is f32.
    """
    orig_lead = x.shape[:-1]
    cin = x.shape[-1]
    hidden = w1.shape[1]
    cout = w2.shape[1]
    out_dtype = out_dtype or x.dtype

    # Fold the f32->bf16 cast into the wrapper-side reshape copy: the kernel
    # then DMAs half the activation bytes and does no in-kernel re-casts.
    x2 = x.reshape(-1, cin).astype(compute_dtype)
    m = x2.shape[0]

    w1 = w1.astype(compute_dtype)
    w2 = w2.astype(compute_dtype)
    b1 = b1.reshape(1, hidden).astype(jnp.float32)
    b2 = b2.reshape(1, cout).astype(jnp.float32)

    # Row tiling: bf16 vregs pack (16, 128) rows, so pad to a multiple of 16;
    # large M uses tile_m (a 128/256 multiple) so >=2 "parallel" tiles exist
    # for v7x's two TensorCores at the example shapes (M=1024, tm=512).
    sub = 16 if jnp.dtype(compute_dtype) == jnp.dtype(jnp.bfloat16) else 8
    tm = min(tile_m, _round_up(m, sub))
    mp = _round_up(m, tm)
    if mp != m:
        x2 = jnp.pad(x2, ((0, mp - m), (0, 0)))

    cbytes = jnp.dtype(compute_dtype).itemsize
    obytes = jnp.dtype(out_dtype).itemsize
    # VMEM estimate for the resident-weight (fused) path: weight blocks are
    # double-buffered by default (but only fetched once thanks to the constant
    # index_map), plus double-buffered x/out tiles and the f32 intermediate.
    resident_bytes = (
        2 * (hidden * (cin + cout) * cbytes + (hidden + cout) * 4)  # W1,W2,b1,b2
        + 2 * tm * cin * cbytes                                     # x tile
        + 2 * tm * cout * obytes                                    # out tile
        + tm * hidden * 4)                                          # f32 hidden
    use_fused = resident_bytes <= vmem_budget_bytes

    compiler_params = pltpu.CompilerParams(
        dimension_semantics=("parallel",) if use_fused
        else ("parallel", "arbitrary"),
        vmem_limit_bytes=48 * 1024 * 1024)

    if use_fused:
        grid = (mp // tm,)
        out = pl.pallas_call(
            _make_fused_kernel(approximate_gelu),
            out_shape=jax.ShapeDtypeStruct((mp, cout), out_dtype),
            grid_spec=pltpu.PrefetchScalarGridSpec(
                num_scalar_prefetch=0,
                grid=grid,
                in_specs=[
                    pl.BlockSpec((tm, cin), lambda i: (i, 0)),       # x rows
                    # Constant index_maps: weights/biases are DMA'd once for
                    # the whole grid (Mosaic skips copies for unchanged blocks).
                    pl.BlockSpec((cin, hidden), lambda i: (0, 0)),   # W1
                    pl.BlockSpec((1, hidden), lambda i: (0, 0)),     # b1
                    pl.BlockSpec((hidden, cout), lambda i: (0, 0)),  # W2
                    pl.BlockSpec((1, cout), lambda i: (0, 0)),       # b2
                ],
                out_specs=pl.BlockSpec((tm, cout), lambda i: (i, 0)),
            ),
            compiler_params=compiler_params,
        )(x2, w1, b1, w2, b2)
    else:
        # Hidden-tiled fallback for very large hidden dims.  256-aligned tiles
        # fill the v6e/v7x 256x256 MXU; zero-padding the hidden dim is
        # harmless (gelu(0)*0-rows of W2 contribute nothing).
        th = max(256, _round_up(min(tile_h, hidden), 256))
        hp = _round_up(hidden, th)
        if hp != hidden:
            w1 = jnp.pad(w1, ((0, 0), (0, hp - hidden)))
            b1 = jnp.pad(b1, ((0, 0), (0, hp - hidden)))
            w2 = jnp.pad(w2, ((0, hp - hidden), (0, 0)))
        grid = (mp // tm, hp // th)
        out = pl.pallas_call(
            _make_hidden_tiled_kernel(approximate_gelu),
            out_shape=jax.ShapeDtypeStruct((mp, cout), out_dtype),
            grid_spec=pltpu.PrefetchScalarGridSpec(
                num_scalar_prefetch=0,
                grid=grid,
                in_specs=[
                    pl.BlockSpec((tm, cin), lambda i, j: (i, 0)),
                    pl.BlockSpec((cin, th), lambda i, j: (0, j)),
                    pl.BlockSpec((1, th), lambda i, j: (0, j)),
                    pl.BlockSpec((th, cout), lambda i, j: (j, 0)),
                    pl.BlockSpec((1, cout), lambda i, j: (0, 0)),
                ],
                out_specs=pl.BlockSpec((tm, cout), lambda i, j: (i, 0)),
                scratch_shapes=[pltpu.VMEM((tm, cout), jnp.float32)],
            ),
            compiler_params=compiler_params,
        )(x2, w1, b1, w2, b2)

    if mp != m:
        out = out[:m]
    return out.reshape(*orig_lead, cout)


def mlp_reference(x, w1, b1, w2, b2):
    h = jax.nn.gelu(jnp.dot(x, w1) + b1.reshape(1, -1), approximate=False)
    return jnp.dot(h, w2) + b2.reshape(1, -1)


# ----------------------------------------------------------------------------
if __name__ == "__main__":
    # Token MLP shapes consistent with the module (mlp_ratio = 4).  Cout = 128
    # keeps output stores lane-dense; M = B*L = 1024 gives two 512-row
    # "parallel" tiles (both v7x TensorCores busy).
    B, L = 4, 256
    Cin, Hid, Cout = 128, 512, 128

    key = jax.random.PRNGKey(0)
    kx, k1, k2, k3, k4 = jax.random.split(key, 5)
    x = jax.random.normal(kx, (B, L, Cin), jnp.float32)

    # PyTorch nn.Linear default init: U(-1/sqrt(fan_in), 1/sqrt(fan_in)).
    lim1 = 1.0 / math.sqrt(Cin)
    w1 = jax.random.uniform(k1, (Cin, Hid), jnp.float32, -lim1, lim1)
    b1 = jax.random.uniform(k2, (Hid,), jnp.float32, -lim1, lim1)
    lim2 = 1.0 / math.sqrt(Hid)
    w2 = jax.random.uniform(k3, (Hid, Cout), jnp.float32, -lim2, lim2)
    b2 = jax.random.uniform(k4, (Cout,), jnp.float32, -lim2, lim2)

    # Store matmul weights in bf16 (halves weight DMA / VMEM); biases stay f32.
    w1_bf = w1.astype(jnp.bfloat16)
    w2_bf = w2.astype(jnp.bfloat16)

    fwd = jax.jit(functools.partial(mlp_forward, tile_m=512,
                                    compute_dtype=jnp.bfloat16,
                                    approximate_gelu=True))
    out = fwd(x, w1_bf, b1, w2_bf, b2)
    out = jax.block_until_ready(out)

    assert out.shape == (B, L, Cout)
    assert bool(jnp.all(jnp.isfinite(out)))

    # Validate against an f32 exact-GELU reference with a tolerance appropriate
    # for bf16 matmul operands + tanh GELU (accumulation is f32).
    ref = mlp_reference(x.reshape(-1, Cin), w1, b1, w2, b2).reshape(B, L, Cout)
    err = float(jnp.max(jnp.abs(out - ref)))
    scale = float(jnp.max(jnp.abs(ref)))
    assert err <= 5e-2 * max(1.0, scale), f"max abs err {err} (scale {scale})"

    print("KERNEL_OK")
</pallas_src>

<mosaic_0001>
module attributes {stable_mosaic.version = 11 : i64} {
  func.func @kernel(%arg0: i32, %arg1: memref<512x128xbf16, #tpu.memory_space<vmem>>, %arg2: memref<128x512xbf16, #tpu.memory_space<vmem>>, %arg3: memref<1x512xf32, #tpu.memory_space<vmem>>, %arg4: memref<512x128xbf16, #tpu.memory_space<vmem>>, %arg5: memref<1x128xf32, #tpu.memory_space<vmem>>, %arg6: memref<512x128xf32, #tpu.memory_space<vmem>>) attributes {dimension_semantics = [#tpu.dimension_semantics<parallel>], iteration_bounds = array<i64: 2>, scalar_prefetch = 0 : i64, scratch_operands = 0 : i64, tpu.core_type = #tpu.core_type<tc>, window_params = [{transform_indices = @transform_0, window_bounds = array<i64: 512, 128>}, {pipeline_mode = #tpu.pipeline_mode<synchronous>, transform_indices = @transform_1, window_bounds = array<i64: 128, 512>}, {pipeline_mode = #tpu.pipeline_mode<synchronous>, transform_indices = @transform_2, window_bounds = array<i64: 1, 512>}, {pipeline_mode = #tpu.pipeline_mode<synchronous>, transform_indices = @transform_3, window_bounds = array<i64: 512, 128>}, {pipeline_mode = #tpu.pipeline_mode<synchronous>, transform_indices = @transform_4, window_bounds = array<i64: 1, 128>}, {transform_indices = @transform_5, window_bounds = array<i64: 512, 128>}]} {
    %c0 = arith.constant 0 : index
    %c0_0 = arith.constant 0 : index
    %0 = vector.load %arg1[%c0, %c0_0] : memref<512x128xbf16, #tpu.memory_space<vmem>>, vector<512x128xbf16>
    %c0_1 = arith.constant 0 : index
    %c0_2 = arith.constant 0 : index
    %1 = vector.load %arg2[%c0_1, %c0_2] : memref<128x512xbf16, #tpu.memory_space<vmem>>, vector<128x512xbf16>
    %cst = arith.constant dense<0.000000e+00> : vector<512x512xf32>
    %2 = tpu.matmul %0, %1, %cst {dimension_numbers = #tpu.dot_dimension_numbers<[1], [0], [0], [1], [0, 0, 1, 1], [], []>} : vector<512x128xbf16>, vector<128x512xbf16>, vector<512x512xf32> -> vector<512x512xf32>
    %c0_3 = arith.constant 0 : index
    %c0_4 = arith.constant 0 : index
    %3 = vector.load %arg3[%c0_3, %c0_4] : memref<1x512xf32, #tpu.memory_space<vmem>>, vector<1x512xf32>
    %4 = vector.broadcast %3 : vector<1x512xf32> to vector<512x512xf32>
    %5 = arith.addf %2, %4 : vector<512x512xf32>
    %6 = arith.mulf %5, %5 : vector<512x512xf32>
    %7 = arith.mulf %5, %6 : vector<512x512xf32>
    %cst_5 = arith.constant 4.471500e-02 : f32
    %8 = vector.broadcast %cst_5 : f32 to vector<512x512xf32>
    %9 = arith.mulf %8, %7 : vector<512x512xf32>
    %10 = arith.addf %5, %9 : vector<512x512xf32>
    %cst_6 = arith.constant 0.797884583 : f32
    %11 = vector.broadcast %cst_6 : f32 to vector<512x512xf32>
    %12 = arith.mulf %11, %10 : vector<512x512xf32>
    %13 = math.tanh %12 : vector<512x512xf32>
    %cst_7 = arith.constant 1.000000e+00 : f32
    %14 = vector.broadcast %cst_7 : f32 to vector<512x512xf32>
    %15 = arith.addf %14, %13 : vector<512x512xf32>
    %cst_8 = arith.constant 5.000000e-01 : f32
    %16 = vector.broadcast %cst_8 : f32 to vector<512x512xf32>
    %17 = arith.mulf %16, %15 : vector<512x512xf32>
    %18 = arith.mulf %5, %17 : vector<512x512xf32>
    %19 = arith.truncf %18 : vector<512x512xf32> to vector<512x512xbf16>
    %c0_9 = arith.constant 0 : index
    %c0_10 = arith.constant 0 : index
    %20 = vector.load %arg4[%c0_9, %c0_10] : memref<512x128xbf16, #tpu.memory_space<vmem>>, vector<512x128xbf16>
    %cst_11 = arith.constant dense<0.000000e+00> : vector<512x128xf32>
    %21 = tpu.matmul %19, %20, %cst_11 {dimension_numbers = #tpu.dot_dimension_numbers<[1], [0], [0], [1], [0, 0, 1, 1], [], []>} : vector<512x512xbf16>, vector<512x128xbf16>, vector<512x128xf32> -> vector<512x128xf32>
    %c0_12 = arith.constant 0 : index
    %c0_13 = arith.constant 0 : index
    %22 = vector.load %arg5[%c0_12, %c0_13] : memref<1x128xf32, #tpu.memory_space<vmem>>, vector<1x128xf32>
    %23 = vector.broadcast %22 : vector<1x128xf32> to vector<512x128xf32>
    %24 = arith.addf %21, %23 : vector<512x128xf32>
    %c0_14 = arith.constant 0 : index
    %c0_15 = arith.constant 0 : index
    %25 = vector.load %arg6[%c0_14, %c0_15] : memref<512x128xf32, #tpu.memory_space<vmem>>, vector<512x128xf32>
    tpu.vector_store %arg6[%c0_14, %c0_15], %24 {strides = array<i32>} : memref<512x128xf32, #tpu.memory_space<vmem>>, vector<512x128xf32>,
    return
  }
  func.func @transform_0(%arg0: i32) -> (i32, i32) {
    %c0_i32 = arith.constant 0 : i32
    %c0_i32_0 = arith.constant 0 : i32
    return %arg0, %c0_i32 : i32, i32
  }
  func.func @transform_1(%arg0: i32) -> (i32, i32) {
    %c0_i32 = arith.constant 0 : i32
    %c0_i32_0 = arith.constant 0 : i32
    %c0_i32_1 = arith.constant 0 : i32
    return %c0_i32, %c0_i32_0 : i32, i32
  }
  func.func @transform_2(%arg0: i32) -> (i32, i32) {
    %c0_i32 = arith.constant 0 : i32
    %c0_i32_0 = arith.constant 0 : i32
    %c0_i32_1 = arith.constant 0 : i32
    return %c0_i32, %c0_i32_0 : i32, i32
  }
  func.func @transform_3(%arg0: i32) -> (i32, i32) {
    %c0_i32 = arith.constant 0 : i32
    %c0_i32_0 = arith.constant 0 : i32
    %c0_i32_1 = arith.constant 0 : i32
    return %c0_i32, %c0_i32_0 : i32, i32
  }
  func.func @transform_4(%arg0: i32) -> (i32, i32) {
    %c0_i32 = arith.constant 0 : i32
    %c0_i32_0 = arith.constant 0 : i32
    %c0_i32_1 = arith.constant 0 : i32
    return %c0_i32, %c0_i32_0 : i32, i32
  }
  func.func @transform_5(%arg0: i32) -> (i32, i32) {
    %c0_i32 = arith.constant 0 : i32
    %c0_i32_0 = arith.constant 0 : i32
    return %arg0, %c0_i32 : i32, i32
  }
}

</mosaic_0001>

<llo_original>
// kernel: mlp_forward.1
$region0: #{mlp_forward.1}
  #allocation0 [shape = 'u32[]', space=smem, size = 0x4, offset = 0x4, fixed_abs, tag = 'smem constant byte address 0x4 - core index']
  #allocation1 [shape = 'u32[144,128]{1,0:T(1,128)}', space=vmem, size = 0x12000, scoped, tag = 'internal scratch']
  %s0 = inlined_call_operand.vmem [shape: bf16[1024,128], index: 0, kind: input, shape index: {}]
  %s1 = inlined_call_operand.vmem [shape: bf16[128,512], index: 1, kind: input, shape index: {}]
  %s2 = inlined_call_operand.vmem [shape: f32[1,512], index: 2, kind: input, shape index: {}]
  %s3 = inlined_call_operand.vmem [shape: bf16[512,128], index: 3, kind: input, shape index: {}]
  %s4 = inlined_call_operand.vmem [shape: f32[1,128], index: 4, kind: input, shape index: {}]
  %s5 = inlined_call_operand.hbm [shape: f32[1024,128], index: 5, kind: output, shape index: {}]
  %s6 = sld [smem:[#allocation0]]
  $region53: #{mlp_forward.1} parent=0
    _
  %s8 = ssub.s32 1, %s6
  %s9 = scalar_select 0, %s8, %s6
  $region1: #{mlp_forward.1} parent=0
    #allocation2 [shape = 'u8[524288]{0}', space=vmem, size = 0x80000, scoped, tag = 'output window, operand 0']
    #allocation3 [shape = 's32[2]{0}', space=sflag, size = 0x8, scoped, tag = 'scoped memory for mlp_forward.1']
    %10 = vsyncpa [#allocation3], 0
    %s11 = scalar_lea.sflag [#allocation3], 1
    %12 = vsyncpa %s11, 0
    loop: start=0, step=1, limit=4
    $region2: #{mlp_forward.1} parent=1 // loop_pre_header
      _
    $region3: #{mlp_forward.1} parent=1 // loop_header
      %s14 = sphi 0, %s18
      %p15 = scmp.ge.s32.totalorder %s14, 4
      %s24 = sphi 0, %s26
      %s27 = sphi 0, %s24
      %s28 = sphi 0, %s27
      %s44 = sphi 0, %s28
      %s48 = sphi 0, %s48
      %s50 = sphi 0, %s48
      %s51 = sphi 0, %s50
      %s65 = sphi 0, %s51
      %s69 = sphi 0, %s69
      %s71 = sphi 0, %s69
      %s72 = sphi 0, %s71
      %s86 = sphi 0, %s72
      %s90 = sphi 0, %s90
      %s92 = sphi 0, %s90
      %s93 = sphi 0, %s92
      %s107 = sphi 0, %s93
      %s111 = sphi 0, %s111
      %s113 = sphi 0, %s111
      %s114 = sphi 0, %s113
      %s128 = sphi 0, %s114
      %s134 = sphi 0, %s136
      %s137 = sphi 0, %s134
      %s138 = sphi 0, %s137
      %s154 = sphi 0, %s138
    $region4: #{mlp_forward.1} parent=1 // loop_header_branch
      %17 = sbr.rel (%p15) target = $region8
    $region5: #{mlp_forward.1} parent=1 // loop_body
      %s19 = ssub.s32 %s14, 1
      %s20 = ssub.s32 %s14, 2
      %s21 = sadd.s32 %s14, 1
      %s22 = ssub.s32 %s14, %s21
      %p23 = scmp.eq.s32.totalorder %s22, 0
      %s25 = sadd.s32 %s24, 1
      %s26 = scalar_select %p23, %s24, %s25
      %p29 = pneg %p23
      %p30 = scmp.eq.s32.totalorder %s14, 1
      %p31 = por %p29, %p30
      %p32 = scmp.ne.s32.totalorder %s24, %s27
      %p33 = scmp.eq.s32.totalorder %s14, 0
      %p34 = por %p32, %p33
      %p35 = scmp.ne.s32.totalorder %s24, %s27
      %p36 = scmp.eq.s32.totalorder %s19, 1
      %p37 = por %p35, %p36
      %p38 = scmp.ne.s32.totalorder %s27, %s28
      %p39 = scmp.eq.s32.totalorder %s19, 0
      %p40 = por %p38, %p39
      %p41 = scmp.ne.s32.totalorder %s27, %s28
      %p42 = scmp.eq.s32.totalorder %s20, 1
      %p43 = por %p41, %p42
      %p45 = scmp.ne.s32.totalorder %s28, %s44
      %p46 = scmp.eq.s32.totalorder %s20, 0
      %p47 = por %p45, %p46
      %s49 = sadd.s32 %s48, 1
      %p52 = scmp.eq.s32.totalorder %s14, 1
      %p53 = scmp.ne.s32.totalorder %s48, %s50
      %p54 = scmp.eq.s32.totalorder %s14, 0
      %p55 = por %p53, %p54
      %p56 = scmp.ne.s32.totalorder %s48, %s50
      %p57 = scmp.eq.s32.totalorder %s19, 1
      %p58 = por %p56, %p57
      %p59 = scmp.ne.s32.totalorder %s50, %s51
      %p60 = scmp.eq.s32.totalorder %s19, 0
      %p61 = por %p59, %p60
      %p62 = scmp.ne.s32.totalorder %s50, %s51
      %p63 = scmp.eq.s32.totalorder %s20, 1
      %p64 = por %p62, %p63
      %p66 = scmp.ne.s32.totalorder %s51, %s65
      %p67 = scmp.eq.s32.totalorder %s20, 0
      %p68 = por %p66, %p67
      %s70 = sadd.s32 %s69, 1
      %p73 = scmp.eq.s32.totalorder %s14, 1
      %p74 = scmp.ne.s32.totalorder %s69, %s71
      %p75 = scmp.eq.s32.totalorder %s14, 0
      %p76 = por %p74, %p75
      %p77 = scmp.ne.s32.totalorder %s69, %s71
      %p78 = scmp.eq.s32.totalorder %s19, 1
      %p79 = por %p77, %p78
      %p80 = scmp.ne.s32.totalorder %s71, %s72
      %p81 = scmp.eq.s32.totalorder %s19, 0
      %p82 = por %p80, %p81
      %p83 = scmp.ne.s32.totalorder %s71, %s72
      %p84 = scmp.eq.s32.totalorder %s20, 1
      %p85 = por %p83, %p84
      %p87 = scmp.ne.s32.totalorder %s72, %s86
      %p88 = scmp.eq.s32.totalorder %s20, 0
      %p89 = por %p87, %p88
      %s91 = sadd.s32 %s90, 1
      %p94 = scmp.eq.s32.totalorder %s14, 1
      %p95 = scmp.ne.s32.totalorder %s90, %s92
      %p96 = scmp.eq.s32.totalorder %s14, 0
      %p97 = por %p95, %p96
      %p98 = scmp.ne.s32.totalorder %s90, %s92
      %p99 = scmp.eq.s32.totalorder %s19, 1
      %p100 = por %p98, %p99
      %p101 = scmp.ne.s32.totalorder %s92, %s93
      %p102 = scmp.eq.s32.totalorder %s19, 0
      %p103 = por %p101, %p102
      %p104 = scmp.ne.s32.totalorder %s92, %s93
      %p105 = scmp.eq.s32.totalorder %s20, 1
      %p106 = por %p104, %p105
      %p108 = scmp.ne.s32.totalorder %s93, %s107
      %p109 = scmp.eq.s32.totalorder %s20, 0
      %p110 = por %p108, %p109
      %s112 = sadd.s32 %s111, 1
      %p115 = scmp.eq.s32.totalorder %s14, 1
      %p116 = scmp.ne.s32.totalorder %s111, %s113
      %p117 = scmp.eq.s32.totalorder %s14, 0
      %p118 = por %p116, %p117
      %p119 = scmp.ne.s32.totalorder %s111, %s113
      %p120 = scmp.eq.s32.totalorder %s19, 1
      %p121 = por %p119, %p120
      %p122 = scmp.ne.s32.totalorder %s113, %s114
      %p123 = scmp.eq.s32.totalorder %s19, 0
      %p124 = por %p122, %p123
      %p125 = scmp.ne.s32.totalorder %s113, %s114
      %p126 = scmp.eq.s32.totalorder %s20, 1
      %p127 = por %p125, %p126
      %p129 = scmp.ne.s32.totalorder %s114, %s128
      %p130 = scmp.eq.s32.totalorder %s20, 0
      %p131 = por %p129, %p130
      %s132 = ssub.s32 %s14, %s21
      %p133 = scmp.eq.s32.totalorder %s132, 0
      %s135 = sadd.s32 %s134, 1
      %s136 = scalar_select %p133, %s134, %s135
      %p139 = pneg %p133
      %p140 = scmp.eq.s32.totalorder %s14, 1
      %p141 = por %p139, %p140
      %p142 = scmp.ne.s32.totalorder %s134, %s137
      %p143 = scmp.eq.s32.totalorder %s14, 0
      %p144 = por %p142, %p143
      %p145 = scmp.ne.s32.totalorder %s134, %s137
      %p146 = scmp.eq.s32.totalorder %s19, 1
      %p147 = por %p145, %p146
      %p148 = scmp.ne.s32.totalorder %s137, %s138
      %p149 = scmp.eq.s32.totalorder %s19, 0
      %p150 = por %p148, %p149
      %p151 = scmp.ne.s32.totalorder %s137, %s138
      %p152 = scmp.eq.s32.totalorder %s20, 1
      %p153 = por %p151, %p152
      %p155 = scmp.ne.s32.totalorder %s138, %s154
      %p156 = scmp.eq.s32.totalorder %s20, 0
      %p157 = por %p155, %p156
      %p158 = scmp.le.s32.totalorder 1, %s14
      %p159 = scmp.lt.s32.totalorder %s14, 3
      %p160 = pnand %p158, %p159
      %p161 = pneg %p160
      // Predicated region
      $region9: #{mlp_forward.1} parent=5 // pred_check
        _
      $region10: #{mlp_forward.1} parent=5 // pred_check_branch
        %163 = sbr.rel (%p160) target = $region12
      $region11: #{mlp_forward.1} parent=5 // pred_region
        %s164 = ssub.s32 %s14, 1
        // Predicated region
        $region13: #{mlp_forward.1} parent=11 // pred_check
          %p165 = pneg %p61
        $region14: #{mlp_forward.1} parent=11 // pred_check_branch
          %167 = sbr.rel (%p165) target = $region16
        $region15: #{mlp_forward.1} parent=11 // pred_region
          _
        $region16: #{mlp_forward.1} parent=11 // pred_fallthru
          _
        // Predicated region
        $region17: #{mlp_forward.1} parent=11 // pred_check
          %p168 = pneg %p82
        $region18: #{mlp_forward.1} parent=11 // pred_check_branch
          %170 = sbr.rel (%p168) target = $region20
        $region19: #{mlp_forward.1} parent=11 // pred_region
          _
        $region20: #{mlp_forward.1} parent=11 // pred_fallthru
          _
        // Predicated region
        $region21: #{mlp_forward.1} parent=11 // pred_check
          %p171 = pneg %p103
        $region22: #{mlp_forward.1} parent=11 // pred_check_branch
          %173 = sbr.rel (%p171) target = $region24
        $region23: #{mlp_forward.1} parent=11 // pred_region
          _
        $region24: #{mlp_forward.1} parent=11 // pred_fallthru
          _
        // Predicated region
        $region25: #{mlp_forward.1} parent=11 // pred_check
          %p174 = pneg %p124
        $region26: #{mlp_forward.1} parent=11 // pred_check_branch
          %176 = sbr.rel (%p174) target = $region28
        $region27: #{mlp_forward.1} parent=11 // pred_region
          _
        $region28: #{mlp_forward.1} parent=11 // pred_fallthru
          _
      $region12: #{mlp_forward.1} parent=5 // pred_fallthru
        _
      %p177 = scmp.lt.s32.totalorder %s14, 2
      // Predicated region
      $region29: #{mlp_forward.1} parent=5 // pred_check
        %p178 = pneg %p177
      $region30: #{mlp_forward.1} parent=5 // pred_check_branch
        %180 = sbr.rel (%p178) target = $region32
      $region31: #{mlp_forward.1} parent=5 // pred_region
        // Predicated region
        $region33: #{mlp_forward.1} parent=31 // pred_check
          %p181 = pneg %p34
        $region34: #{mlp_forward.1} parent=31 // pred_check_branch
          %183 = sbr.rel (%p181) target = $region36
        $region35: #{mlp_forward.1} parent=31 // pred_region
          %s184 = smul.u32 64, %s14
          %p185 = scmp.lt.s32.totalorder %s184, 127
          %s186 = scalar_select %p185, %s184, 127
          %s187 = smul.addr %s186, 4
          %s188 = scalar_lea.vmem %s0, %s187
          %s189 = smul.u32 64, %s14
        $region36: #{mlp_forward.1} parent=31 // pred_fallthru
          _
      $region32: #{mlp_forward.1} parent=5 // pred_fallthru
        _
      %p190 = scmp.le.s32.totalorder 1, %s14
      %p191 = scmp.lt.s32.totalorder %s14, 3
      %p192 = pnand %p190, %p191
      %p193 = pneg %p192
      // Predicated region
      $region37: #{mlp_forward.1} parent=5 // pred_check
        _
      $region38: #{mlp_forward.1} parent=5 // pred_check_branch
        %195 = sbr.rel (%p192) target = $region40
      $region39: #{mlp_forward.1} parent=5 // pred_region
        %s196 = ssub.s32 %s14, 1
        %s197 = smul.u32 64, %s19
        %p198 = scmp.lt.s32.totalorder %s197, 127
        %s199 = scalar_select %p198, %s197, 127
        %s200 = smul.addr %s199, 4
        %s201 = scalar_lea.vmem %s0, %s200
        %p202 = pneg %p40
        %p203 = pneg %p37
        %p204 = pneg %p61
        %p205 = pneg %p58
        %p206 = pneg %p82
        %p207 = pneg %p79
        %p208 = pneg %p103
        %p209 = pneg %p100
        %p210 = pneg %p124
        %p211 = pneg %p121
        %p212 = pneg %p150
        %p213 = pneg %p147
        %s214 = sand.u32 %s137, 1
        %s215 = scalar_lea.sflag [#allocation3], %s214
        %s216 = sand.u32 %s137, 1
        %s217 = smul.addr %s216, 512
        %s218 = scalar_lea.vmem [#allocation2], %s217
        %s219 = smul.u32 64, %s19
        %p220 = scmp.lt.s32.totalorder %s219, 127
        %s221 = scalar_select %p220, %s219, 127
        %s222 = smul.addr %s221, 4
        %s223 = scalar_lea.vmem %s0, %s222
        %s224 = smul.u32 64, %s19
        %s225 = smul.u32 64, %s19
        %v227 = vld [vmem:[%s223] sm:$0xf]
        %v228 = vld [vmem:[%s223 + $0x4] sm:$0xf]
        %v229 = vld [vmem:[%s223 + $0x8] sm:$0xf]
        %v230 = vld [vmem:[%s223 + $0xc] sm:$0xf]
        %v231 = vld [vmem:[%s223 + $0x10] sm:$0xf]
        %v232 = vld [vmem:[%s223 + $0x14] sm:$0xf]
        %v233 = vld [vmem:[%s223 + $0x18] sm:$0xf]
        %v234 = vld [vmem:[%s223 + $0x1c] sm:$0xf]
        %v235 = vld [vmem:[%s223 + $0x20] sm:$0xf]
        %v236 = vld [vmem:[%s223 + $0x24] sm:$0xf]
        %v237 = vld [vmem:[%s223 + $0x28] sm:$0xf]
        %v238 = vld [vmem:[%s223 + $0x2c] sm:$0xf]
        %v239 = vld [vmem:[%s223 + $0x30] sm:$0xf]
        %v240 = vld [vmem:[%s223 + $0x34] sm:$0xf]
        %v241 = vld [vmem:[%s223 + $0x38] sm:$0xf]
        %v242 = vld [vmem:[%s223 + $0x3c] sm:$0xf]
        %v243 = vld [vmem:[%s223 + $0x40] sm:$0xf]
        %v244 = vld [vmem:[%s223 + $0x44] sm:$0xf]
        %v245 = vld [vmem:[%s223 + $0x48] sm:$0xf]
        %v246 = vld [vmem:[%s223 + $0x4c] sm:$0xf]
        %v247 = vld [vmem:[%s223 + $0x50] sm:$0xf]
        %v248 = vld [vmem:[%s223 + $0x54] sm:$0xf]
        %v249 = vld [vmem:[%s223 + $0x58] sm:$0xf]
        %v250 = vld [vmem:[%s223 + $0x5c] sm:$0xf]
        %v251 = vld [vmem:[%s223 + $0x60] sm:$0xf]
        %v252 = vld [vmem:[%s223 + $0x64] sm:$0xf]
        %v253 = vld [vmem:[%s223 + $0x68] sm:$0xf]
        %v254 = vld [vmem:[%s223 + $0x6c] sm:$0xf]
        %v255 = vld [vmem:[%s223 + $0x70] sm:$0xf]
        %v256 = vld [vmem:[%s223 + $0x74] sm:$0xf]
        %v257 = vld [vmem:[%s223 + $0x78] sm:$0xf]
        %v258 = vld [vmem:[%s223 + $0x7c] sm:$0xf]
        %v259 = vld [vmem:[%s223 + $0x80] sm:$0xf]
        %v260 = vld [vmem:[%s223 + $0x84] sm:$0xf]
        %v261 = vld [vmem:[%s223 + $0x88] sm:$0xf]
        %v262 = vld [vmem:[%s223 + $0x8c] sm:$0xf]
        %v263 = vld [vmem:[%s223 + $0x90] sm:$0xf]
        %v264 = vld [vmem:[%s223 + $0x94] sm:$0xf]
        %v265 = vld [vmem:[%s223 + $0x98] sm:$0xf]
        %v266 = vld [vmem:[%s223 + $0x9c] sm:$0xf]
        %v267 = vld [vmem:[%s223 + $0xa0] sm:$0xf]
        %v268 = vld [vmem:[%s223 + $0xa4] sm:$0xf]
        %v269 = vld [vmem:[%s223 + $0xa8] sm:$0xf]
        %v270 = vld [vmem:[%s223 + $0xac] sm:$0xf]
        %v271 = vld [vmem:[%s223 + $0xb0] sm:$0xf]
        %v272 = vld [vmem:[%s223 + $0xb4] sm:$0xf]
        %v273 = vld [vmem:[%s223 + $0xb8] sm:$0xf]
        %v274 = vld [vmem:[%s223 + $0xbc] sm:$0xf]
        %v275 = vld [vmem:[%s223 + $0xc0] sm:$0xf]
        %v276 = vld [vmem:[%s223 + $0xc4] sm:$0xf]
        %v277 = vld [vmem:[%s223 + $0xc8] sm:$0xf]
        %v278 = vld [vmem:[%s223 + $0xcc] sm:$0xf]
        %v279 = vld [vmem:[%s223 + $0xd0] sm:$0xf]
        %v280 = vld [vmem:[%s223 + $0xd4] sm:$0xf]
        %v281 = vld [vmem:[%s223 + $0xd8] sm:$0xf]
        %v282 = vld [vmem:[%s223 + $0xdc] sm:$0xf]
        %v283 = vld [vmem:[%s223 + $0xe0] sm:$0xf]
        %v284 = vld [vmem:[%s223 + $0xe4] sm:$0xf]
        %v285 = vld [vmem:[%s223 + $0xe8] sm:$0xf]
        %v286 = vld [vmem:[%s223 + $0xec] sm:$0xf]
        %v287 = vld [vmem:[%s223 + $0xf0] sm:$0xf]
        %v288 = vld [vmem:[%s223 + $0xf4] sm:$0xf]
        %v289 = vld [vmem:[%s223 + $0xf8] sm:$0xf]
        %v290 = vld [vmem:[%s223 + $0xfc] sm:$0xf]
        %v291 = vld [vmem:[%s1] sm:$0xff]
        %v292 = vld [vmem:[%s1 + $0x8] sm:$0xff]
        %v293 = vld [vmem:[%s1 + $0x10] sm:$0xff]
        %v294 = vld [vmem:[%s1 + $0x18] sm:$0xff]
        %v295 = vld [vmem:[%s1 + $0x20] sm:$0xff]
        %v296 = vld [vmem:[%s1 + $0x28] sm:$0xff]
        %v297 = vld [vmem:[%s1 + $0x30] sm:$0xff]
        %v298 = vld [vmem:[%s1 + $0x38] sm:$0xff]
        %v299 = vld [vmem:[%s1 + $0x40] sm:$0xff]
        %v300 = vld [vmem:[%s1 + $0x48] sm:$0xff]
        %v301 = vld [vmem:[%s1 + $0x50] sm:$0xff]
        %v302 = vld [vmem:[%s1 + $0x58] sm:$0xff]
        %v303 = vld [vmem:[%s1 + $0x60] sm:$0xff]
        %v304 = vld [vmem:[%s1 + $0x68] sm:$0xff]
        %v305 = vld [vmem:[%s1 + $0x70] sm:$0xff]
        %v306 = vld [vmem:[%s1 + $0x78] sm:$0xff]
        %v307 = vld [vmem:[%s1 + $0x80] sm:$0xff]
        %v308 = vld [vmem:[%s1 + $0x88] sm:$0xff]
        %v309 = vld [vmem:[%s1 + $0x90] sm:$0xff]
        %v310 = vld [vmem:[%s1 + $0x98] sm:$0xff]
        %v311 = vld [vmem:[%s1 + $0xa0] sm:$0xff]
        %v312 = vld [vmem:[%s1 + $0xa8] sm:$0xff]
        %v313 = vld [vmem:[%s1 + $0xb0] sm:$0xff]
        %v314 = vld [vmem:[%s1 + $0xb8] sm:$0xff]
        %v315 = vld [vmem:[%s1 + $0xc0] sm:$0xff]
        %v316 = vld [vmem:[%s1 + $0xc8] sm:$0xff]
        %v317 = vld [vmem:[%s1 + $0xd0] sm:$0xff]
        %v318 = vld [vmem:[%s1 + $0xd8] sm:$0xff]
        %v319 = vld [vmem:[%s1 + $0xe0] sm:$0xff]
        %v320 = vld [vmem:[%s1 + $0xe8] sm:$0xff]
        %v321 = vld [vmem:[%s1 + $0xf0] sm:$0xff]
        %v322 = vld [vmem:[%s1 + $0xf8] sm:$0xff]
        %v323 = vld [vmem:[%s2] sm:$0xf]
        %v325 = vlaneseq
        %v326 = vshrl.u32 %v325, 7
        %v327 = vsub.s32 0, %v326
        %v328 = vrot.slane %v323, %v327
        %v329 = vlaneseq
        %v330 = vshrl.u32 %v329, 7
        %v331 = vsub.s32 1, %v330
        %v332 = vrot.slane %v323, %v331
        %v333 = vlaneseq
        %v334 = vshrl.u32 %v333, 7
        %v335 = vsub.s32 2, %v334
        %v336 = vrot.slane %v323, %v335
        %v337 = vlaneseq
        %v338 = vshrl.u32 %v337, 7
        %v339 = vsub.s32 3, %v338
        %v340 = vrot.slane %v323, %v339
        %v409 = vunpack.c.l.b16 %v227
        %v410 = vunpack.c.l.b16 %v228
        %v411 = vunpack.c.l.b16 %v229
        %v412 = vunpack.c.l.b16 %v230
        %v413 = vunpack.c.l.b16 %v231
        %v414 = vunpack.c.l.b16 %v232
        %v415 = vunpack.c.l.b16 %v233
        %v416 = vunpack.c.l.b16 %v234
        %v417 = vunpack.c.l.b16 %v235
        %v418 = vunpack.c.l.b16 %v236
        %v419 = vunpack.c.l.b16 %v237
        %v420 = vunpack.c.l.b16 %v238
        %v421 = vunpack.c.l.b16 %v239
        %v422 = vunpack.c.l.b16 %v240
        %v423 = vunpack.c.l.b16 %v241
        %v424 = vunpack.c.l.b16 %v242
        %v425 = vunpack.c.l.b16 %v243
        %v426 = vunpack.c.l.b16 %v244
        %v427 = vunpack.c.l.b16 %v245
        %v428 = vunpack.c.l.b16 %v246
        %v429 = vunpack.c.l.b16 %v247
        %v430 = vunpack.c.l.b16 %v248
        %v431 = vunpack.c.l.b16 %v249
        %v432 = vunpack.c.l.b16 %v250
        %v433 = vunpack.c.l.b16 %v251
        %v434 = vunpack.c.l.b16 %v252
        %v435 = vunpack.c.l.b16 %v253
        %v436 = vunpack.c.l.b16 %v254
        %v437 = vunpack.c.l.b16 %v255
        %v438 = vunpack.c.l.b16 %v256
        %v439 = vunpack.c.l.b16 %v257
        %v440 = vunpack.c.l.b16 %v258
        %v441 = vunpack.c.l.b16 %v259
        %v442 = vunpack.c.l.b16 %v260
        %v443 = vunpack.c.l.b16 %v261
        %v444 = vunpack.c.l.b16 %v262
        %v445 = vunpack.c.l.b16 %v263
        %v446 = vunpack.c.l.b16 %v264
        %v447 = vunpack.c.l.b16 %v265
        %v448 = vunpack.c.l.b16 %v266
        %v449 = vunpack.c.l.b16 %v267
        %v450 = vunpack.c.l.b16 %v268
        %v451 = vunpack.c.l.b16 %v269
        %v452 = vunpack.c.l.b16 %v270
        %v453 = vunpack.c.l.b16 %v271
        %v454 = vunpack.c.l.b16 %v272
        %v455 = vunpack.c.l.b16 %v273
        %v456 = vunpack.c.l.b16 %v274
        %v457 = vunpack.c.l.b16 %v275
        %v458 = vunpack.c.l.b16 %v276
        %v459 = vunpack.c.l.b16 %v277
        %v460 = vunpack.c.l.b16 %v278
        %v461 = vunpack.c.l.b16 %v279
        %v462 = vunpack.c.l.b16 %v280
        %v463 = vunpack.c.l.b16 %v281
        %v464 = vunpack.c.l.b16 %v282
        %v465 = vunpack.c.l.b16 %v283
        %v466 = vunpack.c.l.b16 %v284
        %v467 = vunpack.c.l.b16 %v285
        %v468 = vunpack.c.l.b16 %v286
        %v469 = vunpack.c.l.b16 %v287
        %v470 = vunpack.c.l.b16 %v288
        %v471 = vunpack.c.l.b16 %v289
        %v472 = vunpack.c.l.b16 %v290
        %v473 = vpack.c.b16 %v410, %v409
        %v474 = vpack.c.b16 %v412, %v411
        %v475 = vpack.c.b16 %v414, %v413
        %v476 = vpack.c.b16 %v416, %v415
        %v477 = vpack.c.b16 %v418, %v417
        %v478 = vpack.c.b16 %v420, %v419
        %v479 = vpack.c.b16 %v422, %v421
        %v480 = vpack.c.b16 %v424, %v423
        %v481 = vpack.c.b16 %v426, %v425
        %v482 = vpack.c.b16 %v428, %v427
        %v483 = vpack.c.b16 %v430, %v429
        %v484 = vpack.c.b16 %v432, %v431
        %v485 = vpack.c.b16 %v434, %v433
        %v486 = vpack.c.b16 %v436, %v435
        %v487 = vpack.c.b16 %v438, %v437
        %v488 = vpack.c.b16 %v440, %v439
        %v489 = vpack.c.b16 %v442, %v441
        %v490 = vpack.c.b16 %v444, %v443
        %v491 = vpack.c.b16 %v446, %v445
        %v492 = vpack.c.b16 %v448, %v447
        %v493 = vpack.c.b16 %v450, %v449
        %v494 = vpack.c.b16 %v452, %v451
        %v495 = vpack.c.b16 %v454, %v453
        %v496 = vpack.c.b16 %v456, %v455
        %v497 = vpack.c.b16 %v458, %v457
        %v498 = vpack.c.b16 %v460, %v459
        %v499 = vpack.c.b16 %v462, %v461
        %v500 = vpack.c.b16 %v464, %v463
        %v501 = vpack.c.b16 %v466, %v465
        %v502 = vpack.c.b16 %v468, %v467
        %v503 = vpack.c.b16 %v470, %v469
        %v504 = vpack.c.b16 %v472, %v471
        %v569 = vunpack.c.l.b16 %v291
        %v570 = vunpack.c.h.b16 %v291
        %v571 = vunpack.c.l.b16 %v292
        %v572 = vunpack.c.h.b16 %v292
        %v573 = vunpack.c.l.b16 %v293
        %v574 = vunpack.c.h.b16 %v293
        %v575 = vunpack.c.l.b16 %v294
        %v576 = vunpack.c.h.b16 %v294
        %v577 = vunpack.c.l.b16 %v295
        %v578 = vunpack.c.h.b16 %v295
        %v579 = vunpack.c.l.b16 %v296
        %v580 = vunpack.c.h.b16 %v296
        %v581 = vunpack.c.l.b16 %v297
        %v582 = vunpack.c.h.b16 %v297
        %v583 = vunpack.c.l.b16 %v298
        %v584 = vunpack.c.h.b16 %v298
        %v585 = vunpack.c.l.b16 %v299
        %v586 = vunpack.c.h.b16 %v299
        %v587 = vunpack.c.l.b16 %v300
        %v588 = vunpack.c.h.b16 %v300
        %v589 = vunpack.c.l.b16 %v301
        %v590 = vunpack.c.h.b16 %v301
        %v591 = vunpack.c.l.b16 %v302
        %v592 = vunpack.c.h.b16 %v302
        %v593 = vunpack.c.l.b16 %v303
        %v594 = vunpack.c.h.b16 %v303
        %v595 = vunpack.c.l.b16 %v304
        %v596 = vunpack.c.h.b16 %v304
        %v597 = vunpack.c.l.b16 %v305
        %v598 = vunpack.c.h.b16 %v305
        %v599 = vunpack.c.l.b16 %v306
        %v600 = vunpack.c.h.b16 %v306
        %v601 = vunpack.c.l.b16 %v307
        %v602 = vunpack.c.h.b16 %v307
        %v603 = vunpack.c.l.b16 %v308
        %v604 = vunpack.c.h.b16 %v308
        %v605 = vunpack.c.l.b16 %v309
        %v606 = vunpack.c.h.b16 %v309
        %v607 = vunpack.c.l.b16 %v310
        %v608 = vunpack.c.h.b16 %v310
        %v609 = vunpack.c.l.b16 %v311
        %v610 = vunpack.c.h.b16 %v311
        %v611 = vunpack.c.l.b16 %v312
        %v612 = vunpack.c.h.b16 %v312
        %v613 = vunpack.c.l.b16 %v313
        %v614 = vunpack.c.h.b16 %v313
        %v615 = vunpack.c.l.b16 %v314
        %v616 = vunpack.c.h.b16 %v314
        %v617 = vunpack.c.l.b16 %v315
        %v618 = vunpack.c.h.b16 %v315
        %v619 = vunpack.c.l.b16 %v316
        %v620 = vunpack.c.h.b16 %v316
        %v621 = vunpack.c.l.b16 %v317
        %v622 = vunpack.c.h.b16 %v317
        %v623 = vunpack.c.l.b16 %v318
        %v624 = vunpack.c.h.b16 %v318
        %v625 = vunpack.c.l.b16 %v319
        %v626 = vunpack.c.h.b16 %v319
        %v627 = vunpack.c.l.b16 %v320
        %v628 = vunpack.c.h.b16 %v320
        %v629 = vunpack.c.l.b16 %v321
        %v630 = vunpack.c.h.b16 %v321
        %v631 = vunpack.c.l.b16 %v322
        %v632 = vunpack.c.h.b16 %v322
        %v633 = vpack.c.b16 %v573, %v569
        %v634 = vpack.c.b16 %v574, %v570
        %v635 = vpack.c.b16 %v575, %v571
        %v636 = vpack.c.b16 %v576, %v572
        %v637 = vpack.c.b16 %v581, %v577
        %v638 = vpack.c.b16 %v582, %v578
        %v639 = vpack.c.b16 %v583, %v579
        %v640 = vpack.c.b16 %v584, %v580
        %v641 = vpack.c.b16 %v589, %v585
        %v642 = vpack.c.b16 %v590, %v586
        %v643 = vpack.c.b16 %v591, %v587
        %v644 = vpack.c.b16 %v592, %v588
        %v645 = vpack.c.b16 %v597, %v593
        %v646 = vpack.c.b16 %v598, %v594
        %v647 = vpack.c.b16 %v599, %v595
        %v648 = vpack.c.b16 %v600, %v596
        %v649 = vpack.c.b16 %v605, %v601
        %v650 = vpack.c.b16 %v606, %v602
        %v651 = vpack.c.b16 %v607, %v603
        %v652 = vpack.c.b16 %v608, %v604
        %v653 = vpack.c.b16 %v613, %v609
        %v654 = vpack.c.b16 %v614, %v610
        %v655 = vpack.c.b16 %v615, %v611
        %v656 = vpack.c.b16 %v616, %v612
        %v657 = vpack.c.b16 %v621, %v617
        %v658 = vpack.c.b16 %v622, %v618
        %v659 = vpack.c.b16 %v623, %v619
        %v660 = vpack.c.b16 %v624, %v620
        %v661 = vpack.c.b16 %v629, %v625
        %v662 = vpack.c.b16 %v630, %v626
        %v663 = vpack.c.b16 %v631, %v627
        %v664 = vpack.c.b16 %v632, %v628
        %697 = vmatprep.subr.bf16.mxu0 %v634
        %698 = vmatpush1.bf16.msra.mxu0 %v633
        %699 = vmatprep.subr.bf16.mxu0 %v638
        %700 = vmatpush1.bf16.msra.mxu0 %v637
        %701 = vmatprep.subr.bf16.mxu0 %v642
        %702 = vmatpush1.bf16.msra.mxu0 %v641
        %703 = vmatprep.subr.bf16.mxu0 %v646
        %704 = vmatpush1.bf16.msra.mxu0 %v645
        %705 = vmatprep.subr.bf16.mxu0 %v650
        %706 = vmatpush1.bf16.msra.mxu0 %v649
        %707 = vmatprep.subr.bf16.mxu0 %v654
        %708 = vmatpush1.bf16.msra.mxu0 %v653
        %709 = vmatprep.subr.bf16.mxu0 %v658
        %710 = vmatpush1.bf16.msra.mxu0 %v657
        %711 = vmatprep.subr.bf16.mxu0 %v662
        %712 = vmatpush1.bf16.msra.mxu0 %v661
        %713 = vmatprep.subr.bf16.mxu0 0
        %714 = vmatpush1.bf16.msra.mxu0 0
        %715 = vmatprep.subr.bf16.mxu0 0
        %716 = vmatpush1.bf16.msra.mxu0 0
        %717 = vmatprep.subr.bf16.mxu0 0
        %718 = vmatpush1.bf16.msra.mxu0 0
        %719 = vmatprep.subr.bf16.mxu0 0
        %720 = vmatpush1.bf16.msra.mxu0 0
        %721 = vmatprep.subr.bf16.mxu0 0
        %722 = vmatpush1.bf16.msra.mxu0 0
        %723 = vmatprep.subr.bf16.mxu0 0
        %724 = vmatpush1.bf16.msra.mxu0 0
        %725 = vmatprep.subr.bf16.mxu0 0
        %726 = vmatpush1.bf16.msra.mxu0 0
        %727 = vmatprep.subr.bf16.mxu0 0
        %728 = vmatpush1.bf16.msra.mxu0 0
        %729 = vmatprep.mubr.bf16.mxu0 0
        %730 = vmatmul.mubr.bf16.gmra.mrb[0].mxu0 %v473
        %v731 = vpop.f32.mrb[0].mxu0
        %v732 = vadd.f32 %v328, %v731
        %v733 = vpop.f32.mrb[0].mxu0
        %v734 = vadd.f32 %v332, %v733
        %v735 = vpop.f32.mrb[0].mxu0
        %v736 = vadd.f32 %v328, %v735
        %v737 = vpop.f32.mrb[0].mxu0
        %v738 = vadd.f32 %v332, %v737
        %739 = vmatprep.mubr.bf16.mxu0 0
        %740 = vmatmul.mubr.bf16.gmra.mrb[0].mxu0 %v474
        %v741 = vpop.f32.mrb[0].mxu0
        %v742 = vadd.f32 %v328, %v741
        %v743 = vpop.f32.mrb[0].mxu0
        %v744 = vadd.f32 %v332, %v743
        %v745 = vpop.f32.mrb[0].mxu0
        %v746 = vadd.f32 %v328, %v745
        %v747 = vpop.f32.mrb[0].mxu0
        %v748 = vadd.f32 %v332, %v747
        %749 = vmatprep.mubr.bf16.mxu0 0
        %750 = vmatmul.mubr.bf16.gmra.mrb[0].mxu0 %v475
        %v751 = vpop.f32.mrb[0].mxu0
        %v752 = vadd.f32 %v328, %v751
        %v753 = vpop.f32.mrb[0].mxu0
        %v754 = vadd.f32 %v332, %v753
        %v755 = vpop.f32.mrb[0].mxu0
        %v756 = vadd.f32 %v328, %v755
        %v757 = vpop.f32.mrb[0].mxu0
        %v758 = vadd.f32 %v332, %v757
        %759 = vmatprep.mubr.bf16.mxu0 0
        %760 = vmatmul.mubr.bf16.gmra.mrb[0].mxu0 %v476
        %v761 = vpop.f32.mrb[0].mxu0
        %v762 = vadd.f32 %v328, %v761
        %v763 = vpop.f32.mrb[0].mxu0
        %v764 = vadd.f32 %v332, %v763
        %v765 = vpop.f32.mrb[0].mxu0
        %v766 = vadd.f32 %v328, %v765
        %v767 = vpop.f32.mrb[0].mxu0
        %v768 = vadd.f32 %v332, %v767
        %769 = vmatprep.mubr.bf16.mxu0 0
        %770 = vmatmul.mubr.bf16.gmra.mrb[0].mxu0 %v477
        %v771 = vpop.f32.mrb[0].mxu0
        %v772 = vadd.f32 %v328, %v771
        %v773 = vpop.f32.mrb[0].mxu0
        %v774 = vadd.f32 %v332, %v773
        %v775 = vpop.f32.mrb[0].mxu0
        %v776 = vadd.f32 %v328, %v775
        %v777 = vpop.f32.mrb[0].mxu0
        %v778 = vadd.f32 %v332, %v777
        %779 = vmatprep.mubr.bf16.mxu0 0
        %780 = vmatmul.mubr.bf16.gmra.mrb[0].mxu0 %v478
        %v781 = vpop.f32.mrb[0].mxu0
        %v782 = vadd.f32 %v328, %v781
        %v783 = vpop.f32.mrb[0].mxu0
        %v784 = vadd.f32 %v332, %v783
        %v785 = vpop.f32.mrb[0].mxu0
        %v786 = vadd.f32 %v328, %v785
        %v787 = vpop.f32.mrb[0].mxu0
        %v788 = vadd.f32 %v332, %v787
        %789 = vmatprep.mubr.bf16.mxu0 0
        %790 = vmatmul.mubr.bf16.gmra.mrb[0].mxu0 %v479
        %v791 = vpop.f32.mrb[0].mxu0
        %v792 = vadd.f32 %v328, %v791
        %v793 = vpop.f32.mrb[0].mxu0
        %v794 = vadd.f32 %v332, %v793
        %v795 = vpop.f32.mrb[0].mxu0
        %v796 = vadd.f32 %v328, %v795
        %v797 = vpop.f32.mrb[0].mxu0
        %v798 = vadd.f32 %v332, %v797
        %799 = vmatprep.mubr.bf16.mxu0 0
        %800 = vmatmul.mubr.bf16.gmra.mrb[0].mxu0 %v480
        %v801 = vpop.f32.mrb[0].mxu0
        %v802 = vadd.f32 %v328, %v801
        %v803 = vpop.f32.mrb[0].mxu0
        %v804 = vadd.f32 %v332, %v803
        %v805 = vpop.f32.mrb[0].mxu0
        %v806 = vadd.f32 %v328, %v805
        %v807 = vpop.f32.mrb[0].mxu0
        %v808 = vadd.f32 %v332, %v807
        %809 = vmatprep.mubr.bf16.mxu0 0
        %810 = vmatmul.mubr.bf16.gmra.mrb[0].mxu0 %v481
        %v811 = vpop.f32.mrb[0].mxu0
        %v812 = vadd.f32 %v328, %v811
        %v813 = vpop.f32.mrb[0].mxu0
        %v814 = vadd.f32 %v332, %v813
        %v815 = vpop.f32.mrb[0].mxu0
        %v816 = vadd.f32 %v328, %v815
        %v817 = vpop.f32.mrb[0].mxu0
        %v818 = vadd.f32 %v332, %v817
        %819 = vmatprep.mubr.bf16.mxu0 0
        %820 = vmatmul.mubr.bf16.gmra.mrb[0].mxu0 %v482
        %v821 = vpop.f32.mrb[0].mxu0
        %v822 = vadd.f32 %v328, %v821
        %v823 = vpop.f32.mrb[0].mxu0
        %v824 = vadd.f32 %v332, %v823
        %v825 = vpop.f32.mrb[0].mxu0
        %v826 = vadd.f32 %v328, %v825
        %v827 = vpop.f32.mrb[0].mxu0
        %v828 = vadd.f32 %v332, %v827
        %829 = vmatprep.mubr.bf16.mxu0 0
        %830 = vmatmul.mubr.bf16.gmra.mrb[0].mxu0 %v483
        %v831 = vpop.f32.mrb[0].mxu0
        %v832 = vadd.f32 %v328, %v831
        %v833 = vpop.f32.mrb[0].mxu0
        %v834 = vadd.f32 %v332, %v833
        %v835 = vpop.f32.mrb[0].mxu0
        %v836 = vadd.f32 %v328, %v835
        %v837 = vpop.f32.mrb[0].mxu0
        %v838 = vadd.f32 %v332, %v837
        %839 = vmatprep.mubr.bf16.mxu0 0
        %840 = vmatmul.mubr.bf16.gmra.mrb[0].mxu0 %v484
        %v841 = vpop.f32.mrb[0].mxu0
        %v842 = vadd.f32 %v328, %v841
        %v843 = vpop.f32.mrb[0].mxu0
        %v844 = vadd.f32 %v332, %v843
        %v845 = vpop.f32.mrb[0].mxu0
        %v846 = vadd.f32 %v328, %v845
        %v847 = vpop.f32.mrb[0].mxu0
        %v848 = vadd.f32 %v332, %v847
        %849 = vmatprep.mubr.bf16.mxu0 0
        %850 = vmatmul.mubr.bf16.gmra.mrb[0].mxu0 %v485
        %v851 = vpop.f32.mrb[0].mxu0
        %v852 = vadd.f32 %v328, %v851
        %v853 = vpop.f32.mrb[0].mxu0
        %v854 = vadd.f32 %v332, %v853
        %v855 = vpop.f32.mrb[0].mxu0
        %v856 = vadd.f32 %v328, %v855
        %v857 = vpop.f32.mrb[0].mxu0
        %v858 = vadd.f32 %v332, %v857
        %859 = vmatprep.mubr.bf16.mxu0 0
        %860 = vmatmul.mubr.bf16.gmra.mrb[0].mxu0 %v486
        %v861 = vpop.f32.mrb[0].mxu0
        %v862 = vadd.f32 %v328, %v861
        %v863 = vpop.f32.mrb[0].mxu0
        %v864 = vadd.f32 %v332, %v863
        %v865 = vpop.f32.mrb[0].mxu0
        %v866 = vadd.f32 %v328, %v865
        %v867 = vpop.f32.mrb[0].mxu0
        %v868 = vadd.f32 %v332, %v867
        %869 = vmatprep.mubr.bf16.mxu0 0
        %870 = vmatmul.mubr.bf16.gmra.mrb[0].mxu0 %v487
        %v871 = vpop.f32.mrb[0].mxu0
        %v872 = vadd.f32 %v328, %v871
        %v873 = vpop.f32.mrb[0].mxu0
        %v874 = vadd.f32 %v332, %v873
        %v875 = vpop.f32.mrb[0].mxu0
        %v876 = vadd.f32 %v328, %v875
        %v877 = vpop.f32.mrb[0].mxu0
        %v878 = vadd.f32 %v332, %v877
        %879 = vmatprep.mubr.bf16.mxu0 0
        %880 = vmatmul.mubr.bf16.gmra.mrb[0].mxu0 %v488
        %v881 = vpop.f32.mrb[0].mxu0
        %v882 = vadd.f32 %v328, %v881
        %v883 = vpop.f32.mrb[0].mxu0
        %v884 = vadd.f32 %v332, %v883
        %v885 = vpop.f32.mrb[0].mxu0
        %v886 = vadd.f32 %v328, %v885
        %v887 = vpop.f32.mrb[0].mxu0
        %v888 = vadd.f32 %v332, %v887
        %889 = vmatprep.mubr.bf16.mxu0 0
        %890 = vmatmul.mubr.bf16.gmra.mrb[0].mxu0 %v489
        %v891 = vpop.f32.mrb[0].mxu0
        %v892 = vadd.f32 %v328, %v891
        %v893 = vpop.f32.mrb[0].mxu0
        %v894 = vadd.f32 %v332, %v893
        %v895 = vpop.f32.mrb[0].mxu0
        %v896 = vadd.f32 %v328, %v895
        %v897 = vpop.f32.mrb[0].mxu0
        %v898 = vadd.f32 %v332, %v897
        %899 = vmatprep.mubr.bf16.mxu0 0
        %900 = vmatmul.mubr.bf16.gmra.mrb[0].mxu0 %v490
        %v901 = vpop.f32.mrb[0].mxu0
        %v902 = vadd.f32 %v328, %v901
        %v903 = vpop.f32.mrb[0].mxu0
        %v904 = vadd.f32 %v332, %v903
        %v905 = vpop.f32.mrb[0].mxu0
        %v906 = vadd.f32 %v328, %v905
        %v907 = vpop.f32.mrb[0].mxu0
        %v908 = vadd.f32 %v332, %v907
        %909 = vmatprep.mubr.bf16.mxu0 0
        %910 = vmatmul.mubr.bf16.gmra.mrb[0].mxu0 %v491
        %v911 = vpop.f32.mrb[0].mxu0
        %v912 = vadd.f32 %v328, %v911
        %v913 = vpop.f32.mrb[0].mxu0
        %v914 = vadd.f32 %v332, %v913
        %v915 = vpop.f32.mrb[0].mxu0
        %v916 = vadd.f32 %v328, %v915
        %v917 = vpop.f32.mrb[0].mxu0
        %v918 = vadd.f32 %v332, %v917
        %919 = vmatprep.mubr.bf16.mxu0 0
        %920 = vmatmul.mubr.bf16.gmra.mrb[0].mxu0 %v492
        %v921 = vpop.f32.mrb[0].mxu0
        %v922 = vadd.f32 %v328, %v921
        %v923 = vpop.f32.mrb[0].mxu0
        %v924 = vadd.f32 %v332, %v923
        %v925 = vpop.f32.mrb[0].mxu0
        %v926 = vadd.f32 %v328, %v925
        %v927 = vpop.f32.mrb[0].mxu0
        %v928 = vadd.f32 %v332, %v927
        %929 = vmatprep.mubr.bf16.mxu0 0
        %930 = vmatmul.mubr.bf16.gmra.mrb[0].mxu0 %v493
        %v931 = vpop.f32.mrb[0].mxu0
        %v932 = vadd.f32 %v328, %v931
        %v933 = vpop.f32.mrb[0].mxu0
        %v934 = vadd.f32 %v332, %v933
        %v935 = vpop.f32.mrb[0].mxu0
        %v936 = vadd.f32 %v328, %v935
        %v937 = vpop.f32.mrb[0].mxu0
        %v938 = vadd.f32 %v332, %v937
        %939 = vmatprep.mubr.bf16.mxu0 0
        %940 = vmatmul.mubr.bf16.gmra.mrb[0].mxu0 %v494
        %v941 = vpop.f32.mrb[0].mxu0
        %v942 = vadd.f32 %v328, %v941
        %v943 = vpop.f32.mrb[0].mxu0
        %v944 = vadd.f32 %v332, %v943
        %v945 = vpop.f32.mrb[0].mxu0
        %v946 = vadd.f32 %v328, %v945
        %v947 = vpop.f32.mrb[0].mxu0
        %v948 = vadd.f32 %v332, %v947
        %949 = vmatprep.mubr.bf16.mxu0 0
        %950 = vmatmul.mubr.bf16.gmra.mrb[0].mxu0 %v495
        %v951 = vpop.f32.mrb[0].mxu0
        %v952 = vadd.f32 %v328, %v951
        %v953 = vpop.f32.mrb[0].mxu0
        %v954 = vadd.f32 %v332, %v953
        %v955 = vpop.f32.mrb[0].mxu0
        %v956 = vadd.f32 %v328, %v955
        %v957 = vpop.f32.mrb[0].mxu0
        %v958 = vadd.f32 %v332, %v957
        %959 = vmatprep.mubr.bf16.mxu0 0
        %960 = vmatmul.mubr.bf16.gmra.mrb[0].mxu0 %v496
        %v961 = vpop.f32.mrb[0].mxu0
        %v962 = vadd.f32 %v328, %v961
        %v963 = vpop.f32.mrb[0].mxu0
        %v964 = vadd.f32 %v332, %v963
        %v965 = vpop.f32.mrb[0].mxu0
        %v966 = vadd.f32 %v328, %v965
        %v967 = vpop.f32.mrb[0].mxu0
        %v968 = vadd.f32 %v332, %v967
        %969 = vmatprep.mubr.bf16.mxu0 0
        %970 = vmatmul.mubr.bf16.gmra.mrb[0].mxu0 %v497
        %v971 = vpop.f32.mrb[0].mxu0
        %v972 = vadd.f32 %v328, %v971
        %v973 = vpop.f32.mrb[0].mxu0
        %v974 = vadd.f32 %v332, %v973
        %v975 = vpop.f32.mrb[0].mxu0
        %v976 = vadd.f32 %v328, %v975
        %v977 = vpop.f32.mrb[0].mxu0
        %v978 = vadd.f32 %v332, %v977
        %979 = vmatprep.mubr.bf16.mxu0 0
        %980 = vmatmul.mubr.bf16.gmra.mrb[0].mxu0 %v498
        %v981 = vpop.f32.mrb[0].mxu0
        %v982 = vadd.f32 %v328, %v981
        %v983 = vpop.f32.mrb[0].mxu0
        %v984 = vadd.f32 %v332, %v983
        %v985 = vpop.f32.mrb[0].mxu0
        %v986 = vadd.f32 %v328, %v985
        %v987 = vpop.f32.mrb[0].mxu0
        %v988 = vadd.f32 %v332, %v987
        %989 = vmatprep.mubr.bf16.mxu0 0
        %990 = vmatmul.mubr.bf16.gmra.mrb[0].mxu0 %v499
        %v991 = vpop.f32.mrb[0].mxu0
        %v992 = vadd.f32 %v328, %v991
        %v993 = vpop.f32.mrb[0].mxu0
        %v994 = vadd.f32 %v332, %v993
        %v995 = vpop.f32.mrb[0].mxu0
        %v996 = vadd.f32 %v328, %v995
        %v997 = vpop.f32.mrb[0].mxu0
        %v998 = vadd.f32 %v332, %v997
        %999 = vmatprep.mubr.bf16.mxu0 0
        %1000 = vmatmul.mubr.bf16.gmra.mrb[0].mxu0 %v500
        %v1001 = vpop.f32.mrb[0].mxu0
        %v1002 = vadd.f32 %v328, %v1001
        %v1003 = vpop.f32.mrb[0].mxu0
        %v1004 = vadd.f32 %v332, %v1003
        %v1005 = vpop.f32.mrb[0].mxu0
        %v1006 = vadd.f32 %v328, %v1005
        %v1007 = vpop.f32.mrb[0].mxu0
        %v1008 = vadd.f32 %v332, %v1007
        %1009 = vmatprep.mubr.bf16.mxu0 0
        %1010 = vmatmul.mubr.bf16.gmra.mrb[0].mxu0 %v501
        %v1011 = vpop.f32.mrb[0].mxu0
        %v1012 = vadd.f32 %v328, %v1011
        %v1013 = vpop.f32.mrb[0].mxu0
        %v1014 = vadd.f32 %v332, %v1013
        %v1015 = vpop.f32.mrb[0].mxu0
        %v1016 = vadd.f32 %v328, %v1015
        %v1017 = vpop.f32.mrb[0].mxu0
        %v1018 = vadd.f32 %v332, %v1017
        %1019 = vmatprep.mubr.bf16.mxu0 0
        %1020 = vmatmul.mubr.bf16.gmra.mrb[0].mxu0 %v502
        %v1021 = vpop.f32.mrb[0].mxu0
        %v1022 = vadd.f32 %v328, %v1021
        %v1023 = vpop.f32.mrb[0].mxu0
        %v1024 = vadd.f32 %v332, %v1023
        %v1025 = vpop.f32.mrb[0].mxu0
        %v1026 = vadd.f32 %v328, %v1025
        %v1027 = vpop.f32.mrb[0].mxu0
        %v1028 = vadd.f32 %v332, %v1027
        %1029 = vmatprep.mubr.bf16.mxu0 0
        %1030 = vmatmul.mubr.bf16.gmra.mrb[0].mxu0 %v503
        %v1031 = vpop.f32.mrb[0].mxu0
        %v1032 = vadd.f32 %v328, %v1031
        %v1033 = vpop.f32.mrb[0].mxu0
        %v1034 = vadd.f32 %v332, %v1033
        %v1035 = vpop.f32.mrb[0].mxu0
        %v1036 = vadd.f32 %v328, %v1035
        %v1037 = vpop.f32.mrb[0].mxu0
        %v1038 = vadd.f32 %v332, %v1037
        %1039 = vmatprep.mubr.bf16.mxu0 0
        %1040 = vmatmul.mubr.bf16.gmra.mrb[0].mxu0 %v504
        %v1041 = vpop.f32.mrb[0].mxu0
        %v1042 = vadd.f32 %v328, %v1041
        %v1043 = vpop.f32.mrb[0].mxu0
        %v1044 = vadd.f32 %v332, %v1043
        %v1045 = vpop.f32.mrb[0].mxu0
        %v1046 = vadd.f32 %v328, %v1045
        %v1047 = vpop.f32.mrb[0].mxu0
        %v1048 = vadd.f32 %v332, %v1047
        %1049 = vdwg.mxu0
        %1050 = vmatprep.subr.bf16.mxu0 %v636
        %1051 = vmatpush1.bf16.msra.mxu0 %v635
        %1052 = vmatprep.subr.bf16.mxu0 %v640
        %1053 = vmatpush1.bf16.msra.mxu0 %v639
        %1054 = vmatprep.subr.bf16.mxu0 %v644
        %1055 = vmatpush1.bf16.msra.mxu0 %v643
        %1056 = vmatprep.subr.bf16.mxu0 %v648
        %1057 = vmatpush1.bf16.msra.mxu0 %v647
        %1058 = vmatprep.subr.bf16.mxu0 %v652
        %1059 = vmatpush1.bf16.msra.mxu0 %v651
        %1060 = vmatprep.subr.bf16.mxu0 %v656
        %1061 = vmatpush1.bf16.msra.mxu0 %v655
        %1062 = vmatprep.subr.bf16.mxu0 %v660
        %1063 = vmatpush1.bf16.msra.mxu0 %v659
        %1064 = vmatprep.subr.bf16.mxu0 %v664
        %1065 = vmatpush1.bf16.msra.mxu0 %v663
        %1066 = vmatprep.subr.bf16.mxu0 0
        %1067 = vmatpush1.bf16.msra.mxu0 0
        %1068 = vmatprep.subr.bf16.mxu0 0
        %1069 = vmatpush1.bf16.msra.mxu0 0
        %1070 = vmatprep.subr.bf16.mxu0 0
        %1071 = vmatpush1.bf16.msra.mxu0 0
        %1072 = vmatprep.subr.bf16.mxu0 0
        %1073 = vmatpush1.bf16.msra.mxu0 0
        %1074 = vmatprep.subr.bf16.mxu0 0
        %1075 = vmatpush1.bf16.msra.mxu0 0
        %1076 = vmatprep.subr.bf16.mxu0 0
        %1077 = vmatpush1.bf16.msra.mxu0 0
        %1078 = vmatprep.subr.bf16.mxu0 0
        %1079 = vmatpush1.bf16.msra.mxu0 0
        %1080 = vmatprep.subr.bf16.mxu0 0
        %1081 = vmatpush1.bf16.msra.mxu0 0
        %1082 = vmatprep.mubr.bf16.mxu0 0
        %1083 = vmatmul.mubr.bf16.gmra.mrb[0].mxu0 %v473
        %v1084 = vpop.f32.mrb[0].mxu0
        %v1085 = vadd.f32 %v336, %v1084
        %v1086 = vpop.f32.mrb[0].mxu0
        %v1087 = vadd.f32 %v340, %v1086
        %v1088 = vpop.f32.mrb[0].mxu0
        %v1089 = vadd.f32 %v336, %v1088
        %v1090 = vpop.f32.mrb[0].mxu0
        %v1091 = vadd.f32 %v340, %v1090
        %1092 = vmatprep.mubr.bf16.mxu0 0
        %1093 = vmatmul.mubr.bf16.gmra.mrb[0].mxu0 %v474
        %v1094 = vpop.f32.mrb[0].mxu0
        %v1095 = vadd.f32 %v336, %v1094
        %v1096 = vpop.f32.mrb[0].mxu0
        %v1097 = vadd.f32 %v340, %v1096
        %v1098 = vpop.f32.mrb[0].mxu0
        %v1099 = vadd.f32 %v336, %v1098
        %v1100 = vpop.f32.mrb[0].mxu0
        %v1101 = vadd.f32 %v340, %v1100
        %1102 = vmatprep.mubr.bf16.mxu0 0
        %1103 = vmatmul.mubr.bf16.gmra.mrb[0].mxu0 %v475
        %v1104 = vpop.f32.mrb[0].mxu0
        %v1105 = vadd.f32 %v336, %v1104
        %v1106 = vpop.f32.mrb[0].mxu0
        %v1107 = vadd.f32 %v340, %v1106
        %v1108 = vpop.f32.mrb[0].mxu0
        %v1109 = vadd.f32 %v336, %v1108
        %v1110 = vpop.f32.mrb[0].mxu0
        %v1111 = vadd.f32 %v340, %v1110
        %1112 = vmatprep.mubr.bf16.mxu0 0
        %1113 = vmatmul.mubr.bf16.gmra.mrb[0].mxu0 %v476
        %v1114 = vpop.f32.mrb[0].mxu0
        %v1115 = vadd.f32 %v336, %v1114
        %v1116 = vpop.f32.mrb[0].mxu0
        %v1117 = vadd.f32 %v340, %v1116
        %v1118 = vpop.f32.mrb[0].mxu0
        %v1119 = vadd.f32 %v336, %v1118
        %v1120 = vpop.f32.mrb[0].mxu0
        %v1121 = vadd.f32 %v340, %v1120
        %1122 = vmatprep.mubr.bf16.mxu0 0
        %1123 = vmatmul.mubr.bf16.gmra.mrb[0].mxu0 %v477
        %v1124 = vpop.f32.mrb[0].mxu0
        %v1125 = vadd.f32 %v336, %v1124
        %v1126 = vpop.f32.mrb[0].mxu0
        %v1127 = vadd.f32 %v340, %v1126
        %v1128 = vpop.f32.mrb[0].mxu0
        %v1129 = vadd.f32 %v336, %v1128
        %v1130 = vpop.f32.mrb[0].mxu0
        %v1131 = vadd.f32 %v340, %v1130
        %1132 = vmatprep.mubr.bf16.mxu0 0
        %1133 = vmatmul.mubr.bf16.gmra.mrb[0].mxu0 %v478
        %v1134 = vpop.f32.mrb[0].mxu0
        %v1135 = vadd.f32 %v336, %v1134
        %v1136 = vpop.f32.mrb[0].mxu0
        %v1137 = vadd.f32 %v340, %v1136
        %v1138 = vpop.f32.mrb[0].mxu0
        %v1139 = vadd.f32 %v336, %v1138
        %v1140 = vpop.f32.mrb[0].mxu0
        %v1141 = vadd.f32 %v340, %v1140
        %1142 = vmatprep.mubr.bf16.mxu0 0
        %1143 = vmatmul.mubr.bf16.gmra.mrb[0].mxu0 %v479
        %v1144 = vpop.f32.mrb[0].mxu0
        %v1145 = vadd.f32 %v336, %v1144
        %v1146 = vpop.f32.mrb[0].mxu0
        %v1147 = vadd.f32 %v340, %v1146
        %v1148 = vpop.f32.mrb[0].mxu0
        %v1149 = vadd.f32 %v336, %v1148
        %v1150 = vpop.f32.mrb[0].mxu0
        %v1151 = vadd.f32 %v340, %v1150
        %1152 = vmatprep.mubr.bf16.mxu0 0
        %1153 = vmatmul.mubr.bf16.gmra.mrb[0].mxu0 %v480
        %v1154 = vpop.f32.mrb[0].mxu0
        %v1155 = vadd.f32 %v336, %v1154
        %v1156 = vpop.f32.mrb[0].mxu0
        %v1157 = vadd.f32 %v340, %v1156
        %v1158 = vpop.f32.mrb[0].mxu0
        %v1159 = vadd.f32 %v336, %v1158
        %v1160 = vpop.f32.mrb[0].mxu0
        %v1161 = vadd.f32 %v340, %v1160
        %1162 = vmatprep.mubr.bf16.mxu0 0
        %1163 = vmatmul.mubr.bf16.gmra.mrb[0].mxu0 %v481
        %v1164 = vpop.f32.mrb[0].mxu0
        %v1165 = vadd.f32 %v336, %v1164
        %v1166 = vpop.f32.mrb[0].mxu0
        %v1167 = vadd.f32 %v340, %v1166
        %v1168 = vpop.f32.mrb[0].mxu0
        %v1169 = vadd.f32 %v336, %v1168
        %v1170 = vpop.f32.mrb[0].mxu0
        %v1171 = vadd.f32 %v340, %v1170
        %1172 = vmatprep.mubr.bf16.mxu0 0
        %1173 = vmatmul.mubr.bf16.gmra.mrb[0].mxu0 %v482
        %v1174 = vpop.f32.mrb[0].mxu0
        %v1175 = vadd.f32 %v336, %v1174
        %v1176 = vpop.f32.mrb[0].mxu0
        %v1177 = vadd.f32 %v340, %v1176
        %v1178 = vpop.f32.mrb[0].mxu0
        %v1179 = vadd.f32 %v336, %v1178
        %v1180 = vpop.f32.mrb[0].mxu0
        %v1181 = vadd.f32 %v340, %v1180
        %1182 = vmatprep.mubr.bf16.mxu0 0
        %1183 = vmatmul.mubr.bf16.gmra.mrb[0].mxu0 %v483
        %v1184 = vpop.f32.mrb[0].mxu0
        %v1185 = vadd.f32 %v336, %v1184
        %v1186 = vpop.f32.mrb[0].mxu0
        %v1187 = vadd.f32 %v340, %v1186
        %v1188 = vpop.f32.mrb[0].mxu0
        %v1189 = vadd.f32 %v336, %v1188
        %v1190 = vpop.f32.mrb[0].mxu0
        %v1191 = vadd.f32 %v340, %v1190
        %1192 = vmatprep.mubr.bf16.mxu0 0
        %1193 = vmatmul.mubr.bf16.gmra.mrb[0].mxu0 %v484
        %v1194 = vpop.f32.mrb[0].mxu0
        %v1195 = vadd.f32 %v336, %v1194
        %v1196 = vpop.f32.mrb[0].mxu0
        %v1197 = vadd.f32 %v340, %v1196
        %v1198 = vpop.f32.mrb[0].mxu0
        %v1199 = vadd.f32 %v336, %v1198
        %v1200 = vpop.f32.mrb[0].mxu0
        %v1201 = vadd.f32 %v340, %v1200
        %1202 = vmatprep.mubr.bf16.mxu0 0
        %1203 = vmatmul.mubr.bf16.gmra.mrb[0].mxu0 %v485
        %v1204 = vpop.f32.mrb[0].mxu0
        %v1205 = vadd.f32 %v336, %v1204
        %v1206 = vpop.f32.mrb[0].mxu0
        %v1207 = vadd.f32 %v340, %v1206
        %v1208 = vpop.f32.mrb[0].mxu0
        %v1209 = vadd.f32 %v336, %v1208
        %v1210 = vpop.f32.mrb[0].mxu0
        %v1211 = vadd.f32 %v340, %v1210
        %1212 = vmatprep.mubr.bf16.mxu0 0
        %1213 = vmatmul.mubr.bf16.gmra.mrb[0].mxu0 %v486
        %v1214 = vpop.f32.mrb[0].mxu0
        %v1215 = vadd.f32 %v336, %v1214
        %v1216 = vpop.f32.mrb[0].mxu0
        %v1217 = vadd.f32 %v340, %v1216
        %v1218 = vpop.f32.mrb[0].mxu0
        %v1219 = vadd.f32 %v336, %v1218
        %v1220 = vpop.f32.mrb[0].mxu0
        %v1221 = vadd.f32 %v340, %v1220
        %1222 = vmatprep.mubr.bf16.mxu0 0
        %1223 = vmatmul.mubr.bf16.gmra.mrb[0].mxu0 %v487
        %v1224 = vpop.f32.mrb[0].mxu0
        %v1225 = vadd.f32 %v336, %v1224
        %v1226 = vpop.f32.mrb[0].mxu0
        %v1227 = vadd.f32 %v340, %v1226
        %v1228 = vpop.f32.mrb[0].mxu0
        %v1229 = vadd.f32 %v336, %v1228
        %v1230 = vpop.f32.mrb[0].mxu0
        %v1231 = vadd.f32 %v340, %v1230
        %1232 = vmatprep.mubr.bf16.mxu0 0
        %1233 = vmatmul.mubr.bf16.gmra.mrb[0].mxu0 %v488
        %v1234 = vpop.f32.mrb[0].mxu0
        %v1235 = vadd.f32 %v336, %v1234
        %v1236 = vpop.f32.mrb[0].mxu0
        %v1237 = vadd.f32 %v340, %v1236
        %v1238 = vpop.f32.mrb[0].mxu0
        %v1239 = vadd.f32 %v336, %v1238
        %v1240 = vpop.f32.mrb[0].mxu0
        %v1241 = vadd.f32 %v340, %v1240
        %1242 = vmatprep.mubr.bf16.mxu0 0
        %1243 = vmatmul.mubr.bf16.gmra.mrb[0].mxu0 %v489
        %v1244 = vpop.f32.mrb[0].mxu0
        %v1245 = vadd.f32 %v336, %v1244
        %v1246 = vpop.f32.mrb[0].mxu0
        %v1247 = vadd.f32 %v340, %v1246
        %v1248 = vpop.f32.mrb[0].mxu0
        %v1249 = vadd.f32 %v336, %v1248
        %v1250 = vpop.f32.mrb[0].mxu0
        %v1251 = vadd.f32 %v340, %v1250
        %1252 = vmatprep.mubr.bf16.mxu0 0
        %1253 = vmatmul.mubr.bf16.gmra.mrb[0].mxu0 %v490
        %v1254 = vpop.f32.mrb[0].mxu0
        %v1255 = vadd.f32 %v336, %v1254
        %v1256 = vpop.f32.mrb[0].mxu0
        %v1257 = vadd.f32 %v340, %v1256
        %v1258 = vpop.f32.mrb[0].mxu0
        %v1259 = vadd.f32 %v336, %v1258
        %v1260 = vpop.f32.mrb[0].mxu0
        %v1261 = vadd.f32 %v340, %v1260
        %1262 = vmatprep.mubr.bf16.mxu0 0
        %1263 = vmatmul.mubr.bf16.gmra.mrb[0].mxu0 %v491
        %v1264 = vpop.f32.mrb[0].mxu0
        %v1265 = vadd.f32 %v336, %v1264
        %v1266 = vpop.f32.mrb[0].mxu0
        %v1267 = vadd.f32 %v340, %v1266
        %v1268 = vpop.f32.mrb[0].mxu0
        %v1269 = vadd.f32 %v336, %v1268
        %v1270 = vpop.f32.mrb[0].mxu0
        %v1271 = vadd.f32 %v340, %v1270
        %1272 = vmatprep.mubr.bf16.mxu0 0
        %1273 = vmatmul.mubr.bf16.gmra.mrb[0].mxu0 %v492
        %v1274 = vpop.f32.mrb[0].mxu0
        %v1275 = vadd.f32 %v336, %v1274
        %v1276 = vpop.f32.mrb[0].mxu0
        %v1277 = vadd.f32 %v340, %v1276
        %v1278 = vpop.f32.mrb[0].mxu0
        %v1279 = vadd.f32 %v336, %v1278
        %v1280 = vpop.f32.mrb[0].mxu0
        %v1281 = vadd.f32 %v340, %v1280
        %1282 = vmatprep.mubr.bf16.mxu0 0
        %1283 = vmatmul.mubr.bf16.gmra.mrb[0].mxu0 %v493
        %v1284 = vpop.f32.mrb[0].mxu0
        %v1285 = vadd.f32 %v336, %v1284
        %v1286 = vpop.f32.mrb[0].mxu0
        %v1287 = vadd.f32 %v340, %v1286
        %v1288 = vpop.f32.mrb[0].mxu0
        %v1289 = vadd.f32 %v336, %v1288
        %v1290 = vpop.f32.mrb[0].mxu0
        %v1291 = vadd.f32 %v340, %v1290
        %1292 = vmatprep.mubr.bf16.mxu0 0
        %1293 = vmatmul.mubr.bf16.gmra.mrb[0].mxu0 %v494
        %v1294 = vpop.f32.mrb[0].mxu0
        %v1295 = vadd.f32 %v336, %v1294
        %v1296 = vpop.f32.mrb[0].mxu0
        %v1297 = vadd.f32 %v340, %v1296
        %v1298 = vpop.f32.mrb[0].mxu0
        %v1299 = vadd.f32 %v336, %v1298
        %v1300 = vpop.f32.mrb[0].mxu0
        %v1301 = vadd.f32 %v340, %v1300
        %1302 = vmatprep.mubr.bf16.mxu0 0
        %1303 = vmatmul.mubr.bf16.gmra.mrb[0].mxu0 %v495
        %v1304 = vpop.f32.mrb[0].mxu0
        %v1305 = vadd.f32 %v336, %v1304
        %v1306 = vpop.f32.mrb[0].mxu0
        %v1307 = vadd.f32 %v340, %v1306
        %v1308 = vpop.f32.mrb[0].mxu0
        %v1309 = vadd.f32 %v336, %v1308
        %v1310 = vpop.f32.mrb[0].mxu0
        %v1311 = vadd.f32 %v340, %v1310
        %1312 = vmatprep.mubr.bf16.mxu0 0
        %1313 = vmatmul.mubr.bf16.gmra.mrb[0].mxu0 %v496
        %v1314 = vpop.f32.mrb[0].mxu0
        %v1315 = vadd.f32 %v336, %v1314
        %v1316 = vpop.f32.mrb[0].mxu0
        %v1317 = vadd.f32 %v340, %v1316
        %v1318 = vpop.f32.mrb[0].mxu0
        %v1319 = vadd.f32 %v336, %v1318
        %v1320 = vpop.f32.mrb[0].mxu0
        %v1321 = vadd.f32 %v340, %v1320
        %1322 = vmatprep.mubr.bf16.mxu0 0
        %1323 = vmatmul.mubr.bf16.gmra.mrb[0].mxu0 %v497
        %v1324 = vpop.f32.mrb[0].mxu0
        %v1325 = vadd.f32 %v336, %v1324
        %v1326 = vpop.f32.mrb[0].mxu0
        %v1327 = vadd.f32 %v340, %v1326
        %v1328 = vpop.f32.mrb[0].mxu0
        %v1329 = vadd.f32 %v336, %v1328
        %v1330 = vpop.f32.mrb[0].mxu0
        %v1331 = vadd.f32 %v340, %v1330
        %1332 = vmatprep.mubr.bf16.mxu0 0
        %1333 = vmatmul.mubr.bf16.gmra.mrb[0].mxu0 %v498
        %v1334 = vpop.f32.mrb[0].mxu0
        %v1335 = vadd.f32 %v336, %v1334
        %v1336 = vpop.f32.mrb[0].mxu0
        %v1337 = vadd.f32 %v340, %v1336
        %v1338 = vpop.f32.mrb[0].mxu0
        %v1339 = vadd.f32 %v336, %v1338
        %v1340 = vpop.f32.mrb[0].mxu0
        %v1341 = vadd.f32 %v340, %v1340
        %1342 = vmatprep.mubr.bf16.mxu0 0
        %1343 = vmatmul.mubr.bf16.gmra.mrb[0].mxu0 %v499
        %v1344 = vpop.f32.mrb[0].mxu0
        %v1345 = vadd.f32 %v336, %v1344
        %v1346 = vpop.f32.mrb[0].mxu0
        %v1347 = vadd.f32 %v340, %v1346
        %v1348 = vpop.f32.mrb[0].mxu0
        %v1349 = vadd.f32 %v336, %v1348
        %v1350 = vpop.f32.mrb[0].mxu0
        %v1351 = vadd.f32 %v340, %v1350
        %1352 = vmatprep.mubr.bf16.mxu0 0
        %1353 = vmatmul.mubr.bf16.gmra.mrb[0].mxu0 %v500
        %v1354 = vpop.f32.mrb[0].mxu0
        %v1355 = vadd.f32 %v336, %v1354
        %v1356 = vpop.f32.mrb[0].mxu0
        %v1357 = vadd.f32 %v340, %v1356
        %v1358 = vpop.f32.mrb[0].mxu0
        %v1359 = vadd.f32 %v336, %v1358
        %v1360 = vpop.f32.mrb[0].mxu0
        %v1361 = vadd.f32 %v340, %v1360
        %1362 = vmatprep.mubr.bf16.mxu0 0
        %1363 = vmatmul.mubr.bf16.gmra.mrb[0].mxu0 %v501
        %v1364 = vpop.f32.mrb[0].mxu0
        %v1365 = vadd.f32 %v336, %v1364
        %v1366 = vpop.f32.mrb[0].mxu0
        %v1367 = vadd.f32 %v340, %v1366
        %v1368 = vpop.f32.mrb[0].mxu0
        %v1369 = vadd.f32 %v336, %v1368
        %v1370 = vpop.f32.mrb[0].mxu0
        %v1371 = vadd.f32 %v340, %v1370
        %1372 = vmatprep.mubr.bf16.mxu0 0
        %1373 = vmatmul.mubr.bf16.gmra.mrb[0].mxu0 %v502
        %v1374 = vpop.f32.mrb[0].mxu0
        %v1375 = vadd.f32 %v336, %v1374
        %v1376 = vpop.f32.mrb[0].mxu0
        %v1377 = vadd.f32 %v340, %v1376
        %v1378 = vpop.f32.mrb[0].mxu0
        %v1379 = vadd.f32 %v336, %v1378
        %v1380 = vpop.f32.mrb[0].mxu0
        %v1381 = vadd.f32 %v340, %v1380
        %1382 = vmatprep.mubr.bf16.mxu0 0
        %1383 = vmatmul.mubr.bf16.gmra.mrb[0].mxu0 %v503
        %v1384 = vpop.f32.mrb[0].mxu0
        %v1385 = vadd.f32 %v336, %v1384
        %v1386 = vpop.f32.mrb[0].mxu0
        %v1387 = vadd.f32 %v340, %v1386
        %v1388 = vpop.f32.mrb[0].mxu0
        %v1389 = vadd.f32 %v336, %v1388
        %v1390 = vpop.f32.mrb[0].mxu0
        %v1391 = vadd.f32 %v340, %v1390
        %1392 = vmatprep.mubr.bf16.mxu0 0
        %1393 = vmatmul.mubr.bf16.gmra.mrb[0].mxu0 %v504
        %v1394 = vpop.f32.mrb[0].mxu0
        %v1395 = vadd.f32 %v336, %v1394
        %v1396 = vpop.f32.mrb[0].mxu0
        %v1397 = vadd.f32 %v340, %v1396
        %v1398 = vpop.f32.mrb[0].mxu0
        %v1399 = vadd.f32 %v336, %v1398
        %v1400 = vpop.f32.mrb[0].mxu0
        %v1401 = vadd.f32 %v340, %v1400
        %1402 = vdwg.mxu0
        %v1403 = vmul.f32 %v732, %v732
        %v1404 = vmul.f32 %v734, %v734
        %v1405 = vmul.f32 %v1085, %v1085
        %v1406 = vmul.f32 %v1087, %v1087
        %v1407 = vmul.f32 %v736, %v736
        %v1408 = vmul.f32 %v738, %v738
        %v1409 = vmul.f32 %v1089, %v1089
        %v1410 = vmul.f32 %v1091, %v1091
        %v1411 = vmul.f32 %v742, %v742
        %v1412 = vmul.f32 %v744, %v744
        %v1413 = vmul.f32 %v1095, %v1095
        %v1414 = vmul.f32 %v1097, %v1097
        %v1415 = vmul.f32 %v746, %v746
        %v1416 = vmul.f32 %v748, %v748
        %v1417 = vmul.f32 %v1099, %v1099
        %v1418 = vmul.f32 %v1101, %v1101
        %v1419 = vmul.f32 %v752, %v752
        %v1420 = vmul.f32 %v754, %v754
        %v1421 = vmul.f32 %v1105, %v1105
        %v1422 = vmul.f32 %v1107, %v1107
        %v1423 = vmul.f32 %v756, %v756
        %v1424 = vmul.f32 %v758, %v758
        %v1425 = vmul.f32 %v1109, %v1109
        %v1426 = vmul.f32 %v1111, %v1111
        %v1427 = vmul.f32 %v762, %v762
        %v1428 = vmul.f32 %v764, %v764
        %v1429 = vmul.f32 %v1115, %v1115
        %v1430 = vmul.f32 %v1117, %v1117
        %v1431 = vmul.f32 %v766, %v766
        %v1432 = vmul.f32 %v768, %v768
        %v1433 = vmul.f32 %v1119, %v1119
        %v1434 = vmul.f32 %v1121, %v1121
        %v1435 = vmul.f32 %v772, %v772
        %v1436 = vmul.f32 %v774, %v774
        %v1437 = vmul.f32 %v1125, %v1125
        %v1438 = vmul.f32 %v1127, %v1127
        %v1439 = vmul.f32 %v776, %v776
        %v1440 = vmul.f32 %v778, %v778
        %v1441 = vmul.f32 %v1129, %v1129
        %v1442 = vmul.f32 %v1131, %v1131
        %v1443 = vmul.f32 %v782, %v782
        %v1444 = vmul.f32 %v784, %v784
        %v1445 = vmul.f32 %v1135, %v1135
        %v1446 = vmul.f32 %v1137, %v1137
        %v1447 = vmul.f32 %v786, %v786
        %v1448 = vmul.f32 %v788, %v788
        %v1449 = vmul.f32 %v1139, %v1139
        %v1450 = vmul.f32 %v1141, %v1141
        %v1451 = vmul.f32 %v792, %v792
        %v1452 = vmul.f32 %v794, %v794
        %v1453 = vmul.f32 %v1145, %v1145
        %v1454 = vmul.f32 %v1147, %v1147
        %v1455 = vmul.f32 %v796, %v796
        %v1456 = vmul.f32 %v798, %v798
        %v1457 = vmul.f32 %v1149, %v1149
        %v1458 = vmul.f32 %v1151, %v1151
        %v1459 = vmul.f32 %v802, %v802
        %v1460 = vmul.f32 %v804, %v804
        %v1461 = vmul.f32 %v1155, %v1155
        %v1462 = vmul.f32 %v1157, %v1157
        %v1463 = vmul.f32 %v806, %v806
        %v1464 = vmul.f32 %v808, %v808
        %v1465 = vmul.f32 %v1159, %v1159
        %v1466 = vmul.f32 %v1161, %v1161
        %v1467 = vmul.f32 %v812, %v812
        %v1468 = vmul.f32 %v814, %v814
        %v1469 = vmul.f32 %v1165, %v1165
        %v1470 = vmul.f32 %v1167, %v1167
        %v1471 = vmul.f32 %v816, %v816
        %v1472 = vmul.f32 %v818, %v818
        %v1473 = vmul.f32 %v1169, %v1169
        %v1474 = vmul.f32 %v1171, %v1171
        %v1475 = vmul.f32 %v822, %v822
        %v1476 = vmul.f32 %v824, %v824
        %v1477 = vmul.f32 %v1175, %v1175
        %v1478 = vmul.f32 %v1177, %v1177
        %v1479 = vmul.f32 %v826, %v826
        %v1480 = vmul.f32 %v828, %v828
        %v1481 = vmul.f32 %v1179, %v1179
        %v1482 = vmul.f32 %v1181, %v1181
        %v1483 = vmul.f32 %v832, %v832
        %v1484 = vmul.f32 %v834, %v834
        %v1485 = vmul.f32 %v1185, %v1185
        %v1486 = vmul.f32 %v1187, %v1187
        %v1487 = vmul.f32 %v836, %v836
        %v1488 = vmul.f32 %v838, %v838
        %v1489 = vmul.f32 %v1189, %v1189
        %v1490 = vmul.f32 %v1191, %v1191
        %v1491 = vmul.f32 %v842, %v842
        %v1492 = vmul.f32 %v844, %v844
        %v1493 = vmul.f32 %v1195, %v1195
        %v1494 = vmul.f32 %v1197, %v1197
        %v1495 = vmul.f32 %v846, %v846
        %v1496 = vmul.f32 %v848, %v848
        %v1497 = vmul.f32 %v1199, %v1199
        %v1498 = vmul.f32 %v1201, %v1201
        %v1499 = vmul.f32 %v852, %v852
        %v1500 = vmul.f32 %v854, %v854
        %v1501 = vmul.f32 %v1205, %v1205
        %v1502 = vmul.f32 %v1207, %v1207
        %v1503 = vmul.f32 %v856, %v856
        %v1504 = vmul.f32 %v858, %v858
        %v1505 = vmul.f32 %v1209, %v1209
        %v1506 = vmul.f32 %v1211, %v1211
        %v1507 = vmul.f32 %v862, %v862
        %v1508 = vmul.f32 %v864, %v864
        %v1509 = vmul.f32 %v1215, %v1215
        %v1510 = vmul.f32 %v1217, %v1217
        %v1511 = vmul.f32 %v866, %v866
        %v1512 = vmul.f32 %v868, %v868
        %v1513 = vmul.f32 %v1219, %v1219
        %v1514 = vmul.f32 %v1221, %v1221
        %v1515 = vmul.f32 %v872, %v872
        %v1516 = vmul.f32 %v874, %v874
        %v1517 = vmul.f32 %v1225, %v1225
        %v1518 = vmul.f32 %v1227, %v1227
        %v1519 = vmul.f32 %v876, %v876
        %v1520 = vmul.f32 %v878, %v878
        %v1521 = vmul.f32 %v1229, %v1229
        %v1522 = vmul.f32 %v1231, %v1231
        %v1523 = vmul.f32 %v882, %v882
        %v1524 = vmul.f32 %v884, %v884
        %v1525 = vmul.f32 %v1235, %v1235
        %v1526 = vmul.f32 %v1237, %v1237
        %v1527 = vmul.f32 %v886, %v886
        %v1528 = vmul.f32 %v888, %v888
        %v1529 = vmul.f32 %v1239, %v1239
        %v1530 = vmul.f32 %v1241, %v1241
        %v1531 = vmul.f32 %v892, %v892
        %v1532 = vmul.f32 %v894, %v894
        %v1533 = vmul.f32 %v1245, %v1245
        %v1534 = vmul.f32 %v1247, %v1247
        %v1535 = vmul.f32 %v896, %v896
        %v1536 = vmul.f32 %v898, %v898
        %v1537 = vmul.f32 %v1249, %v1249
        %v1538 = vmul.f32 %v1251, %v1251
        %v1539 = vmul.f32 %v902, %v902
        %v1540 = vmul.f32 %v904, %v904
        %v1541 = vmul.f32 %v1255, %v1255
        %v1542 = vmul.f32 %v1257, %v1257
        %v1543 = vmul.f32 %v906, %v906
        %v1544 = vmul.f32 %v908, %v908
        %v1545 = vmul.f32 %v1259, %v1259
        %v1546 = vmul.f32 %v1261, %v1261
        %v1547 = vmul.f32 %v912, %v912
        %v1548 = vmul.f32 %v914, %v914
        %v1549 = vmul.f32 %v1265, %v1265
        %v1550 = vmul.f32 %v1267, %v1267
        %v1551 = vmul.f32 %v916, %v916
        %v1552 = vmul.f32 %v918, %v918
        %v1553 = vmul.f32 %v1269, %v1269
        %v1554 = vmul.f32 %v1271, %v1271
        %v1555 = vmul.f32 %v922, %v922
        %v1556 = vmul.f32 %v924, %v924
        %v1557 = vmul.f32 %v1275, %v1275
        %v1558 = vmul.f32 %v1277, %v1277
        %v1559 = vmul.f32 %v926, %v926
        %v1560 = vmul.f32 %v928, %v928
        %v1561 = vmul.f32 %v1279, %v1279
        %v1562 = vmul.f32 %v1281, %v1281
        %v1563 = vmul.f32 %v932, %v932
        %v1564 = vmul.f32 %v934, %v934
        %v1565 = vmul.f32 %v1285, %v1285
        %v1566 = vmul.f32 %v1287, %v1287
        %v1567 = vmul.f32 %v936, %v936
        %v1568 = vmul.f32 %v938, %v938
        %v1569 = vmul.f32 %v1289, %v1289
        %v1570 = vmul.f32 %v1291, %v1291
        %v1571 = vmul.f32 %v942, %v942
        %v1572 = vmul.f32 %v944, %v944
        %v1573 = vmul.f32 %v1295, %v1295
        %v1574 = vmul.f32 %v1297, %v1297
        %v1575 = vmul.f32 %v946, %v946
        %v1576 = vmul.f32 %v948, %v948
        %v1577 = vmul.f32 %v1299, %v1299
        %v1578 = vmul.f32 %v1301, %v1301
        %v1579 = vmul.f32 %v952, %v952
        %v1580 = vmul.f32 %v954, %v954
        %v1581 = vmul.f32 %v1305, %v1305
        %v1582 = vmul.f32 %v1307, %v1307
        %v1583 = vmul.f32 %v956, %v956
        %v1584 = vmul.f32 %v958, %v958
        %v1585 = vmul.f32 %v1309, %v1309
        %v1586 = vmul.f32 %v1311, %v1311
        %v1587 = vmul.f32 %v962, %v962
        %v1588 = vmul.f32 %v964, %v964
        %v1589 = vmul.f32 %v1315, %v1315
        %v1590 = vmul.f32 %v1317, %v1317
        %v1591 = vmul.f32 %v966, %v966
        %v1592 = vmul.f32 %v968, %v968
        %v1593 = vmul.f32 %v1319, %v1319
        %v1594 = vmul.f32 %v1321, %v1321
        %v1595 = vmul.f32 %v972, %v972
        %v1596 = vmul.f32 %v974, %v974
        %v1597 = vmul.f32 %v1325, %v1325
        %v1598 = vmul.f32 %v1327, %v1327
        %v1599 = vmul.f32 %v976, %v976
        %v1600 = vmul.f32 %v978, %v978
        %v1601 = vmul.f32 %v1329, %v1329
        %v1602 = vmul.f32 %v1331, %v1331
        %v1603 = vmul.f32 %v982, %v982
        %v1604 = vmul.f32 %v984, %v984
        %v1605 = vmul.f32 %v1335, %v1335
        %v1606 = vmul.f32 %v1337, %v1337
        %v1607 = vmul.f32 %v986, %v986
        %v1608 = vmul.f32 %v988, %v988
        %v1609 = vmul.f32 %v1339, %v1339
        %v1610 = vmul.f32 %v1341, %v1341
        %v1611 = vmul.f32 %v992, %v992
        %v1612 = vmul.f32 %v994, %v994
        %v1613 = vmul.f32 %v1345, %v1345
        %v1614 = vmul.f32 %v1347, %v1347
        %v1615 = vmul.f32 %v996, %v996
        %v1616 = vmul.f32 %v998, %v998
        %v1617 = vmul.f32 %v1349, %v1349
        %v1618 = vmul.f32 %v1351, %v1351
        %v1619 = vmul.f32 %v1002, %v1002
        %v1620 = vmul.f32 %v1004, %v1004
        %v1621 = vmul.f32 %v1355, %v1355
        %v1622 = vmul.f32 %v1357, %v1357
        %v1623 = vmul.f32 %v1006, %v1006
        %v1624 = vmul.f32 %v1008, %v1008
        %v1625 = vmul.f32 %v1359, %v1359
        %v1626 = vmul.f32 %v1361, %v1361
        %v1627 = vmul.f32 %v1012, %v1012
        %v1628 = vmul.f32 %v1014, %v1014
        %v1629 = vmul.f32 %v1365, %v1365
        %v1630 = vmul.f32 %v1367, %v1367
        %v1631 = vmul.f32 %v1016, %v1016
        %v1632 = vmul.f32 %v1018, %v1018
        %v1633 = vmul.f32 %v1369, %v1369
        %v1634 = vmul.f32 %v1371, %v1371
        %v1635 = vmul.f32 %v1022, %v1022
        %v1636 = vmul.f32 %v1024, %v1024
        %v1637 = vmul.f32 %v1375, %v1375
        %v1638 = vmul.f32 %v1377, %v1377
        %v1639 = vmul.f32 %v1026, %v1026
        %v1640 = vmul.f32 %v1028, %v1028
        %v1641 = vmul.f32 %v1379, %v1379
        %v1642 = vmul.f32 %v1381, %v1381
        %v1643 = vmul.f32 %v1032, %v1032
        %v1644 = vmul.f32 %v1034, %v1034
        %v1645 = vmul.f32 %v1385, %v1385
        %v1646 = vmul.f32 %v1387, %v1387
        %v1647 = vmul.f32 %v1036, %v1036
        %v1648 = vmul.f32 %v1038, %v1038
        %v1649 = vmul.f32 %v1389, %v1389
        %v1650 = vmul.f32 %v1391, %v1391
        %v1651 = vmul.f32 %v1042, %v1042
        %v1652 = vmul.f32 %v1044, %v1044
        %v1653 = vmul.f32 %v1395, %v1395
        %v1654 = vmul.f32 %v1397, %v1397
        %v1655 = vmul.f32 %v1046, %v1046
        %v1656 = vmul.f32 %v1048, %v1048
        %v1657 = vmul.f32 %v1399, %v1399
        %v1658 = vmul.f32 %v1401, %v1401
        %v1659 = vmul.f32 %v732, %v1403
        %v1660 = vmul.f32 %v734, %v1404
        %v1661 = vmul.f32 %v1085, %v1405
        %v1662 = vmul.f32 %v1087, %v1406
        %v1663 = vmul.f32 %v736, %v1407
        %v1664 = vmul.f32 %v738, %v1408
        %v1665 = vmul.f32 %v1089, %v1409
        %v1666 = vmul.f32 %v1091, %v1410
        %v1667 = vmul.f32 %v742, %v1411
        %v1668 = vmul.f32 %v744, %v1412
        %v1669 = vmul.f32 %v1095, %v1413
        %v1670 = vmul.f32 %v1097, %v1414
        %v1671 = vmul.f32 %v746, %v1415
        %v1672 = vmul.f32 %v748, %v1416
        %v1673 = vmul.f32 %v1099, %v1417
        %v1674 = vmul.f32 %v1101, %v1418
        %v1675 = vmul.f32 %v752, %v1419
        %v1676 = vmul.f32 %v754, %v1420
        %v1677 = vmul.f32 %v1105, %v1421
        %v1678 = vmul.f32 %v1107, %v1422
        %v1679 = vmul.f32 %v756, %v1423
        %v1680 = vmul.f32 %v758, %v1424
        %v1681 = vmul.f32 %v1109, %v1425
        %v1682 = vmul.f32 %v1111, %v1426
        %v1683 = vmul.f32 %v762, %v1427
        %v1684 = vmul.f32 %v764, %v1428
        %v1685 = vmul.f32 %v1115, %v1429
        %v1686 = vmul.f32 %v1117, %v1430
        %v1687 = vmul.f32 %v766, %v1431
        %v1688 = vmul.f32 %v768, %v1432
        %v1689 = vmul.f32 %v1119, %v1433
        %v1690 = vmul.f32 %v1121, %v1434
        %v1691 = vmul.f32 %v772, %v1435
        %v1692 = vmul.f32 %v774, %v1436
        %v1693 = vmul.f32 %v1125, %v1437
        %v1694 = vmul.f32 %v1127, %v1438
        %v1695 = vmul.f32 %v776, %v1439
        %v1696 = vmul.f32 %v778, %v1440
        %v1697 = vmul.f32 %v1129, %v1441
        %v1698 = vmul.f32 %v1131, %v1442
        %v1699 = vmul.f32 %v782, %v1443
        %v1700 = vmul.f32 %v784, %v1444
        %v1701 = vmul.f32 %v1135, %v1445
        %v1702 = vmul.f32 %v1137, %v1446
        %v1703 = vmul.f32 %v786, %v1447
        %v1704 = vmul.f32 %v788, %v1448
        %v1705 = vmul.f32 %v1139, %v1449
        %v1706 = vmul.f32 %v1141, %v1450
        %v1707 = vmul.f32 %v792, %v1451
        %v1708 = vmul.f32 %v794, %v1452
        %v1709 = vmul.f32 %v1145, %v1453
        %v1710 = vmul.f32 %v1147, %v1454
        %v1711 = vmul.f32 %v796, %v1455
        %v1712 = vmul.f32 %v798, %v1456
        %v1713 = vmul.f32 %v1149, %v1457
        %v1714 = vmul.f32 %v1151, %v1458
        %v1715 = vmul.f32 %v802, %v1459
        %v1716 = vmul.f32 %v804, %v1460
        %v1717 = vmul.f32 %v1155, %v1461
        %v1718 = vmul.f32 %v1157, %v1462
        %v1719 = vmul.f32 %v806, %v1463
        %v1720 = vmul.f32 %v808, %v1464
        %v1721 = vmul.f32 %v1159, %v1465
        %v1722 = vmul.f32 %v1161, %v1466
        %v1723 = vmul.f32 %v812, %v1467
        %v1724 = vmul.f32 %v814, %v1468
        %v1725 = vmul.f32 %v1165, %v1469
        %v1726 = vmul.f32 %v1167, %v1470
        %v1727 = vmul.f32 %v816, %v1471
        %v1728 = vmul.f32 %v818, %v1472
        %v1729 = vmul.f32 %v1169, %v1473
        %v1730 = vmul.f32 %v1171, %v1474
        %v1731 = vmul.f32 %v822, %v1475
        %v1732 = vmul.f32 %v824, %v1476
        %v1733 = vmul.f32 %v1175, %v1477
        %v1734 = vmul.f32 %v1177, %v1478
        %v1735 = vmul.f32 %v826, %v1479
        %v1736 = vmul.f32 %v828, %v1480
        %v1737 = vmul.f32 %v1179, %v1481
        %v1738 = vmul.f32 %v1181, %v1482
        %v1739 = vmul.f32 %v832, %v1483
        %v1740 = vmul.f32 %v834, %v1484
        %v1741 = vmul.f32 %v1185, %v1485
        %v1742 = vmul.f32 %v1187, %v1486
        %v1743 = vmul.f32 %v836, %v1487
        %v1744 = vmul.f32 %v838, %v1488
        %v1745 = vmul.f32 %v1189, %v1489
        %v1746 = vmul.f32 %v1191, %v1490
        %v1747 = vmul.f32 %v842, %v1491
        %v1748 = vmul.f32 %v844, %v1492
        %v1749 = vmul.f32 %v1195, %v1493
        %v1750 = vmul.f32 %v1197, %v1494
        %v1751 = vmul.f32 %v846, %v1495
        %v1752 = vmul.f32 %v848, %v1496
        %v1753 = vmul.f32 %v1199, %v1497
        %v1754 = vmul.f32 %v1201, %v1498
        %v1755 = vmul.f32 %v852, %v1499
        %v1756 = vmul.f32 %v854, %v1500
        %v1757 = vmul.f32 %v1205, %v1501
        %v1758 = vmul.f32 %v1207, %v1502
        %v1759 = vmul.f32 %v856, %v1503
        %v1760 = vmul.f32 %v858, %v1504
        %v1761 = vmul.f32 %v1209, %v1505
        %v1762 = vmul.f32 %v1211, %v1506
        %v1763 = vmul.f32 %v862, %v1507
        %v1764 = vmul.f32 %v864, %v1508
        %v1765 = vmul.f32 %v1215, %v1509
        %v1766 = vmul.f32 %v1217, %v1510
        %v1767 = vmul.f32 %v866, %v1511
        %v1768 = vmul.f32 %v868, %v1512
        %v1769 = vmul.f32 %v1219, %v1513
        %v1770 = vmul.f32 %v1221, %v1514
        %v1771 = vmul.f32 %v872, %v1515
        %v1772 = vmul.f32 %v874, %v1516
        %v1773 = vmul.f32 %v1225, %v1517
        %v1774 = vmul.f32 %v1227, %v1518
        %v1775 = vmul.f32 %v876, %v1519
        %v1776 = vmul.f32 %v878, %v1520
        %v1777 = vmul.f32 %v1229, %v1521
        %v1778 = vmul.f32 %v1231, %v1522
        %v1779 = vmul.f32 %v882, %v1523
        %v1780 = vmul.f32 %v884, %v1524
        %v1781 = vmul.f32 %v1235, %v1525
        %v1782 = vmul.f32 %v1237, %v1526
        %v1783 = vmul.f32 %v886, %v1527
        %v1784 = vmul.f32 %v888, %v1528
        %v1785 = vmul.f32 %v1239, %v1529
        %v1786 = vmul.f32 %v1241, %v1530
        %v1787 = vmul.f32 %v892, %v1531
        %v1788 = vmul.f32 %v894, %v1532
        %v1789 = vmul.f32 %v1245, %v1533
        %v1790 = vmul.f32 %v1247, %v1534
        %v1791 = vmul.f32 %v896, %v1535
        %v1792 = vmul.f32 %v898, %v1536
        %v1793 = vmul.f32 %v1249, %v1537
        %v1794 = vmul.f32 %v1251, %v1538
        %v1795 = vmul.f32 %v902, %v1539
        %v1796 = vmul.f32 %v904, %v1540
        %v1797 = vmul.f32 %v1255, %v1541
        %v1798 = vmul.f32 %v1257, %v1542
        %v1799 = vmul.f32 %v906, %v1543
        %v1800 = vmul.f32 %v908, %v1544
        %v1801 = vmul.f32 %v1259, %v1545
        %v1802 = vmul.f32 %v1261, %v1546
        %v1803 = vmul.f32 %v912, %v1547
        %v1804 = vmul.f32 %v914, %v1548
        %v1805 = vmul.f32 %v1265, %v1549
        %v1806 = vmul.f32 %v1267, %v1550
        %v1807 = vmul.f32 %v916, %v1551
        %v1808 = vmul.f32 %v918, %v1552
        %v1809 = vmul.f32 %v1269, %v1553
        %v1810 = vmul.f32 %v1271, %v1554
        %v1811 = vmul.f32 %v922, %v1555
        %v1812 = vmul.f32 %v924, %v1556
        %v1813 = vmul.f32 %v1275, %v1557
        %v1814 = vmul.f32 %v1277, %v1558
        %v1815 = vmul.f32 %v926, %v1559
        %v1816 = vmul.f32 %v928, %v1560
        %v1817 = vmul.f32 %v1279, %v1561
        %v1818 = vmul.f32 %v1281, %v1562
        %v1819 = vmul.f32 %v932, %v1563
        %v1820 = vmul.f32 %v934, %v1564
        %v1821 = vmul.f32 %v1285, %v1565
        %v1822 = vmul.f32 %v1287, %v1566
        %v1823 = vmul.f32 %v936, %v1567
        %v1824 = vmul.f32 %v938, %v1568
        %v1825 = vmul.f32 %v1289, %v1569
        %v1826 = vmul.f32 %v1291, %v1570
        %v1827 = vmul.f32 %v942, %v1571
        %v1828 = vmul.f32 %v944, %v1572
        %v1829 = vmul.f32 %v1295, %v1573
        %v1830 = vmul.f32 %v1297, %v1574
        %v1831 = vmul.f32 %v946, %v1575
        %v1832 = vmul.f32 %v948, %v1576
        %v1833 = vmul.f32 %v1299, %v1577
        %v1834 = vmul.f32 %v1301, %v1578
        %v1835 = vmul.f32 %v952, %v1579
        %v1836 = vmul.f32 %v954, %v1580
        %v1837 = vmul.f32 %v1305, %v1581
        %v1838 = vmul.f32 %v1307, %v1582
        %v1839 = vmul.f32 %v956, %v1583
        %v1840 = vmul.f32 %v958, %v1584
        %v1841 = vmul.f32 %v1309, %v1585
        %v1842 = vmul.f32 %v1311, %v1586
        %v1843 = vmul.f32 %v962, %v1587
        %v1844 = vmul.f32 %v964, %v1588
        %v1845 = vmul.f32 %v1315, %v1589
        %v1846 = vmul.f32 %v1317, %v1590
        %v1847 = vmul.f32 %v966, %v1591
        %v1848 = vmul.f32 %v968, %v1592
        %v1849 = vmul.f32 %v1319, %v1593
        %v1850 = vmul.f32 %v1321, %v1594
        %v1851 = vmul.f32 %v972, %v1595
        %v1852 = vmul.f32 %v974, %v1596
        %v1853 = vmul.f32 %v1325, %v1597
        %v1854 = vmul.f32 %v1327, %v1598
        %v1855 = vmul.f32 %v976, %v1599
        %v1856 = vmul.f32 %v978, %v1600
        %v1857 = vmul.f32 %v1329, %v1601
        %v1858 = vmul.f32 %v1331, %v1602
        %v1859 = vmul.f32 %v982, %v1603
        %v1860 = vmul.f32 %v984, %v1604
        %v1861 = vmul.f32 %v1335, %v1605
        %v1862 = vmul.f32 %v1337, %v1606
        %v1863 = vmul.f32 %v986, %v1607
        %v1864 = vmul.f32 %v988, %v1608
        %v1865 = vmul.f32 %v1339, %v1609
        %v1866 = vmul.f32 %v1341, %v1610
        %v1867 = vmul.f32 %v992, %v1611
        %v1868 = vmul.f32 %v994, %v1612
        %v1869 = vmul.f32 %v1345, %v1613
        %v1870 = vmul.f32 %v1347, %v1614
        %v1871 = vmul.f32 %v996, %v1615
        %v1872 = vmul.f32 %v998, %v1616
        %v1873 = vmul.f32 %v1349, %v1617
        %v1874 = vmul.f32 %v1351, %v1618
        %v1875 = vmul.f32 %v1002, %v1619
        %v1876 = vmul.f32 %v1004, %v1620
        %v1877 = vmul.f32 %v1355, %v1621
        %v1878 = vmul.f32 %v1357, %v1622
        %v1879 = vmul.f32 %v1006, %v1623
        %v1880 = vmul.f32 %v1008, %v1624
        %v1881 = vmul.f32 %v1359, %v1625
        %v1882 = vmul.f32 %v1361, %v1626
        %v1883 = vmul.f32 %v1012, %v1627
        %v1884 = vmul.f32 %v1014, %v1628
        %v1885 = vmul.f32 %v1365, %v1629
        %v1886 = vmul.f32 %v1367, %v1630
        %v1887 = vmul.f32 %v1016, %v1631
        %v1888 = vmul.f32 %v1018, %v1632
        %v1889 = vmul.f32 %v1369, %v1633
        %v1890 = vmul.f32 %v1371, %v1634
        %v1891 = vmul.f32 %v1022, %v1635
        %v1892 = vmul.f32 %v1024, %v1636
        %v1893 = vmul.f32 %v1375, %v1637
        %v1894 = vmul.f32 %v1377, %v1638
        %v1895 = vmul.f32 %v1026, %v1639
        %v1896 = vmul.f32 %v1028, %v1640
        %v1897 = vmul.f32 %v1379, %v1641
        %v1898 = vmul.f32 %v1381, %v1642
        %v1899 = vmul.f32 %v1032, %v1643
        %v1900 = vmul.f32 %v1034, %v1644
        %v1901 = vmul.f32 %v1385, %v1645
        %v1902 = vmul.f32 %v1387, %v1646
        %v1903 = vmul.f32 %v1036, %v1647
        %v1904 = vmul.f32 %v1038, %v1648
        %v1905 = vmul.f32 %v1389, %v1649
        %v1906 = vmul.f32 %v1391, %v1650
        %v1907 = vmul.f32 %v1042, %v1651
        %v1908 = vmul.f32 %v1044, %v1652
        %v1909 = vmul.f32 %v1395, %v1653
        %v1910 = vmul.f32 %v1397, %v1654
        %v1911 = vmul.f32 %v1046, %v1655
        %v1912 = vmul.f32 %v1048, %v1656
        %v1913 = vmul.f32 %v1399, %v1657
        %v1914 = vmul.f32 %v1401, %v1658
        %v1915 = vmul.f32 %v1659, 0.044715
        %v1916 = vmul.f32 %v1660, 0.044715
        %v1917 = vmul.f32 %v1661, 0.044715
        %v1918 = vmul.f32 %v1662, 0.044715
        %v1919 = vmul.f32 %v1663, 0.044715
        %v1920 = vmul.f32 %v1664, 0.044715
        %v1921 = vmul.f32 %v1665, 0.044715
        %v1922 = vmul.f32 %v1666, 0.044715
        %v1923 = vmul.f32 %v1667, 0.044715
        %v1924 = vmul.f32 %v1668, 0.044715
        %v1925 = vmul.f32 %v1669, 0.044715
        %v1926 = vmul.f32 %v1670, 0.044715
        %v1927 = vmul.f32 %v1671, 0.044715
        %v1928 = vmul.f32 %v1672, 0.044715
        %v1929 = vmul.f32 %v1673, 0.044715
        %v1930 = vmul.f32 %v1674, 0.044715
        %v1931 = vmul.f32 %v1675, 0.044715
        %v1932 = vmul.f32 %v1676, 0.044715
        %v1933 = vmul.f32 %v1677, 0.044715
        %v1934 = vmul.f32 %v1678, 0.044715
        %v1935 = vmul.f32 %v1679, 0.044715
        %v1936 = vmul.f32 %v1680, 0.044715
        %v1937 = vmul.f32 %v1681, 0.044715
        %v1938 = vmul.f32 %v1682, 0.044715
        %v1939 = vmul.f32 %v1683, 0.044715
        %v1940 = vmul.f32 %v1684, 0.044715
        %v1941 = vmul.f32 %v1685, 0.044715
        %v1942 = vmul.f32 %v1686, 0.044715
        %v1943 = vmul.f32 %v1687, 0.044715
        %v1944 = vmul.f32 %v1688, 0.044715
        %v1945 = vmul.f32 %v1689, 0.044715
        %v1946 = vmul.f32 %v1690, 0.044715
        %v1947 = vmul.f32 %v1691, 0.044715
        %v1948 = vmul.f32 %v1692, 0.044715
        %v1949 = vmul.f32 %v1693, 0.044715
        %v1950 = vmul.f32 %v1694, 0.044715
        %v1951 = vmul.f32 %v1695, 0.044715
        %v1952 = vmul.f32 %v1696, 0.044715
        %v1953 = vmul.f32 %v1697, 0.044715
        %v1954 = vmul.f32 %v1698, 0.044715
        %v1955 = vmul.f32 %v1699, 0.044715
        %v1956 = vmul.f32 %v1700, 0.044715
        %v1957 = vmul.f32 %v1701, 0.044715
        %v1958 = vmul.f32 %v1702, 0.044715
        %v1959 = vmul.f32 %v1703, 0.044715
        %v1960 = vmul.f32 %v1704, 0.044715
        %v1961 = vmul.f32 %v1705, 0.044715
        %v1962 = vmul.f32 %v1706, 0.044715
        %v1963 = vmul.f32 %v1707, 0.044715
        %v1964 = vmul.f32 %v1708, 0.044715
        %v1965 = vmul.f32 %v1709, 0.044715
        %v1966 = vmul.f32 %v1710, 0.044715
        %v1967 = vmul.f32 %v1711, 0.044715
        %v1968 = vmul.f32 %v1712, 0.044715
        %v1969 = vmul.f32 %v1713, 0.044715
        %v1970 = vmul.f32 %v1714, 0.044715
        %v1971 = vmul.f32 %v1715, 0.044715
        %v1972 = vmul.f32 %v1716, 0.044715
        %v1973 = vmul.f32 %v1717, 0.044715
        %v1974 = vmul.f32 %v1718, 0.044715
        %v1975 = vmul.f32 %v1719, 0.044715
        %v1976 = vmul.f32 %v1720, 0.044715
        %v1977 = vmul.f32 %v1721, 0.044715
        %v1978 = vmul.f32 %v1722, 0.044715
        %v1979 = vmul.f32 %v1723, 0.044715
        %v1980 = vmul.f32 %v1724, 0.044715
        %v1981 = vmul.f32 %v1725, 0.044715
        %v1982 = vmul.f32 %v1726, 0.044715
        %v1983 = vmul.f32 %v1727, 0.044715
        %v1984 = vmul.f32 %v1728, 0.044715
        %v1985 = vmul.f32 %v1729, 0.044715
        %v1986 = vmul.f32 %v1730, 0.044715
        %v1987 = vmul.f32 %v1731, 0.044715
        %v1988 = vmul.f32 %v1732, 0.044715
        %v1989 = vmul.f32 %v1733, 0.044715
        %v1990 = vmul.f32 %v1734, 0.044715
        %v1991 = vmul.f32 %v1735, 0.044715
        %v1992 = vmul.f32 %v1736, 0.044715
        %v1993 = vmul.f32 %v1737, 0.044715
        %v1994 = vmul.f32 %v1738, 0.044715
        %v1995 = vmul.f32 %v1739, 0.044715
        %v1996 = vmul.f32 %v1740, 0.044715
        %v1997 = vmul.f32 %v1741, 0.044715
        %v1998 = vmul.f32 %v1742, 0.044715
        %v1999 = vmul.f32 %v1743, 0.044715
        %v2000 = vmul.f32 %v1744, 0.044715
        %v2001 = vmul.f32 %v1745, 0.044715
        %v2002 = vmul.f32 %v1746, 0.044715
        %v2003 = vmul.f32 %v1747, 0.044715
        %v2004 = vmul.f32 %v1748, 0.044715
        %v2005 = vmul.f32 %v1749, 0.044715
        %v2006 = vmul.f32 %v1750, 0.044715
        %v2007 = vmul.f32 %v1751, 0.044715
        %v2008 = vmul.f32 %v1752, 0.044715
        %v2009 = vmul.f32 %v1753, 0.044715
        %v2010 = vmul.f32 %v1754, 0.044715
        %v2011 = vmul.f32 %v1755, 0.044715
        %v2012 = vmul.f32 %v1756, 0.044715
        %v2013 = vmul.f32 %v1757, 0.044715
        %v2014 = vmul.f32 %v1758, 0.044715
        %v2015 = vmul.f32 %v1759, 0.044715
        %v2016 = vmul.f32 %v1760, 0.044715
        %v2017 = vmul.f32 %v1761, 0.044715
        %v2018 = vmul.f32 %v1762, 0.044715
        %v2019 = vmul.f32 %v1763, 0.044715
        %v2020 = vmul.f32 %v1764, 0.044715
        %v2021 = vmul.f32 %v1765, 0.044715
        %v2022 = vmul.f32 %v1766, 0.044715
        %v2023 = vmul.f32 %v1767, 0.044715
        %v2024 = vmul.f32 %v1768, 0.044715
        %v2025 = vmul.f32 %v1769, 0.044715
        %v2026 = vmul.f32 %v1770, 0.044715
        %v2027 = vmul.f32 %v1771, 0.044715
        %v2028 = vmul.f32 %v1772, 0.044715
        %v2029 = vmul.f32 %v1773, 0.044715
        %v2030 = vmul.f32 %v1774, 0.044715
        %v2031 = vmul.f32 %v1775, 0.044715
        %v2032 = vmul.f32 %v1776, 0.044715
        %v2033 = vmul.f32 %v1777, 0.044715
        %v2034 = vmul.f32 %v1778, 0.044715
        %v2035 = vmul.f32 %v1779, 0.044715
        %v2036 = vmul.f32 %v1780, 0.044715
        %v2037 = vmul.f32 %v1781, 0.044715
        %v2038 = vmul.f32 %v1782, 0.044715
        %v2039 = vmul.f32 %v1783, 0.044715
        %v2040 = vmul.f32 %v1784, 0.044715
        %v2041 = vmul.f32 %v1785, 0.044715
        %v2042 = vmul.f32 %v1786, 0.044715
        %v2043 = vmul.f32 %v1787, 0.044715
        %v2044 = vmul.f32 %v1788, 0.044715
        %v2045 = vmul.f32 %v1789, 0.044715
        %v2046 = vmul.f32 %v1790, 0.044715
        %v2047 = vmul.f32 %v1791, 0.044715
        %v2048 = vmul.f32 %v1792, 0.044715
        %v2049 = vmul.f32 %v1793, 0.044715
        %v2050 = vmul.f32 %v1794, 0.044715
        %v2051 = vmul.f32 %v1795, 0.044715
        %v2052 = vmul.f32 %v1796, 0.044715
        %v2053 = vmul.f32 %v1797, 0.044715
        %v2054 = vmul.f32 %v1798, 0.044715
        %v2055 = vmul.f32 %v1799, 0.044715
        %v2056 = vmul.f32 %v1800, 0.044715
        %v2057 = vmul.f32 %v1801, 0.044715
        %v2058 = vmul.f32 %v1802, 0.044715
        %v2059 = vmul.f32 %v1803, 0.044715
        %v2060 = vmul.f32 %v1804, 0.044715
        %v2061 = vmul.f32 %v1805, 0.044715
        %v2062 = vmul.f32 %v1806, 0.044715
        %v2063 = vmul.f32 %v1807, 0.044715
        %v2064 = vmul.f32 %v1808, 0.044715
        %v2065 = vmul.f32 %v1809, 0.044715
        %v2066 = vmul.f32 %v1810, 0.044715
        %v2067 = vmul.f32 %v1811, 0.044715
        %v2068 = vmul.f32 %v1812, 0.044715
        %v2069 = vmul.f32 %v1813, 0.044715
        %v2070 = vmul.f32 %v1814, 0.044715
        %v2071 = vmul.f32 %v1815, 0.044715
        %v2072 = vmul.f32 %v1816, 0.044715
        %v2073 = vmul.f32 %v1817, 0.044715
        %v2074 = vmul.f32 %v1818, 0.044715
        %v2075 = vmul.f32 %v1819, 0.044715
        %v2076 = vmul.f32 %v1820, 0.044715
        %v2077 = vmul.f32 %v1821, 0.044715
        %v2078 = vmul.f32 %v1822, 0.044715
        %v2079 = vmul.f32 %v1823, 0.044715
        %v2080 = vmul.f32 %v1824, 0.044715
        %v2081 = vmul.f32 %v1825, 0.044715
        %v2082 = vmul.f32 %v1826, 0.044715
        %v2083 = vmul.f32 %v1827, 0.044715
        %v2084 = vmul.f32 %v1828, 0.044715
        %v2085 = vmul.f32 %v1829, 0.044715
        %v2086 = vmul.f32 %v1830, 0.044715
        %v2087 = vmul.f32 %v1831, 0.044715
        %v2088 = vmul.f32 %v1832, 0.044715
        %v2089 = vmul.f32 %v1833, 0.044715
        %v2090 = vmul.f32 %v1834, 0.044715
        %v2091 = vmul.f32 %v1835, 0.044715
        %v2092 = vmul.f32 %v1836, 0.044715
        %v2093 = vmul.f32 %v1837, 0.044715
        %v2094 = vmul.f32 %v1838, 0.044715
        %v2095 = vmul.f32 %v1839, 0.044715
        %v2096 = vmul.f32 %v1840, 0.044715
        %v2097 = vmul.f32 %v1841, 0.044715
        %v2098 = vmul.f32 %v1842, 0.044715
        %v2099 = vmul.f32 %v1843, 0.044715
        %v2100 = vmul.f32 %v1844, 0.044715
        %v2101 = vmul.f32 %v1845, 0.044715
        %v2102 = vmul.f32 %v1846, 0.044715
        %v2103 = vmul.f32 %v1847, 0.044715
        %v2104 = vmul.f32 %v1848, 0.044715
        %v2105 = vmul.f32 %v1849, 0.044715
        %v2106 = vmul.f32 %v1850, 0.044715
        %v2107 = vmul.f32 %v1851, 0.044715
        %v2108 = vmul.f32 %v1852, 0.044715
        %v2109 = vmul.f32 %v1853, 0.044715
        %v2110 = vmul.f32 %v1854, 0.044715
        %v2111 = vmul.f32 %v1855, 0.044715
        %v2112 = vmul.f32 %v1856, 0.044715
        %v2113 = vmul.f32 %v1857, 0.044715
        %v2114 = vmul.f32 %v1858, 0.044715
        %v2115 = vmul.f32 %v1859, 0.044715
        %v2116 = vmul.f32 %v1860, 0.044715
        %v2117 = vmul.f32 %v1861, 0.044715
        %v2118 = vmul.f32 %v1862, 0.044715
        %v2119 = vmul.f32 %v1863, 0.044715
        %v2120 = vmul.f32 %v1864, 0.044715
        %v2121 = vmul.f32 %v1865, 0.044715
        %v2122 = vmul.f32 %v1866, 0.044715
        %v2123 = vmul.f32 %v1867, 0.044715
        %v2124 = vmul.f32 %v1868, 0.044715
        %v2125 = vmul.f32 %v1869, 0.044715
        %v2126 = vmul.f32 %v1870, 0.044715
        %v2127 = vmul.f32 %v1871, 0.044715
        %v2128 = vmul.f32 %v1872, 0.044715
        %v2129 = vmul.f32 %v1873, 0.044715
        %v2130 = vmul.f32 %v1874, 0.044715
        %v2131 = vmul.f32 %v1875, 0.044715
        %v2132 = vmul.f32 %v1876, 0.044715
        %v2133 = vmul.f32 %v1877, 0.044715
        %v2134 = vmul.f32 %v1878, 0.044715
        %v2135 = vmul.f32 %v1879, 0.044715
        %v2136 = vmul.f32 %v1880, 0.044715
        %v2137 = vmul.f32 %v1881, 0.044715
        %v2138 = vmul.f32 %v1882, 0.044715
        %v2139 = vmul.f32 %v1883, 0.044715
        %v2140 = vmul.f32 %v1884, 0.044715
        %v2141 = vmul.f32 %v1885, 0.044715
        %v2142 = vmul.f32 %v1886, 0.044715
        %v2143 = vmul.f32 %v1887, 0.044715
        %v2144 = vmul.f32 %v1888, 0.044715
        %v2145 = vmul.f32 %v1889, 0.044715
        %v2146 = vmul.f32 %v1890, 0.044715
        %v2147 = vmul.f32 %v1891, 0.044715
        %v2148 = vmul.f32 %v1892, 0.044715
        %v2149 = vmul.f32 %v1893, 0.044715
        %v2150 = vmul.f32 %v1894, 0.044715
        %v2151 = vmul.f32 %v1895, 0.044715
        %v2152 = vmul.f32 %v1896, 0.044715
        %v2153 = vmul.f32 %v1897, 0.044715
        %v2154 = vmul.f32 %v1898, 0.044715
        %v2155 = vmul.f32 %v1899, 0.044715
        %v2156 = vmul.f32 %v1900, 0.044715
        %v2157 = vmul.f32 %v1901, 0.044715
        %v2158 = vmul.f32 %v1902, 0.044715
        %v2159 = vmul.f32 %v1903, 0.044715
        %v2160 = vmul.f32 %v1904, 0.044715
        %v2161 = vmul.f32 %v1905, 0.044715
        %v2162 = vmul.f32 %v1906, 0.044715
        %v2163 = vmul.f32 %v1907, 0.044715
        %v2164 = vmul.f32 %v1908, 0.044715
        %v2165 = vmul.f32 %v1909, 0.044715
        %v2166 = vmul.f32 %v1910, 0.044715
        %v2167 = vmul.f32 %v1911, 0.044715
        %v2168 = vmul.f32 %v1912, 0.044715
        %v2169 = vmul.f32 %v1913, 0.044715
        %v2170 = vmul.f32 %v1914, 0.044715
        %v2171 = vadd.f32 %v732, %v1915
        %v2172 = vadd.f32 %v734, %v1916
        %v2173 = vadd.f32 %v1085, %v1917
        %v2174 = vadd.f32 %v1087, %v1918
        %v2175 = vadd.f32 %v736, %v1919
        %v2176 = vadd.f32 %v738, %v1920
        %v2177 = vadd.f32 %v1089, %v1921
        %v2178 = vadd.f32 %v1091, %v1922
        %v2179 = vadd.f32 %v742, %v1923
        %v2180 = vadd.f32 %v744, %v1924
        %v2181 = vadd.f32 %v1095, %v1925
        %v2182 = vadd.f32 %v1097, %v1926
        %v2183 = vadd.f32 %v746, %v1927
        %v2184 = vadd.f32 %v748, %v1928
        %v2185 = vadd.f32 %v1099, %v1929
        %v2186 = vadd.f32 %v1101, %v1930
        %v2187 = vadd.f32 %v752, %v1931
        %v2188 = vadd.f32 %v754, %v1932
        %v2189 = vadd.f32 %v1105, %v1933
        %v2190 = vadd.f32 %v1107, %v1934
        %v2191 = vadd.f32 %v756, %v1935
        %v2192 = vadd.f32 %v758, %v1936
        %v2193 = vadd.f32 %v1109, %v1937
        %v2194 = vadd.f32 %v1111, %v1938
        %v2195 = vadd.f32 %v762, %v1939
        %v2196 = vadd.f32 %v764, %v1940
        %v2197 = vadd.f32 %v1115, %v1941
        %v2198 = vadd.f32 %v1117, %v1942
        %v2199 = vadd.f32 %v766, %v1943
        %v2200 = vadd.f32 %v768, %v1944
        %v2201 = vadd.f32 %v1119, %v1945
        %v2202 = vadd.f32 %v1121, %v1946
        %v2203 = vadd.f32 %v772, %v1947
        %v2204 = vadd.f32 %v774, %v1948
        %v2205 = vadd.f32 %v1125, %v1949
        %v2206 = vadd.f32 %v1127, %v1950
        %v2207 = vadd.f32 %v776, %v1951
        %v2208 = vadd.f32 %v778, %v1952
        %v2209 = vadd.f32 %v1129, %v1953
        %v2210 = vadd.f32 %v1131, %v1954
        %v2211 = vadd.f32 %v782, %v1955
        %v2212 = vadd.f32 %v784, %v1956
        %v2213 = vadd.f32 %v1135, %v1957
        %v2214 = vadd.f32 %v1137, %v1958
        %v2215 = vadd.f32 %v786, %v1959
        %v2216 = vadd.f32 %v788, %v1960
        %v2217 = vadd.f32 %v1139, %v1961
        %v2218 = vadd.f32 %v1141, %v1962
        %v2219 = vadd.f32 %v792, %v1963
        %v2220 = vadd.f32 %v794, %v1964
        %v2221 = vadd.f32 %v1145, %v1965
        %v2222 = vadd.f32 %v1147, %v1966
        %v2223 = vadd.f32 %v796, %v1967
        %v2224 = vadd.f32 %v798, %v1968
        %v2225 = vadd.f32 %v1149, %v1969
        %v2226 = vadd.f32 %v1151, %v1970
        %v2227 = vadd.f32 %v802, %v1971
        %v2228 = vadd.f32 %v804, %v1972
        %v2229 = vadd.f32 %v1155, %v1973
        %v2230 = vadd.f32 %v1157, %v1974
        %v2231 = vadd.f32 %v806, %v1975
        %v2232 = vadd.f32 %v808, %v1976
        %v2233 = vadd.f32 %v1159, %v1977
        %v2234 = vadd.f32 %v1161, %v1978
        %v2235 = vadd.f32 %v812, %v1979
        %v2236 = vadd.f32 %v814, %v1980
        %v2237 = vadd.f32 %v1165, %v1981
        %v2238 = vadd.f32 %v1167, %v1982
        %v2239 = vadd.f32 %v816, %v1983
        %v2240 = vadd.f32 %v818, %v1984
        %v2241 = vadd.f32 %v1169, %v1985
        %v2242 = vadd.f32 %v1171, %v1986
        %v2243 = vadd.f32 %v822, %v1987
        %v2244 = vadd.f32 %v824, %v1988
        %v2245 = vadd.f32 %v1175, %v1989
        %v2246 = vadd.f32 %v1177, %v1990
        %v2247 = vadd.f32 %v826, %v1991
        %v2248 = vadd.f32 %v828, %v1992
        %v2249 = vadd.f32 %v1179, %v1993
        %v2250 = vadd.f32 %v1181, %v1994
        %v2251 = vadd.f32 %v832, %v1995
        %v2252 = vadd.f32 %v834, %v1996
        %v2253 = vadd.f32 %v1185, %v1997
        %v2254 = vadd.f32 %v1187, %v1998
        %v2255 = vadd.f32 %v836, %v1999
        %v2256 = vadd.f32 %v838, %v2000
        %v2257 = vadd.f32 %v1189, %v2001
        %v2258 = vadd.f32 %v1191, %v2002
        %v2259 = vadd.f32 %v842, %v2003
        %v2260 = vadd.f32 %v844, %v2004
        %v2261 = vadd.f32 %v1195, %v2005
        %v2262 = vadd.f32 %v1197, %v2006
        %v2263 = vadd.f32 %v846, %v2007
        %v2264 = vadd.f32 %v848, %v2008
        %v2265 = vadd.f32 %v1199, %v2009
        %v2266 = vadd.f32 %v1201, %v2010
        %v2267 = vadd.f32 %v852, %v2011
        %v2268 = vadd.f32 %v854, %v2012
        %v2269 = vadd.f32 %v1205, %v2013
        %v2270 = vadd.f32 %v1207, %v2014
        %v2271 = vadd.f32 %v856, %v2015
        %v2272 = vadd.f32 %v858, %v2016
        %v2273 = vadd.f32 %v1209, %v2017
        %v2274 = vadd.f32 %v1211, %v2018
        %v2275 = vadd.f32 %v862, %v2019
        %v2276 = vadd.f32 %v864, %v2020
        %v2277 = vadd.f32 %v1215, %v2021
        %v2278 = vadd.f32 %v1217, %v2022
        %v2279 = vadd.f32 %v866, %v2023
        %v2280 = vadd.f32 %v868, %v2024
        %v2281 = vadd.f32 %v1219, %v2025
        %v2282 = vadd.f32 %v1221, %v2026
        %v2283 = vadd.f32 %v872, %v2027
        %v2284 = vadd.f32 %v874, %v2028
        %v2285 = vadd.f32 %v1225, %v2029
        %v2286 = vadd.f32 %v1227, %v2030
        %v2287 = vadd.f32 %v876, %v2031
        %v2288 = vadd.f32 %v878, %v2032
        %v2289 = vadd.f32 %v1229, %v2033
        %v2290 = vadd.f32 %v1231, %v2034
        %v2291 = vadd.f32 %v882, %v2035
        %v2292 = vadd.f32 %v884, %v2036
        %v2293 = vadd.f32 %v1235, %v2037
        %v2294 = vadd.f32 %v1237, %v2038
        %v2295 = vadd.f32 %v886, %v2039
        %v2296 = vadd.f32 %v888, %v2040
        %v2297 = vadd.f32 %v1239, %v2041
        %v2298 = vadd.f32 %v1241, %v2042
        %v2299 = vadd.f32 %v892, %v2043
        %v2300 = vadd.f32 %v894, %v2044
        %v2301 = vadd.f32 %v1245, %v2045
        %v2302 = vadd.f32 %v1247, %v2046
        %v2303 = vadd.f32 %v896, %v2047
        %v2304 = vadd.f32 %v898, %v2048
        %v2305 = vadd.f32 %v1249, %v2049
        %v2306 = vadd.f32 %v1251, %v2050
        %v2307 = vadd.f32 %v902, %v2051
        %v2308 = vadd.f32 %v904, %v2052
        %v2309 = vadd.f32 %v1255, %v2053
        %v2310 = vadd.f32 %v1257, %v2054
        %v2311 = vadd.f32 %v906, %v2055
        %v2312 = vadd.f32 %v908, %v2056
        %v2313 = vadd.f32 %v1259, %v2057
        %v2314 = vadd.f32 %v1261, %v2058
        %v2315 = vadd.f32 %v912, %v2059
        %v2316 = vadd.f32 %v914, %v2060
        %v2317 = vadd.f32 %v1265, %v2061
        %v2318 = vadd.f32 %v1267, %v2062
        %v2319 = vadd.f32 %v916, %v2063
        %v2320 = vadd.f32 %v918, %v2064
        %v2321 = vadd.f32 %v1269, %v2065
        %v2322 = vadd.f32 %v1271, %v2066
        %v2323 = vadd.f32 %v922, %v2067
        %v2324 = vadd.f32 %v924, %v2068
        %v2325 = vadd.f32 %v1275, %v2069
        %v2326 = vadd.f32 %v1277, %v2070
        %v2327 = vadd.f32 %v926, %v2071
        %v2328 = vadd.f32 %v928, %v2072
        %v2329 = vadd.f32 %v1279, %v2073
        %v2330 = vadd.f32 %v1281, %v2074
        %v2331 = vadd.f32 %v932, %v2075
        %v2332 = vadd.f32 %v934, %v2076
        %v2333 = vadd.f32 %v1285, %v2077
        %v2334 = vadd.f32 %v1287, %v2078
        %v2335 = vadd.f32 %v936, %v2079
        %v2336 = vadd.f32 %v938, %v2080
        %v2337 = vadd.f32 %v1289, %v2081
        %v2338 = vadd.f32 %v1291, %v2082
        %v2339 = vadd.f32 %v942, %v2083
        %v2340 = vadd.f32 %v944, %v2084
        %v2341 = vadd.f32 %v1295, %v2085
        %v2342 = vadd.f32 %v1297, %v2086
        %v2343 = vadd.f32 %v946, %v2087
        %v2344 = vadd.f32 %v948, %v2088
        %v2345 = vadd.f32 %v1299, %v2089
        %v2346 = vadd.f32 %v1301, %v2090
        %v2347 = vadd.f32 %v952, %v2091
        %v2348 = vadd.f32 %v954, %v2092
        %v2349 = vadd.f32 %v1305, %v2093
        %v2350 = vadd.f32 %v1307, %v2094
        %v2351 = vadd.f32 %v956, %v2095
        %v2352 = vadd.f32 %v958, %v2096
        %v2353 = vadd.f32 %v1309, %v2097
        %v2354 = vadd.f32 %v1311, %v2098
        %v2355 = vadd.f32 %v962, %v2099
        %v2356 = vadd.f32 %v964, %v2100
        %v2357 = vadd.f32 %v1315, %v2101
        %v2358 = vadd.f32 %v1317, %v2102
        %v2359 = vadd.f32 %v966, %v2103
        %v2360 = vadd.f32 %v968, %v2104
        %v2361 = vadd.f32 %v1319, %v2105
        %v2362 = vadd.f32 %v1321, %v2106
        %v2363 = vadd.f32 %v972, %v2107
        %v2364 = vadd.f32 %v974, %v2108
        %v2365 = vadd.f32 %v1325, %v2109
        %v2366 = vadd.f32 %v1327, %v2110
        %v2367 = vadd.f32 %v976, %v2111
        %v2368 = vadd.f32 %v978, %v2112
        %v2369 = vadd.f32 %v1329, %v2113
        %v2370 = vadd.f32 %v1331, %v2114
        %v2371 = vadd.f32 %v982, %v2115
        %v2372 = vadd.f32 %v984, %v2116
        %v2373 = vadd.f32 %v1335, %v2117
        %v2374 = vadd.f32 %v1337, %v2118
        %v2375 = vadd.f32 %v986, %v2119
        %v2376 = vadd.f32 %v988, %v2120
        %v2377 = vadd.f32 %v1339, %v2121
        %v2378 = vadd.f32 %v1341, %v2122
        %v2379 = vadd.f32 %v992, %v2123
        %v2380 = vadd.f32 %v994, %v2124
        %v2381 = vadd.f32 %v1345, %v2125
        %v2382 = vadd.f32 %v1347, %v2126
        %v2383 = vadd.f32 %v996, %v2127
        %v2384 = vadd.f32 %v998, %v2128
        %v2385 = vadd.f32 %v1349, %v2129
        %v2386 = vadd.f32 %v1351, %v2130
        %v2387 = vadd.f32 %v1002, %v2131
        %v2388 = vadd.f32 %v1004, %v2132
        %v2389 = vadd.f32 %v1355, %v2133
        %v2390 = vadd.f32 %v1357, %v2134
        %v2391 = vadd.f32 %v1006, %v2135
        %v2392 = vadd.f32 %v1008, %v2136
        %v2393 = vadd.f32 %v1359, %v2137
        %v2394 = vadd.f32 %v1361, %v2138
        %v2395 = vadd.f32 %v1012, %v2139
        %v2396 = vadd.f32 %v1014, %v2140
        %v2397 = vadd.f32 %v1365, %v2141
        %v2398 = vadd.f32 %v1367, %v2142
        %v2399 = vadd.f32 %v1016, %v2143
        %v2400 = vadd.f32 %v1018, %v2144
        %v2401 = vadd.f32 %v1369, %v2145
        %v2402 = vadd.f32 %v1371, %v2146
        %v2403 = vadd.f32 %v1022, %v2147
        %v2404 = vadd.f32 %v1024, %v2148
        %v2405 = vadd.f32 %v1375, %v2149
        %v2406 = vadd.f32 %v1377, %v2150
        %v2407 = vadd.f32 %v1026, %v2151
        %v2408 = vadd.f32 %v1028, %v2152
        %v2409 = vadd.f32 %v1379, %v2153
        %v2410 = vadd.f32 %v1381, %v2154
        %v2411 = vadd.f32 %v1032, %v2155
        %v2412 = vadd.f32 %v1034, %v2156
        %v2413 = vadd.f32 %v1385, %v2157
        %v2414 = vadd.f32 %v1387, %v2158
        %v2415 = vadd.f32 %v1036, %v2159
        %v2416 = vadd.f32 %v1038, %v2160
        %v2417 = vadd.f32 %v1389, %v2161
        %v2418 = vadd.f32 %v1391, %v2162
        %v2419 = vadd.f32 %v1042, %v2163
        %v2420 = vadd.f32 %v1044, %v2164
        %v2421 = vadd.f32 %v1395, %v2165
        %v2422 = vadd.f32 %v1397, %v2166
        %v2423 = vadd.f32 %v1046, %v2167
        %v2424 = vadd.f32 %v1048, %v2168
        %v2425 = vadd.f32 %v1399, %v2169
        %v2426 = vadd.f32 %v1401, %v2170
        %v2427 = vmul.f32 %v2171, 0.7978846
        %v2428 = vmul.f32 %v2172, 0.7978846
        %v2429 = vmul.f32 %v2173, 0.7978846
        %v2430 = vmul.f32 %v2174, 0.7978846
        %v2431 = vmul.f32 %v2175, 0.7978846
        %v2432 = vmul.f32 %v2176, 0.7978846
        %v2433 = vmul.f32 %v2177, 0.7978846
        %v2434 = vmul.f32 %v2178, 0.7978846
        %v2435 = vmul.f32 %v2179, 0.7978846
        %v2436 = vmul.f32 %v2180, 0.7978846
        %v2437 = vmul.f32 %v2181, 0.7978846
        %v2438 = vmul.f32 %v2182, 0.7978846
        %v2439 = vmul.f32 %v2183, 0.7978846
        %v2440 = vmul.f32 %v2184, 0.7978846
        %v2441 = vmul.f32 %v2185, 0.7978846
        %v2442 = vmul.f32 %v2186, 0.7978846
        %v2443 = vmul.f32 %v2187, 0.7978846
        %v2444 = vmul.f32 %v2188, 0.7978846
        %v2445 = vmul.f32 %v2189, 0.7978846
        %v2446 = vmul.f32 %v2190, 0.7978846
        %v2447 = vmul.f32 %v2191, 0.7978846
        %v2448 = vmul.f32 %v2192, 0.7978846
        %v2449 = vmul.f32 %v2193, 0.7978846
        %v2450 = vmul.f32 %v2194, 0.7978846
        %v2451 = vmul.f32 %v2195, 0.7978846
        %v2452 = vmul.f32 %v2196, 0.7978846
        %v2453 = vmul.f32 %v2197, 0.7978846
        %v2454 = vmul.f32 %v2198, 0.7978846
        %v2455 = vmul.f32 %v2199, 0.7978846
        %v2456 = vmul.f32 %v2200, 0.7978846
        %v2457 = vmul.f32 %v2201, 0.7978846
        %v2458 = vmul.f32 %v2202, 0.7978846
        %v2459 = vmul.f32 %v2203, 0.7978846
        %v2460 = vmul.f32 %v2204, 0.7978846
        %v2461 = vmul.f32 %v2205, 0.7978846
        %v2462 = vmul.f32 %v2206, 0.7978846
        %v2463 = vmul.f32 %v2207, 0.7978846
        %v2464 = vmul.f32 %v2208, 0.7978846
        %v2465 = vmul.f32 %v2209, 0.7978846
        %v2466 = vmul.f32 %v2210, 0.7978846
        %v2467 = vmul.f32 %v2211, 0.7978846
        %v2468 = vmul.f32 %v2212, 0.7978846
        %v2469 = vmul.f32 %v2213, 0.7978846
        %v2470 = vmul.f32 %v2214, 0.7978846
        %v2471 = vmul.f32 %v2215, 0.7978846
        %v2472 = vmul.f32 %v2216, 0.7978846
        %v2473 = vmul.f32 %v2217, 0.7978846
        %v2474 = vmul.f32 %v2218, 0.7978846
        %v2475 = vmul.f32 %v2219, 0.7978846
        %v2476 = vmul.f32 %v2220, 0.7978846
        %v2477 = vmul.f32 %v2221, 0.7978846
        %v2478 = vmul.f32 %v2222, 0.7978846
        %v2479 = vmul.f32 %v2223, 0.7978846
        %v2480 = vmul.f32 %v2224, 0.7978846
        %v2481 = vmul.f32 %v2225, 0.7978846
        %v2482 = vmul.f32 %v2226, 0.7978846
        %v2483 = vmul.f32 %v2227, 0.7978846
        %v2484 = vmul.f32 %v2228, 0.7978846
        %v2485 = vmul.f32 %v2229, 0.7978846
        %v2486 = vmul.f32 %v2230, 0.7978846
        %v2487 = vmul.f32 %v2231, 0.7978846
        %v2488 = vmul.f32 %v2232, 0.7978846
        %v2489 = vmul.f32 %v2233, 0.7978846
        %v2490 = vmul.f32 %v2234, 0.7978846
        %v2491 = vmul.f32 %v2235, 0.7978846
        %v2492 = vmul.f32 %v2236, 0.7978846
        %v2493 = vmul.f32 %v2237, 0.7978846
        %v2494 = vmul.f32 %v2238, 0.7978846
        %v2495 = vmul.f32 %v2239, 0.7978846
        %v2496 = vmul.f32 %v2240, 0.7978846
        %v2497 = vmul.f32 %v2241, 0.7978846
        %v2498 = vmul.f32 %v2242, 0.7978846
        %v2499 = vmul.f32 %v2243, 0.7978846
        %v2500 = vmul.f32 %v2244, 0.7978846
        %v2501 = vmul.f32 %v2245, 0.7978846
        %v2502 = vmul.f32 %v2246, 0.7978846
        %v2503 = vmul.f32 %v2247, 0.7978846
        %v2504 = vmul.f32 %v2248, 0.7978846
        %v2505 = vmul.f32 %v2249, 0.7978846
        %v2506 = vmul.f32 %v2250, 0.7978846
        %v2507 = vmul.f32 %v2251, 0.7978846
        %v2508 = vmul.f32 %v2252, 0.7978846
        %v2509 = vmul.f32 %v2253, 0.7978846
        %v2510 = vmul.f32 %v2254, 0.7978846
        %v2511 = vmul.f32 %v2255, 0.7978846
        %v2512 = vmul.f32 %v2256, 0.7978846
        %v2513 = vmul.f32 %v2257, 0.7978846
        %v2514 = vmul.f32 %v2258, 0.7978846
        %v2515 = vmul.f32 %v2259, 0.7978846
        %v2516 = vmul.f32 %v2260, 0.7978846
        %v2517 = vmul.f32 %v2261, 0.7978846
        %v2518 = vmul.f32 %v2262, 0.7978846
        %v2519 = vmul.f32 %v2263, 0.7978846
        %v2520 = vmul.f32 %v2264, 0.7978846
        %v2521 = vmul.f32 %v2265, 0.7978846
        %v2522 = vmul.f32 %v2266, 0.7978846
        %v2523 = vmul.f32 %v2267, 0.7978846
        %v2524 = vmul.f32 %v2268, 0.7978846
        %v2525 = vmul.f32 %v2269, 0.7978846
        %v2526 = vmul.f32 %v2270, 0.7978846
        %v2527 = vmul.f32 %v2271, 0.7978846
        %v2528 = vmul.f32 %v2272, 0.7978846
        %v2529 = vmul.f32 %v2273, 0.7978846
        %v2530 = vmul.f32 %v2274, 0.7978846
        %v2531 = vmul.f32 %v2275, 0.7978846
        %v2532 = vmul.f32 %v2276, 0.7978846
        %v2533 = vmul.f32 %v2277, 0.7978846
        %v2534 = vmul.f32 %v2278, 0.7978846
        %v2535 = vmul.f32 %v2279, 0.7978846
        %v2536 = vmul.f32 %v2280, 0.7978846
        %v2537 = vmul.f32 %v2281, 0.7978846
        %v2538 = vmul.f32 %v2282, 0.7978846
        %v2539 = vmul.f32 %v2283, 0.7978846
        %v2540 = vmul.f32 %v2284, 0.7978846
        %v2541 = vmul.f32 %v2285, 0.7978846
        %v2542 = vmul.f32 %v2286, 0.7978846
        %v2543 = vmul.f32 %v2287, 0.7978846
        %v2544 = vmul.f32 %v2288, 0.7978846
        %v2545 = vmul.f32 %v2289, 0.7978846
        %v2546 = vmul.f32 %v2290, 0.7978846
        %v2547 = vmul.f32 %v2291, 0.7978846
        %v2548 = vmul.f32 %v2292, 0.7978846
        %v2549 = vmul.f32 %v2293, 0.7978846
        %v2550 = vmul.f32 %v2294, 0.7978846
        %v2551 = vmul.f32 %v2295, 0.7978846
        %v2552 = vmul.f32 %v2296, 0.7978846
        %v2553 = vmul.f32 %v2297, 0.7978846
        %v2554 = vmul.f32 %v2298, 0.7978846
        %v2555 = vmul.f32 %v2299, 0.7978846
        %v2556 = vmul.f32 %v2300, 0.7978846
        %v2557 = vmul.f32 %v2301, 0.7978846
        %v2558 = vmul.f32 %v2302, 0.7978846
        %v2559 = vmul.f32 %v2303, 0.7978846
        %v2560 = vmul.f32 %v2304, 0.7978846
        %v2561 = vmul.f32 %v2305, 0.7978846
        %v2562 = vmul.f32 %v2306, 0.7978846
        %v2563 = vmul.f32 %v2307, 0.7978846
        %v2564 = vmul.f32 %v2308, 0.7978846
        %v2565 = vmul.f32 %v2309, 0.7978846
        %v2566 = vmul.f32 %v2310, 0.7978846
        %v2567 = vmul.f32 %v2311, 0.7978846
        %v2568 = vmul.f32 %v2312, 0.7978846
        %v2569 = vmul.f32 %v2313, 0.7978846
        %v2570 = vmul.f32 %v2314, 0.7978846
        %v2571 = vmul.f32 %v2315, 0.7978846
        %v2572 = vmul.f32 %v2316, 0.7978846
        %v2573 = vmul.f32 %v2317, 0.7978846
        %v2574 = vmul.f32 %v2318, 0.7978846
        %v2575 = vmul.f32 %v2319, 0.7978846
        %v2576 = vmul.f32 %v2320, 0.7978846
        %v2577 = vmul.f32 %v2321, 0.7978846
        %v2578 = vmul.f32 %v2322, 0.7978846
        %v2579 = vmul.f32 %v2323, 0.7978846
        %v2580 = vmul.f32 %v2324, 0.7978846
        %v2581 = vmul.f32 %v2325, 0.7978846
        %v2582 = vmul.f32 %v2326, 0.7978846
        %v2583 = vmul.f32 %v2327, 0.7978846
        %v2584 = vmul.f32 %v2328, 0.7978846
        %v2585 = vmul.f32 %v2329, 0.7978846
        %v2586 = vmul.f32 %v2330, 0.7978846
        %v2587 = vmul.f32 %v2331, 0.7978846
        %v2588 = vmul.f32 %v2332, 0.7978846
        %v2589 = vmul.f32 %v2333, 0.7978846
        %v2590 = vmul.f32 %v2334, 0.7978846
        %v2591 = vmul.f32 %v2335, 0.7978846
        %v2592 = vmul.f32 %v2336, 0.7978846
        %v2593 = vmul.f32 %v2337, 0.7978846
        %v2594 = vmul.f32 %v2338, 0.7978846
        %v2595 = vmul.f32 %v2339, 0.7978846
        %v2596 = vmul.f32 %v2340, 0.7978846
        %v2597 = vmul.f32 %v2341, 0.7978846
        %v2598 = vmul.f32 %v2342, 0.7978846
        %v2599 = vmul.f32 %v2343, 0.7978846
        %v2600 = vmul.f32 %v2344, 0.7978846
        %v2601 = vmul.f32 %v2345, 0.7978846
        %v2602 = vmul.f32 %v2346, 0.7978846
        %v2603 = vmul.f32 %v2347, 0.7978846
        %v2604 = vmul.f32 %v2348, 0.7978846
        %v2605 = vmul.f32 %v2349, 0.7978846
        %v2606 = vmul.f32 %v2350, 0.7978846
        %v2607 = vmul.f32 %v2351, 0.7978846
        %v2608 = vmul.f32 %v2352, 0.7978846
        %v2609 = vmul.f32 %v2353, 0.7978846
        %v2610 = vmul.f32 %v2354, 0.7978846
        %v2611 = vmul.f32 %v2355, 0.7978846
        %v2612 = vmul.f32 %v2356, 0.7978846
        %v2613 = vmul.f32 %v2357, 0.7978846
        %v2614 = vmul.f32 %v2358, 0.7978846
        %v2615 = vmul.f32 %v2359, 0.7978846
        %v2616 = vmul.f32 %v2360, 0.7978846
        %v2617 = vmul.f32 %v2361, 0.7978846
        %v2618 = vmul.f32 %v2362, 0.7978846
        %v2619 = vmul.f32 %v2363, 0.7978846
        %v2620 = vmul.f32 %v2364, 0.7978846
        %v2621 = vmul.f32 %v2365, 0.7978846
        %v2622 = vmul.f32 %v2366, 0.7978846
        %v2623 = vmul.f32 %v2367, 0.7978846
        %v2624 = vmul.f32 %v2368, 0.7978846
        %v2625 = vmul.f32 %v2369, 0.7978846
        %v2626 = vmul.f32 %v2370, 0.7978846
        %v2627 = vmul.f32 %v2371, 0.7978846
        %v2628 = vmul.f32 %v2372, 0.7978846
        %v2629 = vmul.f32 %v2373, 0.7978846
        %v2630 = vmul.f32 %v2374, 0.7978846
        %v2631 = vmul.f32 %v2375, 0.7978846
        %v2632 = vmul.f32 %v2376, 0.7978846
        %v2633 = vmul.f32 %v2377, 0.7978846
        %v2634 = vmul.f32 %v2378, 0.7978846
        %v2635 = vmul.f32 %v2379, 0.7978846
        %v2636 = vmul.f32 %v2380, 0.7978846
        %v2637 = vmul.f32 %v2381, 0.7978846
        %v2638 = vmul.f32 %v2382, 0.7978846
        %v2639 = vmul.f32 %v2383, 0.7978846
        %v2640 = vmul.f32 %v2384, 0.7978846
        %v2641 = vmul.f32 %v2385, 0.7978846
        %v2642 = vmul.f32 %v2386, 0.7978846
        %v2643 = vmul.f32 %v2387, 0.7978846
        %v2644 = vmul.f32 %v2388, 0.7978846
        %v2645 = vmul.f32 %v2389, 0.7978846
        %v2646 = vmul.f32 %v2390, 0.7978846
        %v2647 = vmul.f32 %v2391, 0.7978846
        %v2648 = vmul.f32 %v2392, 0.7978846
        %v2649 = vmul.f32 %v2393, 0.7978846
        %v2650 = vmul.f32 %v2394, 0.7978846
        %v2651 = vmul.f32 %v2395, 0.7978846
        %v2652 = vmul.f32 %v2396, 0.7978846
        %v2653 = vmul.f32 %v2397, 0.7978846
        %v2654 = vmul.f32 %v2398, 0.7978846
        %v2655 = vmul.f32 %v2399, 0.7978846
        %v2656 = vmul.f32 %v2400, 0.7978846
        %v2657 = vmul.f32 %v2401, 0.7978846
        %v2658 = vmul.f32 %v2402, 0.7978846
        %v2659 = vmul.f32 %v2403, 0.7978846
        %v2660 = vmul.f32 %v2404, 0.7978846
        %v2661 = vmul.f32 %v2405, 0.7978846
        %v2662 = vmul.f32 %v2406, 0.7978846
        %v2663 = vmul.f32 %v2407, 0.7978846
        %v2664 = vmul.f32 %v2408, 0.7978846
        %v2665 = vmul.f32 %v2409, 0.7978846
        %v2666 = vmul.f32 %v2410, 0.7978846
        %v2667 = vmul.f32 %v2411, 0.7978846
        %v2668 = vmul.f32 %v2412, 0.7978846
        %v2669 = vmul.f32 %v2413, 0.7978846
        %v2670 = vmul.f32 %v2414, 0.7978846
        %v2671 = vmul.f32 %v2415, 0.7978846
        %v2672 = vmul.f32 %v2416, 0.7978846
        %v2673 = vmul.f32 %v2417, 0.7978846
        %v2674 = vmul.f32 %v2418, 0.7978846
        %v2675 = vmul.f32 %v2419, 0.7978846
        %v2676 = vmul.f32 %v2420, 0.7978846
        %v2677 = vmul.f32 %v2421, 0.7978846
        %v2678 = vmul.f32 %v2422, 0.7978846
        %v2679 = vmul.f32 %v2423, 0.7978846
        %v2680 = vmul.f32 %v2424, 0.7978846
        %v2681 = vmul.f32 %v2425, 0.7978846
        %v2682 = vmul.f32 %v2426, 0.7978846
        %v2683 = vtanh.pop %v2427
        %v2684 = vtanh.pop %v2428
        %v2685 = vtanh.pop %v2429
        %v2686 = vtanh.pop %v2430
        %v2687 = vtanh.pop %v2431
        %v2688 = vtanh.pop %v2432
        %v2689 = vtanh.pop %v2433
        %v2690 = vtanh.pop %v2434
        %v2691 = vtanh.pop %v2435
        %v2692 = vtanh.pop %v2436
        %v2693 = vtanh.pop %v2437
        %v2694 = vtanh.pop %v2438
        %v2695 = vtanh.pop %v2439
        %v2696 = vtanh.pop %v2440
        %v2697 = vtanh.pop %v2441
        %v2698 = vtanh.pop %v2442
        %v2699 = vtanh.pop %v2443
        %v2700 = vtanh.pop %v2444
        %v2701 = vtanh.pop %v2445
        %v2702 = vtanh.pop %v2446
        %v2703 = vtanh.pop %v2447
        %v2704 = vtanh.pop %v2448
        %v2705 = vtanh.pop %v2449
        %v2706 = vtanh.pop %v2450
        %v2707 = vtanh.pop %v2451
        %v2708 = vtanh.pop %v2452
        %v2709 = vtanh.pop %v2453
        %v2710 = vtanh.pop %v2454
        %v2711 = vtanh.pop %v2455
        %v2712 = vtanh.pop %v2456
        %v2713 = vtanh.pop %v2457
        %v2714 = vtanh.pop %v2458
        %v2715 = vtanh.pop %v2459
        %v2716 = vtanh.pop %v2460
        %v2717 = vtanh.pop %v2461
        %v2718 = vtanh.pop %v2462
        %v2719 = vtanh.pop %v2463
        %v2720 = vtanh.pop %v2464
        %v2721 = vtanh.pop %v2465
        %v2722 = vtanh.pop %v2466
        %v2723 = vtanh.pop %v2467
        %v2724 = vtanh.pop %v2468
        %v2725 = vtanh.pop %v2469
        %v2726 = vtanh.pop %v2470
        %v2727 = vtanh.pop %v2471
        %v2728 = vtanh.pop %v2472
        %v2729 = vtanh.pop %v2473
        %v2730 = vtanh.pop %v2474
        %v2731 = vtanh.pop %v2475
        %v2732 = vtanh.pop %v2476
        %v2733 = vtanh.pop %v2477
        %v2734 = vtanh.pop %v2478
        %v2735 = vtanh.pop %v2479
        %v2736 = vtanh.pop %v2480
        %v2737 = vtanh.pop %v2481
        %v2738 = vtanh.pop %v2482
        %v2739 = vtanh.pop %v2483
        %v2740 = vtanh.pop %v2484
        %v2741 = vtanh.pop %v2485
        %v2742 = vtanh.pop %v2486
        %v2743 = vtanh.pop %v2487
        %v2744 = vtanh.pop %v2488
        %v2745 = vtanh.pop %v2489
        %v2746 = vtanh.pop %v2490
        %v2747 = vtanh.pop %v2491
        %v2748 = vtanh.pop %v2492
        %v2749 = vtanh.pop %v2493
        %v2750 = vtanh.pop %v2494
        %v2751 = vtanh.pop %v2495
        %v2752 = vtanh.pop %v2496
        %v2753 = vtanh.pop %v2497
        %v2754 = vtanh.pop %v2498
        %v2755 = vtanh.pop %v2499
        %v2756 = vtanh.pop %v2500
        %v2757 = vtanh.pop %v2501
        %v2758 = vtanh.pop %v2502
        %v2759 = vtanh.pop %v2503
        %v2760 = vtanh.pop %v2504
        %v2761 = vtanh.pop %v2505
        %v2762 = vtanh.pop %v2506
        %v2763 = vtanh.pop %v2507
        %v2764 = vtanh.pop %v2508
        %v2765 = vtanh.pop %v2509
        %v2766 = vtanh.pop %v2510
        %v2767 = vtanh.pop %v2511
        %v2768 = vtanh.pop %v2512
        %v2769 = vtanh.pop %v2513
        %v2770 = vtanh.pop %v2514
        %v2771 = vtanh.pop %v2515
        %v2772 = vtanh.pop %v2516
        %v2773 = vtanh.pop %v2517
        %v2774 = vtanh.pop %v2518
        %v2775 = vtanh.pop %v2519
        %v2776 = vtanh.pop %v2520
        %v2777 = vtanh.pop %v2521
        %v2778 = vtanh.pop %v2522
        %v2779 = vtanh.pop %v2523
        %v2780 = vtanh.pop %v2524
        %v2781 = vtanh.pop %v2525
        %v2782 = vtanh.pop %v2526
        %v2783 = vtanh.pop %v2527
        %v2784 = vtanh.pop %v2528
        %v2785 = vtanh.pop %v2529
        %v2786 = vtanh.pop %v2530
        %v2787 = vtanh.pop %v2531
        %v2788 = vtanh.pop %v2532
        %v2789 = vtanh.pop %v2533
        %v2790 = vtanh.pop %v2534
        %v2791 = vtanh.pop %v2535
        %v2792 = vtanh.pop %v2536
        %v2793 = vtanh.pop %v2537
        %v2794 = vtanh.pop %v2538
        %v2795 = vtanh.pop %v2539
        %v2796 = vtanh.pop %v2540
        %v2797 = vtanh.pop %v2541
        %v2798 = vtanh.pop %v2542
        %v2799 = vtanh.pop %v2543
        %v2800 = vtanh.pop %v2544
        %v2801 = vtanh.pop %v2545
        %v2802 = vtanh.pop %v2546
        %v2803 = vtanh.pop %v2547
        %v2804 = vtanh.pop %v2548
        %v2805 = vtanh.pop %v2549
        %v2806 = vtanh.pop %v2550
        %v2807 = vtanh.pop %v2551
        %v2808 = vtanh.pop %v2552
        %v2809 = vtanh.pop %v2553
        %v2810 = vtanh.pop %v2554
        %v2811 = vtanh.pop %v2555
        %v2812 = vtanh.pop %v2556
        %v2813 = vtanh.pop %v2557
        %v2814 = vtanh.pop %v2558
        %v2815 = vtanh.pop %v2559
        %v2816 = vtanh.pop %v2560
        %v2817 = vtanh.pop %v2561
        %v2818 = vtanh.pop %v2562
        %v2819 = vtanh.pop %v2563
        %v2820 = vtanh.pop %v2564
        %v2821 = vtanh.pop %v2565
        %v2822 = vtanh.pop %v2566
        %v2823 = vtanh.pop %v2567
        %v2824 = vtanh.pop %v2568
        %v2825 = vtanh.pop %v2569
        %v2826 = vtanh.pop %v2570
        %v2827 = vtanh.pop %v2571
        %v2828 = vtanh.pop %v2572
        %v2829 = vtanh.pop %v2573
        %v2830 = vtanh.pop %v2574
        %v2831 = vtanh.pop %v2575
        %v2832 = vtanh.pop %v2576
        %v2833 = vtanh.pop %v2577
        %v2834 = vtanh.pop %v2578
        %v2835 = vtanh.pop %v2579
        %v2836 = vtanh.pop %v2580
        %v2837 = vtanh.pop %v2581
        %v2838 = vtanh.pop %v2582
        %v2839 = vtanh.pop %v2583
        %v2840 = vtanh.pop %v2584
        %v2841 = vtanh.pop %v2585
        %v2842 = vtanh.pop %v2586
        %v2843 = vtanh.pop %v2587
        %v2844 = vtanh.pop %v2588
        %v2845 = vtanh.pop %v2589
        %v2846 = vtanh.pop %v2590
        %v2847 = vtanh.pop %v2591
        %v2848 = vtanh.pop %v2592
        %v2849 = vtanh.pop %v2593
        %v2850 = vtanh.pop %v2594
        %v2851 = vtanh.pop %v2595
        %v2852 = vtanh.pop %v2596
        %v2853 = vtanh.pop %v2597
        %v2854 = vtanh.pop %v2598
        %v2855 = vtanh.pop %v2599
        %v2856 = vtanh.pop %v2600
        %v2857 = vtanh.pop %v2601
        %v2858 = vtanh.pop %v2602
        %v2859 = vtanh.pop %v2603
        %v2860 = vtanh.pop %v2604
        %v2861 = vtanh.pop %v2605
        %v2862 = vtanh.pop %v2606
        %v2863 = vtanh.pop %v2607
        %v2864 = vtanh.pop %v2608
        %v2865 = vtanh.pop %v2609
        %v2866 = vtanh.pop %v2610
        %v2867 = vtanh.pop %v2611
        %v2868 = vtanh.pop %v2612
        %v2869 = vtanh.pop %v2613
        %v2870 = vtanh.pop %v2614
        %v2871 = vtanh.pop %v2615
        %v2872 = vtanh.pop %v2616
        %v2873 = vtanh.pop %v2617
        %v2874 = vtanh.pop %v2618
        %v2875 = vtanh.pop %v2619
        %v2876 = vtanh.pop %v2620
        %v2877 = vtanh.pop %v2621
        %v2878 = vtanh.pop %v2622
        %v2879 = vtanh.pop %v2623
        %v2880 = vtanh.pop %v2624
        %v2881 = vtanh.pop %v2625
        %v2882 = vtanh.pop %v2626
        %v2883 = vtanh.pop %v2627
        %v2884 = vtanh.pop %v2628
        %v2885 = vtanh.pop %v2629
        %v2886 = vtanh.pop %v2630
        %v2887 = vtanh.pop %v2631
        %v2888 = vtanh.pop %v2632
        %v2889 = vtanh.pop %v2633
        %v2890 = vtanh.pop %v2634
        %v2891 = vtanh.pop %v2635
        %v2892 = vtanh.pop %v2636
        %v2893 = vtanh.pop %v2637
        %v2894 = vtanh.pop %v2638
        %v2895 = vtanh.pop %v2639
        %v2896 = vtanh.pop %v2640
        %v2897 = vtanh.pop %v2641
        %v2898 = vtanh.pop %v2642
        %v2899 = vtanh.pop %v2643
        %v2900 = vtanh.pop %v2644
        %v2901 = vtanh.pop %v2645
        %v2902 = vtanh.pop %v2646
        %v2903 = vtanh.pop %v2647
        %v2904 = vtanh.pop %v2648
        %v2905 = vtanh.pop %v2649
        %v2906 = vtanh.pop %v2650
        %v2907 = vtanh.pop %v2651
        %v2908 = vtanh.pop %v2652
        %v2909 = vtanh.pop %v2653
        %v2910 = vtanh.pop %v2654
        %v2911 = vtanh.pop %v2655
        %v2912 = vtanh.pop %v2656
        %v2913 = vtanh.pop %v2657
        %v2914 = vtanh.pop %v2658
        %v2915 = vtanh.pop %v2659
        %v2916 = vtanh.pop %v2660
        %v2917 = vtanh.pop %v2661
        %v2918 = vtanh.pop %v2662
        %v2919 = vtanh.pop %v2663
        %v2920 = vtanh.pop %v2664
        %v2921 = vtanh.pop %v2665
        %v2922 = vtanh.pop %v2666
        %v2923 = vtanh.pop %v2667
        %v2924 = vtanh.pop %v2668
        %v2925 = vtanh.pop %v2669
        %v2926 = vtanh.pop %v2670
        %v2927 = vtanh.pop %v2671
        %v2928 = vtanh.pop %v2672
        %v2929 = vtanh.pop %v2673
        %v2930 = vtanh.pop %v2674
        %v2931 = vtanh.pop %v2675
        %v2932 = vtanh.pop %v2676
        %v2933 = vtanh.pop %v2677
        %v2934 = vtanh.pop %v2678
        %v2935 = vtanh.pop %v2679
        %v2936 = vtanh.pop %v2680
        %v2937 = vtanh.pop %v2681
        %v2938 = vtanh.pop %v2682
        %v2939 = vadd.f32 %v2683, 1.0
        %v2940 = vadd.f32 %v2684, 1.0
        %v2941 = vadd.f32 %v2685, 1.0
        %v2942 = vadd.f32 %v2686, 1.0
        %v2943 = vadd.f32 %v2687, 1.0
        %v2944 = vadd.f32 %v2688, 1.0
        %v2945 = vadd.f32 %v2689, 1.0
        %v2946 = vadd.f32 %v2690, 1.0
        %v2947 = vadd.f32 %v2691, 1.0
        %v2948 = vadd.f32 %v2692, 1.0
        %v2949 = vadd.f32 %v2693, 1.0
        %v2950 = vadd.f32 %v2694, 1.0
        %v2951 = vadd.f32 %v2695, 1.0
        %v2952 = vadd.f32 %v2696, 1.0
        %v2953 = vadd.f32 %v2697, 1.0
        %v2954 = vadd.f32 %v2698, 1.0
        %v2955 = vadd.f32 %v2699, 1.0
        %v2956 = vadd.f32 %v2700, 1.0
        %v2957 = vadd.f32 %v2701, 1.0
        %v2958 = vadd.f32 %v2702, 1.0
        %v2959 = vadd.f32 %v2703, 1.0
        %v2960 = vadd.f32 %v2704, 1.0
        %v2961 = vadd.f32 %v2705, 1.0
        %v2962 = vadd.f32 %v2706, 1.0
        %v2963 = vadd.f32 %v2707, 1.0
        %v2964 = vadd.f32 %v2708, 1.0
        %v2965 = vadd.f32 %v2709, 1.0
        %v2966 = vadd.f32 %v2710, 1.0
        %v2967 = vadd.f32 %v2711, 1.0
        %v2968 = vadd.f32 %v2712, 1.0
        %v2969 = vadd.f32 %v2713, 1.0
        %v2970 = vadd.f32 %v2714, 1.0
        %v2971 = vadd.f32 %v2715, 1.0
        %v2972 = vadd.f32 %v2716, 1.0
        %v2973 = vadd.f32 %v2717, 1.0
        %v2974 = vadd.f32 %v2718, 1.0
        %v2975 = vadd.f32 %v2719, 1.0
        %v2976 = vadd.f32 %v2720, 1.0
        %v2977 = vadd.f32 %v2721, 1.0
        %v2978 = vadd.f32 %v2722, 1.0
        %v2979 = vadd.f32 %v2723, 1.0
        %v2980 = vadd.f32 %v2724, 1.0
        %v2981 = vadd.f32 %v2725, 1.0
        %v2982 = vadd.f32 %v2726, 1.0
        %v2983 = vadd.f32 %v2727, 1.0
        %v2984 = vadd.f32 %v2728, 1.0
        %v2985 = vadd.f32 %v2729, 1.0
        %v2986 = vadd.f32 %v2730, 1.0
        %v2987 = vadd.f32 %v2731, 1.0
        %v2988 = vadd.f32 %v2732, 1.0
        %v2989 = vadd.f32 %v2733, 1.0
        %v2990 = vadd.f32 %v2734, 1.0
        %v2991 = vadd.f32 %v2735, 1.0
        %v2992 = vadd.f32 %v2736, 1.0
        %v2993 = vadd.f32 %v2737, 1.0
        %v2994 = vadd.f32 %v2738, 1.0
        %v2995 = vadd.f32 %v2739, 1.0
        %v2996 = vadd.f32 %v2740, 1.0
        %v2997 = vadd.f32 %v2741, 1.0
        %v2998 = vadd.f32 %v2742, 1.0
        %v2999 = vadd.f32 %v2743, 1.0
        %v3000 = vadd.f32 %v2744, 1.0
        %v3001 = vadd.f32 %v2745, 1.0
        %v3002 = vadd.f32 %v2746, 1.0
        %v3003 = vadd.f32 %v2747, 1.0
        %v3004 = vadd.f32 %v2748, 1.0
        %v3005 = vadd.f32 %v2749, 1.0
        %v3006 = vadd.f32 %v2750, 1.0
        %v3007 = vadd.f32 %v2751, 1.0
        %v3008 = vadd.f32 %v2752, 1.0
        %v3009 = vadd.f32 %v2753, 1.0
        %v3010 = vadd.f32 %v2754, 1.0
        %v3011 = vadd.f32 %v2755, 1.0
        %v3012 = vadd.f32 %v2756, 1.0
        %v3013 = vadd.f32 %v2757, 1.0
        %v3014 = vadd.f32 %v2758, 1.0
        %v3015 = vadd.f32 %v2759, 1.0
        %v3016 = vadd.f32 %v2760, 1.0
        %v3017 = vadd.f32 %v2761, 1.0
        %v3018 = vadd.f32 %v2762, 1.0
        %v3019 = vadd.f32 %v2763, 1.0
        %v3020 = vadd.f32 %v2764, 1.0
        %v3021 = vadd.f32 %v2765, 1.0
        %v3022 = vadd.f32 %v2766, 1.0
        %v3023 = vadd.f32 %v2767, 1.0
        %v3024 = vadd.f32 %v2768, 1.0
        %v3025 = vadd.f32 %v2769, 1.0
        %v3026 = vadd.f32 %v2770, 1.0
        %v3027 = vadd.f32 %v2771, 1.0
        %v3028 = vadd.f32 %v2772, 1.0
        %v3029 = vadd.f32 %v2773, 1.0
        %v3030 = vadd.f32 %v2774, 1.0
        %v3031 = vadd.f32 %v2775, 1.0
        %v3032 = vadd.f32 %v2776, 1.0
        %v3033 = vadd.f32 %v2777, 1.0
        %v3034 = vadd.f32 %v2778, 1.0
        %v3035 = vadd.f32 %v2779, 1.0
        %v3036 = vadd.f32 %v2780, 1.0
        %v3037 = vadd.f32 %v2781, 1.0
        %v3038 = vadd.f32 %v2782, 1.0
        %v3039 = vadd.f32 %v2783, 1.0
        %v3040 = vadd.f32 %v2784, 1.0
        %v3041 = vadd.f32 %v2785, 1.0
        %v3042 = vadd.f32 %v2786, 1.0
        %v3043 = vadd.f32 %v2787, 1.0
        %v3044 = vadd.f32 %v2788, 1.0
        %v3045 = vadd.f32 %v2789, 1.0
        %v3046 = vadd.f32 %v2790, 1.0
        %v3047 = vadd.f32 %v2791, 1.0
        %v3048 = vadd.f32 %v2792, 1.0
        %v3049 = vadd.f32 %v2793, 1.0
        %v3050 = vadd.f32 %v2794, 1.0
        %v3051 = vadd.f32 %v2795, 1.0
        %v3052 = vadd.f32 %v2796, 1.0
        %v3053 = vadd.f32 %v2797, 1.0
        %v3054 = vadd.f32 %v2798, 1.0
        %v3055 = vadd.f32 %v2799, 1.0
        %v3056 = vadd.f32 %v2800, 1.0
        %v3057 = vadd.f32 %v2801, 1.0
        %v3058 = vadd.f32 %v2802, 1.0
        %v3059 = vadd.f32 %v2803, 1.0
        %v3060 = vadd.f32 %v2804, 1.0
        %v3061 = vadd.f32 %v2805, 1.0
        %v3062 = vadd.f32 %v2806, 1.0
        %v3063 = vadd.f32 %v2807, 1.0
        %v3064 = vadd.f32 %v2808, 1.0
        %v3065 = vadd.f32 %v2809, 1.0
        %v3066 = vadd.f32 %v2810, 1.0
        %v3067 = vadd.f32 %v2811, 1.0
        %v3068 = vadd.f32 %v2812, 1.0
        %v3069 = vadd.f32 %v2813, 1.0
        %v3070 = vadd.f32 %v2814, 1.0
        %v3071 = vadd.f32 %v2815, 1.0
        %v3072 = vadd.f32 %v2816, 1.0
        %v3073 = vadd.f32 %v2817, 1.0
        %v3074 = vadd.f32 %v2818, 1.0
        %v3075 = vadd.f32 %v2819, 1.0
        %v3076 = vadd.f32 %v2820, 1.0
        %v3077 = vadd.f32 %v2821, 1.0
        %v3078 = vadd.f32 %v2822, 1.0
        %v3079 = vadd.f32 %v2823, 1.0
        %v3080 = vadd.f32 %v2824, 1.0
        %v3081 = vadd.f32 %v2825, 1.0
        %v3082 = vadd.f32 %v2826, 1.0
        %v3083 = vadd.f32 %v2827, 1.0
        %v3084 = vadd.f32 %v2828, 1.0
        %v3085 = vadd.f32 %v2829, 1.0
        %v3086 = vadd.f32 %v2830, 1.0
        %v3087 = vadd.f32 %v2831, 1.0
        %v3088 = vadd.f32 %v2832, 1.0
        %v3089 = vadd.f32 %v2833, 1.0
        %v3090 = vadd.f32 %v2834, 1.0
        %v3091 = vadd.f32 %v2835, 1.0
        %v3092 = vadd.f32 %v2836, 1.0
        %v3093 = vadd.f32 %v2837, 1.0
        %v3094 = vadd.f32 %v2838, 1.0
        %v3095 = vadd.f32 %v2839, 1.0
        %v3096 = vadd.f32 %v2840, 1.0
        %v3097 = vadd.f32 %v2841, 1.0
        %v3098 = vadd.f32 %v2842, 1.0
        %v3099 = vadd.f32 %v2843, 1.0
        %v3100 = vadd.f32 %v2844, 1.0
        %v3101 = vadd.f32 %v2845, 1.0
        %v3102 = vadd.f32 %v2846, 1.0
        %v3103 = vadd.f32 %v2847, 1.0
        %v3104 = vadd.f32 %v2848, 1.0
        %v3105 = vadd.f32 %v2849, 1.0
        %v3106 = vadd.f32 %v2850, 1.0
        %v3107 = vadd.f32 %v2851, 1.0
        %v3108 = vadd.f32 %v2852, 1.0
        %v3109 = vadd.f32 %v2853, 1.0
        %v3110 = vadd.f32 %v2854, 1.0
        %v3111 = vadd.f32 %v2855, 1.0
        %v3112 = vadd.f32 %v2856, 1.0
        %v3113 = vadd.f32 %v2857, 1.0
        %v3114 = vadd.f32 %v2858, 1.0
        %v3115 = vadd.f32 %v2859, 1.0
        %v3116 = vadd.f32 %v2860, 1.0
        %v3117 = vadd.f32 %v2861, 1.0
        %v3118 = vadd.f32 %v2862, 1.0
        %v3119 = vadd.f32 %v2863, 1.0
        %v3120 = vadd.f32 %v2864, 1.0
        %v3121 = vadd.f32 %v2865, 1.0
        %v3122 = vadd.f32 %v2866, 1.0
        %v3123 = vadd.f32 %v2867, 1.0
        %v3124 = vadd.f32 %v2868, 1.0
        %v3125 = vadd.f32 %v2869, 1.0
        %v3126 = vadd.f32 %v2870, 1.0
        %v3127 = vadd.f32 %v2871, 1.0
        %v3128 = vadd.f32 %v2872, 1.0
        %v3129 = vadd.f32 %v2873, 1.0
        %v3130 = vadd.f32 %v2874, 1.0
        %v3131 = vadd.f32 %v2875, 1.0
        %v3132 = vadd.f32 %v2876, 1.0
        %v3133 = vadd.f32 %v2877, 1.0
        %v3134 = vadd.f32 %v2878, 1.0
        %v3135 = vadd.f32 %v2879, 1.0
        %v3136 = vadd.f32 %v2880, 1.0
        %v3137 = vadd.f32 %v2881, 1.0
        %v3138 = vadd.f32 %v2882, 1.0
        %v3139 = vadd.f32 %v2883, 1.0
        %v3140 = vadd.f32 %v2884, 1.0
        %v3141 = vadd.f32 %v2885, 1.0
        %v3142 = vadd.f32 %v2886, 1.0
        %v3143 = vadd.f32 %v2887, 1.0
        %v3144 = vadd.f32 %v2888, 1.0
        %v3145 = vadd.f32 %v2889, 1.0
        %v3146 = vadd.f32 %v2890, 1.0
        %v3147 = vadd.f32 %v2891, 1.0
        %v3148 = vadd.f32 %v2892, 1.0
        %v3149 = vadd.f32 %v2893, 1.0
        %v3150 = vadd.f32 %v2894, 1.0
        %v3151 = vadd.f32 %v2895, 1.0
        %v3152 = vadd.f32 %v2896, 1.0
        %v3153 = vadd.f32 %v2897, 1.0
        %v3154 = vadd.f32 %v2898, 1.0
        %v3155 = vadd.f32 %v2899, 1.0
        %v3156 = vadd.f32 %v2900, 1.0
        %v3157 = vadd.f32 %v2901, 1.0
        %v3158 = vadd.f32 %v2902, 1.0
        %v3159 = vadd.f32 %v2903, 1.0
        %v3160 = vadd.f32 %v2904, 1.0
        %v3161 = vadd.f32 %v2905, 1.0
        %v3162 = vadd.f32 %v2906, 1.0
        %v3163 = vadd.f32 %v2907, 1.0
        %v3164 = vadd.f32 %v2908, 1.0
        %v3165 = vadd.f32 %v2909, 1.0
        %v3166 = vadd.f32 %v2910, 1.0
        %v3167 = vadd.f32 %v2911, 1.0
        %v3168 = vadd.f32 %v2912, 1.0
        %v3169 = vadd.f32 %v2913, 1.0
        %v3170 = vadd.f32 %v2914, 1.0
        %v3171 = vadd.f32 %v2915, 1.0
        %v3172 = vadd.f32 %v2916, 1.0
        %v3173 = vadd.f32 %v2917, 1.0
        %v3174 = vadd.f32 %v2918, 1.0
        %v3175 = vadd.f32 %v2919, 1.0
        %v3176 = vadd.f32 %v2920, 1.0
        %v3177 = vadd.f32 %v2921, 1.0
        %v3178 = vadd.f32 %v2922, 1.0
        %v3179 = vadd.f32 %v2923, 1.0
        %v3180 = vadd.f32 %v2924, 1.0
        %v3181 = vadd.f32 %v2925, 1.0
        %v3182 = vadd.f32 %v2926, 1.0
        %v3183 = vadd.f32 %v2927, 1.0
        %v3184 = vadd.f32 %v2928, 1.0
        %v3185 = vadd.f32 %v2929, 1.0
        %v3186 = vadd.f32 %v2930, 1.0
        %v3187 = vadd.f32 %v2931, 1.0
        %v3188 = vadd.f32 %v2932, 1.0
        %v3189 = vadd.f32 %v2933, 1.0
        %v3190 = vadd.f32 %v2934, 1.0
        %v3191 = vadd.f32 %v2935, 1.0
        %v3192 = vadd.f32 %v2936, 1.0
        %v3193 = vadd.f32 %v2937, 1.0
        %v3194 = vadd.f32 %v2938, 1.0
        %v3195 = vmul.f32 %v2939, 0.5
        %v3196 = vmul.f32 %v2940, 0.5
        %v3197 = vmul.f32 %v2941, 0.5
        %v3198 = vmul.f32 %v2942, 0.5
        %v3199 = vmul.f32 %v2943, 0.5
        %v3200 = vmul.f32 %v2944, 0.5
        %v3201 = vmul.f32 %v2945, 0.5
        %v3202 = vmul.f32 %v2946, 0.5
        %v3203 = vmul.f32 %v2947, 0.5
        %v3204 = vmul.f32 %v2948, 0.5
        %v3205 = vmul.f32 %v2949, 0.5
        %v3206 = vmul.f32 %v2950, 0.5
        %v3207 = vmul.f32 %v2951, 0.5
        %v3208 = vmul.f32 %v2952, 0.5
        %v3209 = vmul.f32 %v2953, 0.5
        %v3210 = vmul.f32 %v2954, 0.5
        %v3211 = vmul.f32 %v2955, 0.5
        %v3212 = vmul.f32 %v2956, 0.5
        %v3213 = vmul.f32 %v2957, 0.5
        %v3214 = vmul.f32 %v2958, 0.5
        %v3215 = vmul.f32 %v2959, 0.5
        %v3216 = vmul.f32 %v2960, 0.5
        %v3217 = vmul.f32 %v2961, 0.5
        %v3218 = vmul.f32 %v2962, 0.5
        %v3219 = vmul.f32 %v2963, 0.5
        %v3220 = vmul.f32 %v2964, 0.5
        %v3221 = vmul.f32 %v2965, 0.5
        %v3222 = vmul.f32 %v2966, 0.5
        %v3223 = vmul.f32 %v2967, 0.5
        %v3224 = vmul.f32 %v2968, 0.5
        %v3225 = vmul.f32 %v2969, 0.5
        %v3226 = vmul.f32 %v2970, 0.5
        %v3227 = vmul.f32 %v2971, 0.5
        %v3228 = vmul.f32 %v2972, 0.5
        %v3229 = vmul.f32 %v2973, 0.5
        %v3230 = vmul.f32 %v2974, 0.5
        %v3231 = vmul.f32 %v2975, 0.5
        %v3232 = vmul.f32 %v2976, 0.5
        %v3233 = vmul.f32 %v2977, 0.5
        %v3234 = vmul.f32 %v2978, 0.5
        %v3235 = vmul.f32 %v2979, 0.5
        %v3236 = vmul.f32 %v2980, 0.5
        %v3237 = vmul.f32 %v2981, 0.5
        %v3238 = vmul.f32 %v2982, 0.5
        %v3239 = vmul.f32 %v2983, 0.5
        %v3240 = vmul.f32 %v2984, 0.5
        %v3241 = vmul.f32 %v2985, 0.5
        %v3242 = vmul.f32 %v2986, 0.5
        %v3243 = vmul.f32 %v2987, 0.5
        %v3244 = vmul.f32 %v2988, 0.5
        %v3245 = vmul.f32 %v2989, 0.5
        %v3246 = vmul.f32 %v2990, 0.5
        %v3247 = vmul.f32 %v2991, 0.5
        %v3248 = vmul.f32 %v2992, 0.5
        %v3249 = vmul.f32 %v2993, 0.5
        %v3250 = vmul.f32 %v2994, 0.5
        %v3251 = vmul.f32 %v2995, 0.5
        %v3252 = vmul.f32 %v2996, 0.5
        %v3253 = vmul.f32 %v2997, 0.5
        %v3254 = vmul.f32 %v2998, 0.5
        %v3255 = vmul.f32 %v2999, 0.5
        %v3256 = vmul.f32 %v3000, 0.5
        %v3257 = vmul.f32 %v3001, 0.5
        %v3258 = vmul.f32 %v3002, 0.5
        %v3259 = vmul.f32 %v3003, 0.5
        %v3260 = vmul.f32 %v3004, 0.5
        %v3261 = vmul.f32 %v3005, 0.5
        %v3262 = vmul.f32 %v3006, 0.5
        %v3263 = vmul.f32 %v3007, 0.5
        %v3264 = vmul.f32 %v3008, 0.5
        %v3265 = vmul.f32 %v3009, 0.5
        %v3266 = vmul.f32 %v3010, 0.5
        %v3267 = vmul.f32 %v3011, 0.5
        %v3268 = vmul.f32 %v3012, 0.5
        %v3269 = vmul.f32 %v3013, 0.5
        %v3270 = vmul.f32 %v3014, 0.5
        %v3271 = vmul.f32 %v3015, 0.5
        %v3272 = vmul.f32 %v3016, 0.5
        %v3273 = vmul.f32 %v3017, 0.5
        %v3274 = vmul.f32 %v3018, 0.5
        %v3275 = vmul.f32 %v3019, 0.5
        %v3276 = vmul.f32 %v3020, 0.5
        %v3277 = vmul.f32 %v3021, 0.5
        %v3278 = vmul.f32 %v3022, 0.5
        %v3279 = vmul.f32 %v3023, 0.5
        %v3280 = vmul.f32 %v3024, 0.5
        %v3281 = vmul.f32 %v3025, 0.5
        %v3282 = vmul.f32 %v3026, 0.5
        %v3283 = vmul.f32 %v3027, 0.5
        %v3284 = vmul.f32 %v3028, 0.5
        %v3285 = vmul.f32 %v3029, 0.5
        %v3286 = vmul.f32 %v3030, 0.5
        %v3287 = vmul.f32 %v3031, 0.5
        %v3288 = vmul.f32 %v3032, 0.5
        %v3289 = vmul.f32 %v3033, 0.5
        %v3290 = vmul.f32 %v3034, 0.5
        %v3291 = vmul.f32 %v3035, 0.5
        %v3292 = vmul.f32 %v3036, 0.5
        %v3293 = vmul.f32 %v3037, 0.5
        %v3294 = vmul.f32 %v3038, 0.5
        %v3295 = vmul.f32 %v3039, 0.5
        %v3296 = vmul.f32 %v3040, 0.5
        %v3297 = vmul.f32 %v3041, 0.5
        %v3298 = vmul.f32 %v3042, 0.5
        %v3299 = vmul.f32 %v3043, 0.5
        %v3300 = vmul.f32 %v3044, 0.5
        %v3301 = vmul.f32 %v3045, 0.5
        %v3302 = vmul.f32 %v3046, 0.5
        %v3303 = vmul.f32 %v3047, 0.5
        %v3304 = vmul.f32 %v3048, 0.5
        %v3305 = vmul.f32 %v3049, 0.5
        %v3306 = vmul.f32 %v3050, 0.5
        %v3307 = vmul.f32 %v3051, 0.5
        %v3308 = vmul.f32 %v3052, 0.5
        %v3309 = vmul.f32 %v3053, 0.5
        %v3310 = vmul.f32 %v3054, 0.5
        %v3311 = vmul.f32 %v3055, 0.5
        %v3312 = vmul.f32 %v3056, 0.5
        %v3313 = vmul.f32 %v3057, 0.5
        %v3314 = vmul.f32 %v3058, 0.5
        %v3315 = vmul.f32 %v3059, 0.5
        %v3316 = vmul.f32 %v3060, 0.5
        %v3317 = vmul.f32 %v3061, 0.5
        %v3318 = vmul.f32 %v3062, 0.5
        %v3319 = vmul.f32 %v3063, 0.5
        %v3320 = vmul.f32 %v3064, 0.5
        %v3321 = vmul.f32 %v3065, 0.5
        %v3322 = vmul.f32 %v3066, 0.5
        %v3323 = vmul.f32 %v3067, 0.5
        %v3324 = vmul.f32 %v3068, 0.5
        %v3325 = vmul.f32 %v3069, 0.5
        %v3326 = vmul.f32 %v3070, 0.5
        %v3327 = vmul.f32 %v3071, 0.5
        %v3328 = vmul.f32 %v3072, 0.5
        %v3329 = vmul.f32 %v3073, 0.5
        %v3330 = vmul.f32 %v3074, 0.5
        %v3331 = vmul.f32 %v3075, 0.5
        %v3332 = vmul.f32 %v3076, 0.5
        %v3333 = vmul.f32 %v3077, 0.5
        %v3334 = vmul.f32 %v3078, 0.5
        %v3335 = vmul.f32 %v3079, 0.5
        %v3336 = vmul.f32 %v3080, 0.5
        %v3337 = vmul.f32 %v3081, 0.5
        %v3338 = vmul.f32 %v3082, 0.5
        %v3339 = vmul.f32 %v3083, 0.5
        %v3340 = vmul.f32 %v3084, 0.5
        %v3341 = vmul.f32 %v3085, 0.5
        %v3342 = vmul.f32 %v3086, 0.5
        %v3343 = vmul.f32 %v3087, 0.5
        %v3344 = vmul.f32 %v3088, 0.5
        %v3345 = vmul.f32 %v3089, 0.5
        %v3346 = vmul.f32 %v3090, 0.5
        %v3347 = vmul.f32 %v3091, 0.5
        %v3348 = vmul.f32 %v3092, 0.5
        %v3349 = vmul.f32 %v3093, 0.5
        %v3350 = vmul.f32 %v3094, 0.5
        %v3351 = vmul.f32 %v3095, 0.5
        %v3352 = vmul.f32 %v3096, 0.5
        %v3353 = vmul.f32 %v3097, 0.5
        %v3354 = vmul.f32 %v3098, 0.5
        %v3355 = vmul.f32 %v3099, 0.5
        %v3356 = vmul.f32 %v3100, 0.5
        %v3357 = vmul.f32 %v3101, 0.5
        %v3358 = vmul.f32 %v3102, 0.5
        %v3359 = vmul.f32 %v3103, 0.5
        %v3360 = vmul.f32 %v3104, 0.5
        %v3361 = vmul.f32 %v3105, 0.5
        %v3362 = vmul.f32 %v3106, 0.5
        %v3363 = vmul.f32 %v3107, 0.5
        %v3364 = vmul.f32 %v3108, 0.5
        %v3365 = vmul.f32 %v3109, 0.5
        %v3366 = vmul.f32 %v3110, 0.5
        %v3367 = vmul.f32 %v3111, 0.5
        %v3368 = vmul.f32 %v3112, 0.5
        %v3369 = vmul.f32 %v3113, 0.5
        %v3370 = vmul.f32 %v3114, 0.5
        %v3371 = vmul.f32 %v3115, 0.5
        %v3372 = vmul.f32 %v3116, 0.5
        %v3373 = vmul.f32 %v3117, 0.5
        %v3374 = vmul.f32 %v3118, 0.5
        %v3375 = vmul.f32 %v3119, 0.5
        %v3376 = vmul.f32 %v3120, 0.5
        %v3377 = vmul.f32 %v3121, 0.5
        %v3378 = vmul.f32 %v3122, 0.5
        %v3379 = vmul.f32 %v3123, 0.5
        %v3380 = vmul.f32 %v3124, 0.5
        %v3381 = vmul.f32 %v3125, 0.5
        %v3382 = vmul.f32 %v3126, 0.5
        %v3383 = vmul.f32 %v3127, 0.5
        %v3384 = vmul.f32 %v3128, 0.5
        %v3385 = vmul.f32 %v3129, 0.5
        %v3386 = vmul.f32 %v3130, 0.5
        %v3387 = vmul.f32 %v3131, 0.5
        %v3388 = vmul.f32 %v3132, 0.5
        %v3389 = vmul.f32 %v3133, 0.5
        %v3390 = vmul.f32 %v3134, 0.5
        %v3391 = vmul.f32 %v3135, 0.5
        %v3392 = vmul.f32 %v3136, 0.5
        %v3393 = vmul.f32 %v3137, 0.5
        %v3394 = vmul.f32 %v3138, 0.5
        %v3395 = vmul.f32 %v3139, 0.5
        %v3396 = vmul.f32 %v3140, 0.5
        %v3397 = vmul.f32 %v3141, 0.5
        %v3398 = vmul.f32 %v3142, 0.5
        %v3399 = vmul.f32 %v3143, 0.5
        %v3400 = vmul.f32 %v3144, 0.5
        %v3401 = vmul.f32 %v3145, 0.5
        %v3402 = vmul.f32 %v3146, 0.5
        %v3403 = vmul.f32 %v3147, 0.5
        %v3404 = vmul.f32 %v3148, 0.5
        %v3405 = vmul.f32 %v3149, 0.5
        %v3406 = vmul.f32 %v3150, 0.5
        %v3407 = vmul.f32 %v3151, 0.5
        %v3408 = vmul.f32 %v3152, 0.5
        %v3409 = vmul.f32 %v3153, 0.5
        %v3410 = vmul.f32 %v3154, 0.5
        %v3411 = vmul.f32 %v3155, 0.5
        %v3412 = vmul.f32 %v3156, 0.5
        %v3413 = vmul.f32 %v3157, 0.5
        %v3414 = vmul.f32 %v3158, 0.5
        %v3415 = vmul.f32 %v3159, 0.5
        %v3416 = vmul.f32 %v3160, 0.5
        %v3417 = vmul.f32 %v3161, 0.5
        %v3418 = vmul.f32 %v3162, 0.5
        %v3419 = vmul.f32 %v3163, 0.5
        %v3420 = vmul.f32 %v3164, 0.5
        %v3421 = vmul.f32 %v3165, 0.5
        %v3422 = vmul.f32 %v3166, 0.5
        %v3423 = vmul.f32 %v3167, 0.5
        %v3424 = vmul.f32 %v3168, 0.5
        %v3425 = vmul.f32 %v3169, 0.5
        %v3426 = vmul.f32 %v3170, 0.5
        %v3427 = vmul.f32 %v3171, 0.5
        %v3428 = vmul.f32 %v3172, 0.5
        %v3429 = vmul.f32 %v3173, 0.5
        %v3430 = vmul.f32 %v3174, 0.5
        %v3431 = vmul.f32 %v3175, 0.5
        %v3432 = vmul.f32 %v3176, 0.5
        %v3433 = vmul.f32 %v3177, 0.5
        %v3434 = vmul.f32 %v3178, 0.5
        %v3435 = vmul.f32 %v3179, 0.5
        %v3436 = vmul.f32 %v3180, 0.5
        %v3437 = vmul.f32 %v3181, 0.5
        %v3438 = vmul.f32 %v3182, 0.5
        %v3439 = vmul.f32 %v3183, 0.5
        %v3440 = vmul.f32 %v3184, 0.5
        %v3441 = vmul.f32 %v3185, 0.5
        %v3442 = vmul.f32 %v3186, 0.5
        %v3443 = vmul.f32 %v3187, 0.5
        %v3444 = vmul.f32 %v3188, 0.5
        %v3445 = vmul.f32 %v3189, 0.5
        %v3446 = vmul.f32 %v3190, 0.5
        %v3447 = vmul.f32 %v3191, 0.5
        %v3448 = vmul.f32 %v3192, 0.5
        %v3449 = vmul.f32 %v3193, 0.5
        %v3450 = vmul.f32 %v3194, 0.5
        %v3451 = vmul.f32 %v732, %v3195
        %v3452 = vmul.f32 %v734, %v3196
        %v3453 = vmul.f32 %v1085, %v3197
        %v3454 = vmul.f32 %v1087, %v3198
        %v3455 = vmul.f32 %v736, %v3199
        %v3456 = vmul.f32 %v738, %v3200
        %v3457 = vmul.f32 %v1089, %v3201
        %v3458 = vmul.f32 %v1091, %v3202
        %v3459 = vmul.f32 %v742, %v3203
        %v3460 = vmul.f32 %v744, %v3204
        %v3461 = vmul.f32 %v1095, %v3205
        %v3462 = vmul.f32 %v1097, %v3206
        %v3463 = vmul.f32 %v746, %v3207
        %v3464 = vmul.f32 %v748, %v3208
        %v3465 = vmul.f32 %v1099, %v3209
        %v3466 = vmul.f32 %v1101, %v3210
        %v3467 = vmul.f32 %v752, %v3211
        %v3468 = vmul.f32 %v754, %v3212
        %v3469 = vmul.f32 %v1105, %v3213
        %v3470 = vmul.f32 %v1107, %v3214
        %v3471 = vmul.f32 %v756, %v3215
        %v3472 = vmul.f32 %v758, %v3216
        %v3473 = vmul.f32 %v1109, %v3217
        %v3474 = vmul.f32 %v1111, %v3218
        %v3475 = vmul.f32 %v762, %v3219
        %v3476 = vmul.f32 %v764, %v3220
        %v3477 = vmul.f32 %v1115, %v3221
        %v3478 = vmul.f32 %v1117, %v3222
        %v3479 = vmul.f32 %v766, %v3223
        %v3480 = vmul.f32 %v768, %v3224
        %v3481 = vmul.f32 %v1119, %v3225
        %v3482 = vmul.f32 %v1121, %v3226
        %v3483 = vmul.f32 %v772, %v3227
        %v3484 = vmul.f32 %v774, %v3228
        %v3485 = vmul.f32 %v1125, %v3229
        %v3486 = vmul.f32 %v1127, %v3230
        %v3487 = vmul.f32 %v776, %v3231
        %v3488 = vmul.f32 %v778, %v3232
        %v3489 = vmul.f32 %v1129, %v3233
        %v3490 = vmul.f32 %v1131, %v3234
        %v3491 = vmul.f32 %v782, %v3235
        %v3492 = vmul.f32 %v784, %v3236
        %v3493 = vmul.f32 %v1135, %v3237
        %v3494 = vmul.f32 %v1137, %v3238
        %v3495 = vmul.f32 %v786, %v3239
        %v3496 = vmul.f32 %v788, %v3240
        %v3497 = vmul.f32 %v1139, %v3241
        %v3498 = vmul.f32 %v1141, %v3242
        %v3499 = vmul.f32 %v792, %v3243
        %v3500 = vmul.f32 %v794, %v3244
        %v3501 = vmul.f32 %v1145, %v3245
        %v3502 = vmul.f32 %v1147, %v3246
        %v3503 = vmul.f32 %v796, %v3247
        %v3504 = vmul.f32 %v798, %v3248
        %v3505 = vmul.f32 %v1149, %v3249
        %v3506 = vmul.f32 %v1151, %v3250
        %v3507 = vmul.f32 %v802, %v3251
        %v3508 = vmul.f32 %v804, %v3252
        %v3509 = vmul.f32 %v1155, %v3253
        %v3510 = vmul.f32 %v1157, %v3254
        %v3511 = vmul.f32 %v806, %v3255
        %v3512 = vmul.f32 %v808, %v3256
        %v3513 = vmul.f32 %v1159, %v3257
        %v3514 = vmul.f32 %v1161, %v3258
        %v3515 = vmul.f32 %v812, %v3259
        %v3516 = vmul.f32 %v814, %v3260
        %v3517 = vmul.f32 %v1165, %v3261
        %v3518 = vmul.f32 %v1167, %v3262
        %v3519 = vmul.f32 %v816, %v3263
        %v3520 = vmul.f32 %v818, %v3264
        %v3521 = vmul.f32 %v1169, %v3265
        %v3522 = vmul.f32 %v1171, %v3266
        %v3523 = vmul.f32 %v822, %v3267
        %v3524 = vmul.f32 %v824, %v3268
        %v3525 = vmul.f32 %v1175, %v3269
        %v3526 = vmul.f32 %v1177, %v3270
        %v3527 = vmul.f32 %v826, %v3271
        %v3528 = vmul.f32 %v828, %v3272
        %v3529 = vmul.f32 %v1179, %v3273
        %v3530 = vmul.f32 %v1181, %v3274
        %v3531 = vmul.f32 %v832, %v3275
        %v3532 = vmul.f32 %v834, %v3276
        %v3533 = vmul.f32 %v1185, %v3277
        %v3534 = vmul.f32 %v1187, %v3278
        %v3535 = vmul.f32 %v836, %v3279
        %v3536 = vmul.f32 %v838, %v3280
        %v3537 = vmul.f32 %v1189, %v3281
        %v3538 = vmul.f32 %v1191, %v3282
        %v3539 = vmul.f32 %v842, %v3283
        %v3540 = vmul.f32 %v844, %v3284
        %v3541 = vmul.f32 %v1195, %v3285
        %v3542 = vmul.f32 %v1197, %v3286
        %v3543 = vmul.f32 %v846, %v3287
        %v3544 = vmul.f32 %v848, %v3288
        %v3545 = vmul.f32 %v1199, %v3289
        %v3546 = vmul.f32 %v1201, %v3290
        %v3547 = vmul.f32 %v852, %v3291
        %v3548 = vmul.f32 %v854, %v3292
        %v3549 = vmul.f32 %v1205, %v3293
        %v3550 = vmul.f32 %v1207, %v3294
        %v3551 = vmul.f32 %v856, %v3295
        %v3552 = vmul.f32 %v858, %v3296
        %v3553 = vmul.f32 %v1209, %v3297
        %v3554 = vmul.f32 %v1211, %v3298
        %v3555 = vmul.f32 %v862, %v3299
        %v3556 = vmul.f32 %v864, %v3300
        %v3557 = vmul.f32 %v1215, %v3301
        %v3558 = vmul.f32 %v1217, %v3302
        %v3559 = vmul.f32 %v866, %v3303
        %v3560 = vmul.f32 %v868, %v3304
        %v3561 = vmul.f32 %v1219, %v3305
        %v3562 = vmul.f32 %v1221, %v3306
        %v3563 = vmul.f32 %v872, %v3307
        %v3564 = vmul.f32 %v874, %v3308
        %v3565 = vmul.f32 %v1225, %v3309
        %v3566 = vmul.f32 %v1227, %v3310
        %v3567 = vmul.f32 %v876, %v3311
        %v3568 = vmul.f32 %v878, %v3312
        %v3569 = vmul.f32 %v1229, %v3313
        %v3570 = vmul.f32 %v1231, %v3314
        %v3571 = vmul.f32 %v882, %v3315
        %v3572 = vmul.f32 %v884, %v3316
        %v3573 = vmul.f32 %v1235, %v3317
        %v3574 = vmul.f32 %v1237, %v3318
        %v3575 = vmul.f32 %v886, %v3319
        %v3576 = vmul.f32 %v888, %v3320
        %v3577 = vmul.f32 %v1239, %v3321
        %v3578 = vmul.f32 %v1241, %v3322
        %v3579 = vmul.f32 %v892, %v3323
        %v3580 = vmul.f32 %v894, %v3324
        %v3581 = vmul.f32 %v1245, %v3325
        %v3582 = vmul.f32 %v1247, %v3326
        %v3583 = vmul.f32 %v896, %v3327
        %v3584 = vmul.f32 %v898, %v3328
        %v3585 = vmul.f32 %v1249, %v3329
        %v3586 = vmul.f32 %v1251, %v3330
        %v3587 = vmul.f32 %v902, %v3331
        %v3588 = vmul.f32 %v904, %v3332
        %v3589 = vmul.f32 %v1255, %v3333
        %v3590 = vmul.f32 %v1257, %v3334
        %v3591 = vmul.f32 %v906, %v3335
        %v3592 = vmul.f32 %v908, %v3336
        %v3593 = vmul.f32 %v1259, %v3337
        %v3594 = vmul.f32 %v1261, %v3338
        %v3595 = vmul.f32 %v912, %v3339
        %v3596 = vmul.f32 %v914, %v3340
        %v3597 = vmul.f32 %v1265, %v3341
        %v3598 = vmul.f32 %v1267, %v3342
        %v3599 = vmul.f32 %v916, %v3343
        %v3600 = vmul.f32 %v918, %v3344
        %v3601 = vmul.f32 %v1269, %v3345
        %v3602 = vmul.f32 %v1271, %v3346
        %v3603 = vmul.f32 %v922, %v3347
        %v3604 = vmul.f32 %v924, %v3348
        %v3605 = vmul.f32 %v1275, %v3349
        %v3606 = vmul.f32 %v1277, %v3350
        %v3607 = vmul.f32 %v926, %v3351
        %v3608 = vmul.f32 %v928, %v3352
        %v3609 = vmul.f32 %v1279, %v3353
        %v3610 = vmul.f32 %v1281, %v3354
        %v3611 = vmul.f32 %v932, %v3355
        %v3612 = vmul.f32 %v934, %v3356
        %v3613 = vmul.f32 %v1285, %v3357
        %v3614 = vmul.f32 %v1287, %v3358
        %v3615 = vmul.f32 %v936, %v3359
        %v3616 = vmul.f32 %v938, %v3360
        %v3617 = vmul.f32 %v1289, %v3361
        %v3618 = vmul.f32 %v1291, %v3362
        %v3619 = vmul.f32 %v942, %v3363
        %v3620 = vmul.f32 %v944, %v3364
        %v3621 = vmul.f32 %v1295, %v3365
        %v3622 = vmul.f32 %v1297, %v3366
        %v3623 = vmul.f32 %v946, %v3367
        %v3624 = vmul.f32 %v948, %v3368
        %v3625 = vmul.f32 %v1299, %v3369
        %v3626 = vmul.f32 %v1301, %v3370
        %v3627 = vmul.f32 %v952, %v3371
        %v3628 = vmul.f32 %v954, %v3372
        %v3629 = vmul.f32 %v1305, %v3373
        %v3630 = vmul.f32 %v1307, %v3374
        %v3631 = vmul.f32 %v956, %v3375
        %v3632 = vmul.f32 %v958, %v3376
        %v3633 = vmul.f32 %v1309, %v3377
        %v3634 = vmul.f32 %v1311, %v3378
        %v3635 = vmul.f32 %v962, %v3379
        %v3636 = vmul.f32 %v964, %v3380
        %v3637 = vmul.f32 %v1315, %v3381
        %v3638 = vmul.f32 %v1317, %v3382
        %v3639 = vmul.f32 %v966, %v3383
        %v3640 = vmul.f32 %v968, %v3384
        %v3641 = vmul.f32 %v1319, %v3385
        %v3642 = vmul.f32 %v1321, %v3386
        %v3643 = vmul.f32 %v972, %v3387
        %v3644 = vmul.f32 %v974, %v3388
        %v3645 = vmul.f32 %v1325, %v3389
        %v3646 = vmul.f32 %v1327, %v3390
        %v3647 = vmul.f32 %v976, %v3391
        %v3648 = vmul.f32 %v978, %v3392
        %v3649 = vmul.f32 %v1329, %v3393
        %v3650 = vmul.f32 %v1331, %v3394
        %v3651 = vmul.f32 %v982, %v3395
        %v3652 = vmul.f32 %v984, %v3396
        %v3653 = vmul.f32 %v1335, %v3397
        %v3654 = vmul.f32 %v1337, %v3398
        %v3655 = vmul.f32 %v986, %v3399
        %v3656 = vmul.f32 %v988, %v3400
        %v3657 = vmul.f32 %v1339, %v3401
        %v3658 = vmul.f32 %v1341, %v3402
        %v3659 = vmul.f32 %v992, %v3403
        %v3660 = vmul.f32 %v994, %v3404
        %v3661 = vmul.f32 %v1345, %v3405
        %v3662 = vmul.f32 %v1347, %v3406
        %v3663 = vmul.f32 %v996, %v3407
        %v3664 = vmul.f32 %v998, %v3408
        %v3665 = vmul.f32 %v1349, %v3409
        %v3666 = vmul.f32 %v1351, %v3410
        %v3667 = vmul.f32 %v1002, %v3411
        %v3668 = vmul.f32 %v1004, %v3412
        %v3669 = vmul.f32 %v1355, %v3413
        %v3670 = vmul.f32 %v1357, %v3414
        %v3671 = vmul.f32 %v1006, %v3415
        %v3672 = vmul.f32 %v1008, %v3416
        %v3673 = vmul.f32 %v1359, %v3417
        %v3674 = vmul.f32 %v1361, %v3418
        %v3675 = vmul.f32 %v1012, %v3419
        %v3676 = vmul.f32 %v1014, %v3420
        %v3677 = vmul.f32 %v1365, %v3421
        %v3678 = vmul.f32 %v1367, %v3422
        %v3679 = vmul.f32 %v1016, %v3423
        %v3680 = vmul.f32 %v1018, %v3424
        %v3681 = vmul.f32 %v1369, %v3425
        %v3682 = vmul.f32 %v1371, %v3426
        %v3683 = vmul.f32 %v1022, %v3427
        %v3684 = vmul.f32 %v1024, %v3428
        %v3685 = vmul.f32 %v1375, %v3429
        %v3686 = vmul.f32 %v1377, %v3430
        %v3687 = vmul.f32 %v1026, %v3431
        %v3688 = vmul.f32 %v1028, %v3432
        %v3689 = vmul.f32 %v1379, %v3433
        %v3690 = vmul.f32 %v1381, %v3434
        %v3691 = vmul.f32 %v1032, %v3435
        %v3692 = vmul.f32 %v1034, %v3436
        %v3693 = vmul.f32 %v1385, %v3437
        %v3694 = vmul.f32 %v1387, %v3438
        %v3695 = vmul.f32 %v1036, %v3439
        %v3696 = vmul.f32 %v1038, %v3440
        %v3697 = vmul.f32 %v1389, %v3441
        %v3698 = vmul.f32 %v1391, %v3442
        %v3699 = vmul.f32 %v1042, %v3443
        %v3700 = vmul.f32 %v1044, %v3444
        %v3701 = vmul.f32 %v1395, %v3445
        %v3702 = vmul.f32 %v1397, %v3446
        %v3703 = vmul.f32 %v1046, %v3447
        %v3704 = vmul.f32 %v1048, %v3448
        %v3705 = vmul.f32 %v1399, %v3449
        %v3706 = vmul.f32 %v1401, %v3450
        %v3707 = vpack.c.bf16 %v3455, %v3451
        %v3708 = vpack.c.bf16 %v3456, %v3452
        %v3709 = vpack.c.bf16 %v3457, %v3453
        %v3710 = vpack.c.bf16 %v3458, %v3454
        %v3711 = vpack.c.bf16 %v3463, %v3459
        %v3712 = vpack.c.bf16 %v3464, %v3460
        %v3713 = vpack.c.bf16 %v3465, %v3461
        %v3714 = vpack.c.bf16 %v3466, %v3462
        %v3715 = vpack.c.bf16 %v3471, %v3467
        %v3716 = vpack.c.bf16 %v3472, %v3468
        %v3717 = vpack.c.bf16 %v3473, %v3469
        %v3718 = vpack.c.bf16 %v3474, %v3470
        %v3719 = vpack.c.bf16 %v3479, %v3475
        %v3720 = vpack.c.bf16 %v3480, %v3476
        %v3721 = vpack.c.bf16 %v3481, %v3477
        %v3722 = vpack.c.bf16 %v3482, %v3478
        %v3723 = vpack.c.bf16 %v3487, %v3483
        %v3724 = vpack.c.bf16 %v3488, %v3484
        %v3725 = vpack.c.bf16 %v3489, %v3485
        %v3726 = vpack.c.bf16 %v3490, %v3486
        %v3727 = vpack.c.bf16 %v3495, %v3491
        %v3728 = vpack.c.bf16 %v3496, %v3492
        %v3729 = vpack.c.bf16 %v3497, %v3493
        %v3730 = vpack.c.bf16 %v3498, %v3494
        %v3731 = vpack.c.bf16 %v3503, %v3499
        %v3732 = vpack.c.bf16 %v3504, %v3500
        %v3733 = vpack.c.bf16 %v3505, %v3501
        %v3734 = vpack.c.bf16 %v3506, %v3502
        %v3735 = vpack.c.bf16 %v3511, %v3507
        %v3736 = vpack.c.bf16 %v3512, %v3508
        %v3737 = vpack.c.bf16 %v3513, %v3509
        %v3738 = vpack.c.bf16 %v3514, %v3510
        %v3739 = vpack.c.bf16 %v3519, %v3515
        %v3740 = vpack.c.bf16 %v3520, %v3516
        %v3741 = vpack.c.bf16 %v3521, %v3517
        %v3742 = vpack.c.bf16 %v3522, %v3518
        %v3743 = vpack.c.bf16 %v3527, %v3523
        %v3744 = vpack.c.bf16 %v3528, %v3524
        %v3745 = vpack.c.bf16 %v3529, %v3525
        %v3746 = vpack.c.bf16 %v3530, %v3526
        %v3747 = vpack.c.bf16 %v3535, %v3531
        %v3748 = vpack.c.bf16 %v3536, %v3532
        %v3749 = vpack.c.bf16 %v3537, %v3533
        %v3750 = vpack.c.bf16 %v3538, %v3534
        %v3751 = vpack.c.bf16 %v3543, %v3539
        %v3752 = vpack.c.bf16 %v3544, %v3540
        %v3753 = vpack.c.bf16 %v3545, %v3541
        %v3754 = vpack.c.bf16 %v3546, %v3542
        %v3755 = vpack.c.bf16 %v3551, %v3547
        %v3756 = vpack.c.bf16 %v3552, %v3548
        %v3757 = vpack.c.bf16 %v3553, %v3549
        %v3758 = vpack.c.bf16 %v3554, %v3550
        %v3759 = vpack.c.bf16 %v3559, %v3555
        %v3760 = vpack.c.bf16 %v3560, %v3556
        %v3761 = vpack.c.bf16 %v3561, %v3557
        %v3762 = vpack.c.bf16 %v3562, %v3558
        %v3763 = vpack.c.bf16 %v3567, %v3563
        %v3764 = vpack.c.bf16 %v3568, %v3564
        %v3765 = vpack.c.bf16 %v3569, %v3565
        %v3766 = vpack.c.bf16 %v3570, %v3566
        %v3767 = vpack.c.bf16 %v3575, %v3571
        %v3768 = vpack.c.bf16 %v3576, %v3572
        %v3769 = vpack.c.bf16 %v3577, %v3573
        %v3770 = vpack.c.bf16 %v3578, %v3574
        %v3771 = vpack.c.bf16 %v3583, %v3579
        %v3772 = vpack.c.bf16 %v3584, %v3580
        %v3773 = vpack.c.bf16 %v3585, %v3581
        %v3774 = vpack.c.bf16 %v3586, %v3582
        %v3775 = vpack.c.bf16 %v3591, %v3587
        %v3776 = vpack.c.bf16 %v3592, %v3588
        %v3777 = vpack.c.bf16 %v3593, %v3589
        %v3778 = vpack.c.bf16 %v3594, %v3590
        %v3779 = vpack.c.bf16 %v3599, %v3595
        %v3780 = vpack.c.bf16 %v3600, %v3596
        %v3781 = vpack.c.bf16 %v3601, %v3597
        %v3782 = vpack.c.bf16 %v3602, %v3598
        %v3783 = vpack.c.bf16 %v3607, %v3603
        %v3784 = vpack.c.bf16 %v3608, %v3604
        %v3785 = vpack.c.bf16 %v3609, %v3605
        %v3786 = vpack.c.bf16 %v3610, %v3606
        %v3787 = vpack.c.bf16 %v3615, %v3611
        %v3788 = vpack.c.bf16 %v3616, %v3612
        %v3789 = vpack.c.bf16 %v3617, %v3613
        %v3790 = vpack.c.bf16 %v3618, %v3614
        %v3791 = vpack.c.bf16 %v3623, %v3619
        %v3792 = vpack.c.bf16 %v3624, %v3620
        %v3793 = vpack.c.bf16 %v3625, %v3621
        %v3794 = vpack.c.bf16 %v3626, %v3622
        %v3795 = vpack.c.bf16 %v3631, %v3627
        %v3796 = vpack.c.bf16 %v3632, %v3628
        %v3797 = vpack.c.bf16 %v3633, %v3629
        %v3798 = vpack.c.bf16 %v3634, %v3630
        %v3799 = vpack.c.bf16 %v3639, %v3635
        %v3800 = vpack.c.bf16 %v3640, %v3636
        %v3801 = vpack.c.bf16 %v3641, %v3637
        %v3802 = vpack.c.bf16 %v3642, %v3638
        %v3803 = vpack.c.bf16 %v3647, %v3643
        %v3804 = vpack.c.bf16 %v3648, %v3644
        %v3805 = vpack.c.bf16 %v3649, %v3645
        %v3806 = vpack.c.bf16 %v3650, %v3646
        %v3807 = vpack.c.bf16 %v3655, %v3651
        %v3808 = vpack.c.bf16 %v3656, %v3652
        %v3809 = vpack.c.bf16 %v3657, %v3653
        %v3810 = vpack.c.bf16 %v3658, %v3654
        %v3811 = vpack.c.bf16 %v3663, %v3659
        %v3812 = vpack.c.bf16 %v3664, %v3660
        %v3813 = vpack.c.bf16 %v3665, %v3661
        %v3814 = vpack.c.bf16 %v3666, %v3662
        %v3815 = vpack.c.bf16 %v3671, %v3667
        %v3816 = vpack.c.bf16 %v3672, %v3668
        %v3817 = vpack.c.bf16 %v3673, %v3669
        %v3818 = vpack.c.bf16 %v3674, %v3670
        %v3819 = vpack.c.bf16 %v3679, %v3675
        %v3820 = vpack.c.bf16 %v3680, %v3676
        %v3821 = vpack.c.bf16 %v3681, %v3677
        %v3822 = vpack.c.bf16 %v3682, %v3678
        %v3823 = vpack.c.bf16 %v3687, %v3683
        %v3824 = vpack.c.bf16 %v3688, %v3684
        %v3825 = vpack.c.bf16 %v3689, %v3685
        %v3826 = vpack.c.bf16 %v3690, %v3686
        %v3827 = vpack.c.bf16 %v3695, %v3691
        %v3828 = vpack.c.bf16 %v3696, %v3692
        %v3829 = vpack.c.bf16 %v3697, %v3693
        %v3830 = vpack.c.bf16 %v3698, %v3694
        %v3831 = vpack.c.bf16 %v3703, %v3699
        %v3832 = vpack.c.bf16 %v3704, %v3700
        %v3833 = vpack.c.bf16 %v3705, %v3701
        %v3834 = vpack.c.bf16 %v3706, %v3702
        %v3835 = vld [vmem:[%s3] sm:$0xf]
        %v3836 = vld [vmem:[%s3 + $0x4] sm:$0xf]
        %v3837 = vld [vmem:[%s3 + $0x8] sm:$0xf]
        %v3838 = vld [vmem:[%s3 + $0xc] sm:$0xf]
        %v3839 = vld [vmem:[%s3 + $0x10] sm:$0xf]
        %v3840 = vld [vmem:[%s3 + $0x14] sm:$0xf]
        %v3841 = vld [vmem:[%s3 + $0x18] sm:$0xf]
        %v3842 = vld [vmem:[%s3 + $0x1c] sm:$0xf]
        %v3843 = vld [vmem:[%s3 + $0x20] sm:$0xf]
        %v3844 = vld [vmem:[%s3 + $0x24] sm:$0xf]
        %v3845 = vld [vmem:[%s3 + $0x28] sm:$0xf]
        %v3846 = vld [vmem:[%s3 + $0x2c] sm:$0xf]
        %v3847 = vld [vmem:[%s3 + $0x30] sm:$0xf]
        %v3848 = vld [vmem:[%s3 + $0x34] sm:$0xf]
        %v3849 = vld [vmem:[%s3 + $0x38] sm:$0xf]
        %v3850 = vld [vmem:[%s3 + $0x3c] sm:$0xf]
        %v3851 = vld [vmem:[%s3 + $0x40] sm:$0xf]
        %v3852 = vld [vmem:[%s3 + $0x44] sm:$0xf]
        %v3853 = vld [vmem:[%s3 + $0x48] sm:$0xf]
        %v3854 = vld [vmem:[%s3 + $0x4c] sm:$0xf]
        %v3855 = vld [vmem:[%s3 + $0x50] sm:$0xf]
        %v3856 = vld [vmem:[%s3 + $0x54] sm:$0xf]
        %v3857 = vld [vmem:[%s3 + $0x58] sm:$0xf]
        %v3858 = vld [vmem:[%s3 + $0x5c] sm:$0xf]
        %v3859 = vld [vmem:[%s3 + $0x60] sm:$0xf]
        %v3860 = vld [vmem:[%s3 + $0x64] sm:$0xf]
        %v3861 = vld [vmem:[%s3 + $0x68] sm:$0xf]
        %v3862 = vld [vmem:[%s3 + $0x6c] sm:$0xf]
        %v3863 = vld [vmem:[%s3 + $0x70] sm:$0xf]
        %v3864 = vld [vmem:[%s3 + $0x74] sm:$0xf]
        %v3865 = vld [vmem:[%s3 + $0x78] sm:$0xf]
        %v3866 = vld [vmem:[%s3 + $0x7c] sm:$0xf]
        %v3867 = vld [vmem:[%s3 + $0x80] sm:$0xf]
        %v3868 = vld [vmem:[%s3 + $0x84] sm:$0xf]
        %v3869 = vld [vmem:[%s3 + $0x88] sm:$0xf]
        %v3870 = vld [vmem:[%s3 + $0x8c] sm:$0xf]
        %v3871 = vld [vmem:[%s3 + $0x90] sm:$0xf]
        %v3872 = vld [vmem:[%s3 + $0x94] sm:$0xf]
        %v3873 = vld [vmem:[%s3 + $0x98] sm:$0xf]
        %v3874 = vld [vmem:[%s3 + $0x9c] sm:$0xf]
        %v3875 = vld [vmem:[%s3 + $0xa0] sm:$0xf]
        %v3876 = vld [vmem:[%s3 + $0xa4] sm:$0xf]
        %v3877 = vld [vmem:[%s3 + $0xa8] sm:$0xf]
        %v3878 = vld [vmem:[%s3 + $0xac] sm:$0xf]
        %v3879 = vld [vmem:[%s3 + $0xb0] sm:$0xf]
        %v3880 = vld [vmem:[%s3 + $0xb4] sm:$0xf]
        %v3881 = vld [vmem:[%s3 + $0xb8] sm:$0xf]
        %v3882 = vld [vmem:[%s3 + $0xbc] sm:$0xf]
        %v3883 = vld [vmem:[%s3 + $0xc0] sm:$0xf]
        %v3884 = vld [vmem:[%s3 + $0xc4] sm:$0xf]
        %v3885 = vld [vmem:[%s3 + $0xc8] sm:$0xf]
        %v3886 = vld [vmem:[%s3 + $0xcc] sm:$0xf]
        %v3887 = vld [vmem:[%s3 + $0xd0] sm:$0xf]
        %v3888 = vld [vmem:[%s3 + $0xd4] sm:$0xf]
        %v3889 = vld [vmem:[%s3 + $0xd8] sm:$0xf]
        %v3890 = vld [vmem:[%s3 + $0xdc] sm:$0xf]
        %v3891 = vld [vmem:[%s3 + $0xe0] sm:$0xf]
        %v3892 = vld [vmem:[%s3 + $0xe4] sm:$0xf]
        %v3893 = vld [vmem:[%s3 + $0xe8] sm:$0xf]
        %v3894 = vld [vmem:[%s3 + $0xec] sm:$0xf]
        %v3895 = vld [vmem:[%s3 + $0xf0] sm:$0xf]
        %v3896 = vld [vmem:[%s3 + $0xf4] sm:$0xf]
        %v3897 = vld [vmem:[%s3 + $0xf8] sm:$0xf]
        %v3898 = vld [vmem:[%s3 + $0xfc] sm:$0xf]
        %v3899 = vld [vmem:[%s4] sm:$0x1]
        %v3901 = vlaneseq
        %v3902 = vshrl.u32 %v3901, 7
        %v3903 = vsub.s32 0, %v3902
        %v3904 = vrot.slane %v3899, %v3903
        %v3970 = vunpack.c.l.b16 %v3835
        %v3971 = vunpack.c.l.b16 %v3836
        %v3972 = vunpack.c.l.b16 %v3837
        %v3973 = vunpack.c.l.b16 %v3838
        %v3974 = vunpack.c.l.b16 %v3839
        %v3975 = vunpack.c.l.b16 %v3840
        %v3976 = vunpack.c.l.b16 %v3841
        %v3977 = vunpack.c.l.b16 %v3842
        %v3978 = vunpack.c.l.b16 %v3843
        %v3979 = vunpack.c.l.b16 %v3844
        %v3980 = vunpack.c.l.b16 %v3845
        %v3981 = vunpack.c.l.b16 %v3846
        %v3982 = vunpack.c.l.b16 %v3847
        %v3983 = vunpack.c.l.b16 %v3848
        %v3984 = vunpack.c.l.b16 %v3849
        %v3985 = vunpack.c.l.b16 %v3850
        %v3986 = vunpack.c.l.b16 %v3851
        %v3987 = vunpack.c.l.b16 %v3852
        %v3988 = vunpack.c.l.b16 %v3853
        %v3989 = vunpack.c.l.b16 %v3854
        %v3990 = vunpack.c.l.b16 %v3855
        %v3991 = vunpack.c.l.b16 %v3856
        %v3992 = vunpack.c.l.b16 %v3857
        %v3993 = vunpack.c.l.b16 %v3858
        %v3994 = vunpack.c.l.b16 %v3859
        %v3995 = vunpack.c.l.b16 %v3860
        %v3996 = vunpack.c.l.b16 %v3861
        %v3997 = vunpack.c.l.b16 %v3862
        %v3998 = vunpack.c.l.b16 %v3863
        %v3999 = vunpack.c.l.b16 %v3864
        %v4000 = vunpack.c.l.b16 %v3865
        %v4001 = vunpack.c.l.b16 %v3866
        %v4002 = vunpack.c.l.b16 %v3867
        %v4003 = vunpack.c.l.b16 %v3868
        %v4004 = vunpack.c.l.b16 %v3869
        %v4005 = vunpack.c.l.b16 %v3870
        %v4006 = vunpack.c.l.b16 %v3871
        %v4007 = vunpack.c.l.b16 %v3872
        %v4008 = vunpack.c.l.b16 %v3873
        %v4009 = vunpack.c.l.b16 %v3874
        %v4010 = vunpack.c.l.b16 %v3875
        %v4011 = vunpack.c.l.b16 %v3876
        %v4012 = vunpack.c.l.b16 %v3877
        %v4013 = vunpack.c.l.b16 %v3878
        %v4014 = vunpack.c.l.b16 %v3879
        %v4015 = vunpack.c.l.b16 %v3880
        %v4016 = vunpack.c.l.b16 %v3881
        %v4017 = vunpack.c.l.b16 %v3882
        %v4018 = vunpack.c.l.b16 %v3883
        %v4019 = vunpack.c.l.b16 %v3884
        %v4020 = vunpack.c.l.b16 %v3885
        %v4021 = vunpack.c.l.b16 %v3886
        %v4022 = vunpack.c.l.b16 %v3887
        %v4023 = vunpack.c.l.b16 %v3888
        %v4024 = vunpack.c.l.b16 %v3889
        %v4025 = vunpack.c.l.b16 %v3890
        %v4026 = vunpack.c.l.b16 %v3891
        %v4027 = vunpack.c.l.b16 %v3892
        %v4028 = vunpack.c.l.b16 %v3893
        %v4029 = vunpack.c.l.b16 %v3894
        %v4030 = vunpack.c.l.b16 %v3895
        %v4031 = vunpack.c.l.b16 %v3896
        %v4032 = vunpack.c.l.b16 %v3897
        %v4033 = vunpack.c.l.b16 %v3898
        %v4034 = vpack.c.b16 %v3971, %v3970
        %v4035 = vpack.c.b16 %v3973, %v3972
        %v4036 = vpack.c.b16 %v3975, %v3974
        %v4037 = vpack.c.b16 %v3977, %v3976
        %v4038 = vpack.c.b16 %v3979, %v3978
        %v4039 = vpack.c.b16 %v3981, %v3980
        %v4040 = vpack.c.b16 %v3983, %v3982
        %v4041 = vpack.c.b16 %v3985, %v3984
        %v4042 = vpack.c.b16 %v3987, %v3986
        %v4043 = vpack.c.b16 %v3989, %v3988
        %v4044 = vpack.c.b16 %v3991, %v3990
        %v4045 = vpack.c.b16 %v3993, %v3992
        %v4046 = vpack.c.b16 %v3995, %v3994
        %v4047 = vpack.c.b16 %v3997, %v3996
        %v4048 = vpack.c.b16 %v3999, %v3998
        %v4049 = vpack.c.b16 %v4001, %v4000
        %v4050 = vpack.c.b16 %v4003, %v4002
        %v4051 = vpack.c.b16 %v4005, %v4004
        %v4052 = vpack.c.b16 %v4007, %v4006
        %v4053 = vpack.c.b16 %v4009, %v4008
        %v4054 = vpack.c.b16 %v4011, %v4010
        %v4055 = vpack.c.b16 %v4013, %v4012
        %v4056 = vpack.c.b16 %v4015, %v4014
        %v4057 = vpack.c.b16 %v4017, %v4016
        %v4058 = vpack.c.b16 %v4019, %v4018
        %v4059 = vpack.c.b16 %v4021, %v4020
        %v4060 = vpack.c.b16 %v4023, %v4022
        %v4061 = vpack.c.b16 %v4025, %v4024
        %v4062 = vpack.c.b16 %v4027, %v4026
        %v4063 = vpack.c.b16 %v4029, %v4028
        %v4064 = vpack.c.b16 %v4031, %v4030
        %v4065 = vpack.c.b16 %v4033, %v4032
        %4098 = vmatprep.subr.bf16.mxu0 0
        %4099 = vmatpush1.bf16.msra.mxu0 %v4034
        %4100 = vmatprep.subr.bf16.mxu0 0
        %4101 = vmatpush1.bf16.msra.mxu0 %v4035
        %4102 = vmatprep.subr.bf16.mxu0 0
        %4103 = vmatpush1.bf16.msra.mxu0 %v4036
        %4104 = vmatprep.subr.bf16.mxu0 0
        %4105 = vmatpush1.bf16.msra.mxu0 %v4037
        %4106 = vmatprep.subr.bf16.mxu0 0
        %4107 = vmatpush1.bf16.msra.mxu0 %v4038
        %4108 = vmatprep.subr.bf16.mxu0 0
        %4109 = vmatpush1.bf16.msra.mxu0 %v4039
        %4110 = vmatprep.subr.bf16.mxu0 0
        %4111 = vmatpush1.bf16.msra.mxu0 %v4040
        %4112 = vmatprep.subr.bf16.mxu0 0
        %4113 = vmatpush1.bf16.msra.mxu0 %v4041
        %4114 = vmatprep.subr.bf16.mxu0 0
        %4115 = vmatpush1.bf16.msra.mxu0 %v4042
        %4116 = vmatprep.subr.bf16.mxu0 0
        %4117 = vmatpush1.bf16.msra.mxu0 %v4043
        %4118 = vmatprep.subr.bf16.mxu0 0
        %4119 = vmatpush1.bf16.msra.mxu0 %v4044
        %4120 = vmatprep.subr.bf16.mxu0 0
        %4121 = vmatpush1.bf16.msra.mxu0 %v4045
        %4122 = vmatprep.subr.bf16.mxu0 0
        %4123 = vmatpush1.bf16.msra.mxu0 %v4046
        %4124 = vmatprep.subr.bf16.mxu0 0
        %4125 = vmatpush1.bf16.msra.mxu0 %v4047
        %4126 = vmatprep.subr.bf16.mxu0 0
        %4127 = vmatpush1.bf16.msra.mxu0 %v4048
        %4128 = vmatprep.subr.bf16.mxu0 0
        %4129 = vmatpush1.bf16.msra.mxu0 %v4049
        %4130 = vmatprep.mubr.bf16.mxu0 %v3708
        %4131 = vmatmul.mubr.bf16.gmra.mrb[0].mxu0 %v3707
        %v4132 = vpop.f32.mrb[0].mxu0
        %v4133 = vadd.f32 %v3904, %v4132
        %v4134 = vpop.f32.mrb[0].mxu0
        %v4135 = vpop.f32.mrb[0].mxu0
        %v4136 = vadd.f32 %v3904, %v4135
        %v4137 = vpop.f32.mrb[0].mxu0
        %4138 = vmatprep.mubr.bf16.mxu0 %v3712
        %4139 = vmatmul.mubr.bf16.gmra.mrb[0].mxu0 %v3711
        %v4140 = vpop.f32.mrb[0].mxu0
        %v4141 = vadd.f32 %v3904, %v4140
        %v4142 = vpop.f32.mrb[0].mxu0
        %v4143 = vpop.f32.mrb[0].mxu0
        %v4144 = vadd.f32 %v3904, %v4143
        %v4145 = vpop.f32.mrb[0].mxu0
        %4146 = vmatprep.mubr.bf16.mxu0 %v3716
        %4147 = vmatmul.mubr.bf16.gmra.mrb[0].mxu0 %v3715
        %v4148 = vpop.f32.mrb[0].mxu0
        %v4149 = vadd.f32 %v3904, %v4148
        %v4150 = vpop.f32.mrb[0].mxu0
        %v4151 = vpop.f32.mrb[0].mxu0
        %v4152 = vadd.f32 %v3904, %v4151
        %v4153 = vpop.f32.mrb[0].mxu0
        %4154 = vmatprep.mubr.bf16.mxu0 %v3720
        %4155 = vmatmul.mubr.bf16.gmra.mrb[0].mxu0 %v3719
        %v4156 = vpop.f32.mrb[0].mxu0
        %v4157 = vadd.f32 %v3904, %v4156
        %v4158 = vpop.f32.mrb[0].mxu0
        %v4159 = vpop.f32.mrb[0].mxu0
        %v4160 = vadd.f32 %v3904, %v4159
        %v4161 = vpop.f32.mrb[0].mxu0
        %4162 = vmatprep.mubr.bf16.mxu0 %v3724
        %4163 = vmatmul.mubr.bf16.gmra.mrb[0].mxu0 %v3723
        %v4164 = vpop.f32.mrb[0].mxu0
        %v4165 = vadd.f32 %v3904, %v4164
        %v4166 = vpop.f32.mrb[0].mxu0
        %v4167 = vpop.f32.mrb[0].mxu0
        %v4168 = vadd.f32 %v3904, %v4167
        %v4169 = vpop.f32.mrb[0].mxu0
        %4170 = vmatprep.mubr.bf16.mxu0 %v3728
        %4171 = vmatmul.mubr.bf16.gmra.mrb[0].mxu0 %v3727
        %v4172 = vpop.f32.mrb[0].mxu0
        %v4173 = vadd.f32 %v3904, %v4172
        %v4174 = vpop.f32.mrb[0].mxu0
        %v4175 = vpop.f32.mrb[0].mxu0
        %v4176 = vadd.f32 %v3904, %v4175
        %v4177 = vpop.f32.mrb[0].mxu0
        %4178 = vmatprep.mubr.bf16.mxu0 %v3732
        %4179 = vmatmul.mubr.bf16.gmra.mrb[0].mxu0 %v3731
        %v4180 = vpop.f32.mrb[0].mxu0
        %v4181 = vadd.f32 %v3904, %v4180
        %v4182 = vpop.f32.mrb[0].mxu0
        %v4183 = vpop.f32.mrb[0].mxu0
        %v4184 = vadd.f32 %v3904, %v4183
        %v4185 = vpop.f32.mrb[0].mxu0
        %4186 = vmatprep.mubr.bf16.mxu0 %v3736
        %4187 = vmatmul.mubr.bf16.gmra.mrb[0].mxu0 %v3735
        %v4188 = vpop.f32.mrb[0].mxu0
        %v4189 = vadd.f32 %v3904, %v4188
        %v4190 = vpop.f32.mrb[0].mxu0
        %v4191 = vpop.f32.mrb[0].mxu0
        %v4192 = vadd.f32 %v3904, %v4191
        %v4193 = vpop.f32.mrb[0].mxu0
        %4194 = vmatprep.mubr.bf16.mxu0 %v3740
        %4195 = vmatmul.mubr.bf16.gmra.mrb[0].mxu0 %v3739
        %v4196 = vpop.f32.mrb[0].mxu0
        %v4197 = vadd.f32 %v3904, %v4196
        %v4198 = vpop.f32.mrb[0].mxu0
        %v4199 = vpop.f32.mrb[0].mxu0
        %v4200 = vadd.f32 %v3904, %v4199
        %v4201 = vpop.f32.mrb[0].mxu0
        %4202 = vmatprep.mubr.bf16.mxu0 %v3744
        %4203 = vmatmul.mubr.bf16.gmra.mrb[0].mxu0 %v3743
        %v4204 = vpop.f32.mrb[0].mxu0
        %v4205 = vadd.f32 %v3904, %v4204
        %v4206 = vpop.f32.mrb[0].mxu0
        %v4207 = vpop.f32.mrb[0].mxu0
        %v4208 = vadd.f32 %v3904, %v4207
        %v4209 = vpop.f32.mrb[0].mxu0
        %4210 = vmatprep.mubr.bf16.mxu0 %v3748
        %4211 = vmatmul.mubr.bf16.gmra.mrb[0].mxu0 %v3747
        %v4212 = vpop.f32.mrb[0].mxu0
        %v4213 = vadd.f32 %v3904, %v4212
        %v4214 = vpop.f32.mrb[0].mxu0
        %v4215 = vpop.f32.mrb[0].mxu0
        %v4216 = vadd.f32 %v3904, %v4215
        %v4217 = vpop.f32.mrb[0].mxu0
        %4218 = vmatprep.mubr.bf16.mxu0 %v3752
        %4219 = vmatmul.mubr.bf16.gmra.mrb[0].mxu0 %v3751
        %v4220 = vpop.f32.mrb[0].mxu0
        %v4221 = vadd.f32 %v3904, %v4220
        %v4222 = vpop.f32.mrb[0].mxu0
        %v4223 = vpop.f32.mrb[0].mxu0
        %v4224 = vadd.f32 %v3904, %v4223
        %v4225 = vpop.f32.mrb[0].mxu0
        %4226 = vmatprep.mubr.bf16.mxu0 %v3756
        %4227 = vmatmul.mubr.bf16.gmra.mrb[0].mxu0 %v3755
        %v4228 = vpop.f32.mrb[0].mxu0
        %v4229 = vadd.f32 %v3904, %v4228
        %v4230 = vpop.f32.mrb[0].mxu0
        %v4231 = vpop.f32.mrb[0].mxu0
        %v4232 = vadd.f32 %v3904, %v4231
        %v4233 = vpop.f32.mrb[0].mxu0
        %4234 = vmatprep.mubr.bf16.mxu0 %v3760
        %4235 = vmatmul.mubr.bf16.gmra.mrb[0].mxu0 %v3759
        %v4236 = vpop.f32.mrb[0].mxu0
        %v4237 = vadd.f32 %v3904, %v4236
        %v4238 = vpop.f32.mrb[0].mxu0
        %v4239 = vpop.f32.mrb[0].mxu0
        %v4240 = vadd.f32 %v3904, %v4239
        %v4241 = vpop.f32.mrb[0].mxu0
        %4242 = vmatprep.mubr.bf16.mxu0 %v3764
        %4243 = vmatmul.mubr.bf16.gmra.mrb[0].mxu0 %v3763
        %v4244 = vpop.f32.mrb[0].mxu0
        %v4245 = vadd.f32 %v3904, %v4244
        %v4246 = vpop.f32.mrb[0].mxu0
        %v4247 = vpop.f32.mrb[0].mxu0
        %v4248 = vadd.f32 %v3904, %v4247
        %v4249 = vpop.f32.mrb[0].mxu0
        %4250 = vmatprep.mubr.bf16.mxu0 %v3768
        %4251 = vmatmul.mubr.bf16.gmra.mrb[0].mxu0 %v3767
        %v4252 = vpop.f32.mrb[0].mxu0
        %v4253 = vadd.f32 %v3904, %v4252
        %v4254 = vpop.f32.mrb[0].mxu0
        %v4255 = vpop.f32.mrb[0].mxu0
        %v4256 = vadd.f32 %v3904, %v4255
        %v4257 = vpop.f32.mrb[0].mxu0
        %4258 = vmatprep.mubr.bf16.mxu0 %v3772
        %4259 = vmatmul.mubr.bf16.gmra.mrb[0].mxu0 %v3771
        %v4260 = vpop.f32.mrb[0].mxu0
        %v4261 = vadd.f32 %v3904, %v4260
        %v4262 = vpop.f32.mrb[0].mxu0
        %v4263 = vpop.f32.mrb[0].mxu0
        %v4264 = vadd.f32 %v3904, %v4263
        %v4265 = vpop.f32.mrb[0].mxu0
        %4266 = vmatprep.mubr.bf16.mxu0 %v3776
        %4267 = vmatmul.mubr.bf16.gmra.mrb[0].mxu0 %v3775
        %v4268 = vpop.f32.mrb[0].mxu0
        %v4269 = vadd.f32 %v3904, %v4268
        %v4270 = vpop.f32.mrb[0].mxu0
        %v4271 = vpop.f32.mrb[0].mxu0
        %v4272 = vadd.f32 %v3904, %v4271
        %v4273 = vpop.f32.mrb[0].mxu0
        %4274 = vmatprep.mubr.bf16.mxu0 %v3780
        %4275 = vmatmul.mubr.bf16.gmra.mrb[0].mxu0 %v3779
        %v4276 = vpop.f32.mrb[0].mxu0
        %v4277 = vadd.f32 %v3904, %v4276
        %v4278 = vpop.f32.mrb[0].mxu0
        %v4279 = vpop.f32.mrb[0].mxu0
        %v4280 = vadd.f32 %v3904, %v4279
        %v4281 = vpop.f32.mrb[0].mxu0
        %4282 = vmatprep.mubr.bf16.mxu0 %v3784
        %4283 = vmatmul.mubr.bf16.gmra.mrb[0].mxu0 %v3783
        %v4284 = vpop.f32.mrb[0].mxu0
        %v4285 = vadd.f32 %v3904, %v4284
        %v4286 = vpop.f32.mrb[0].mxu0
        %v4287 = vpop.f32.mrb[0].mxu0
        %v4288 = vadd.f32 %v3904, %v4287
        %v4289 = vpop.f32.mrb[0].mxu0
        %4290 = vmatprep.mubr.bf16.mxu0 %v3788
        %4291 = vmatmul.mubr.bf16.gmra.mrb[0].mxu0 %v3787
        %v4292 = vpop.f32.mrb[0].mxu0
        %v4293 = vadd.f32 %v3904, %v4292
        %v4294 = vpop.f32.mrb[0].mxu0
        %v4295 = vpop.f32.mrb[0].mxu0
        %v4296 = vadd.f32 %v3904, %v4295
        %v4297 = vpop.f32.mrb[0].mxu0
        %4298 = vmatprep.mubr.bf16.mxu0 %v3792
        %4299 = vmatmul.mubr.bf16.gmra.mrb[0].mxu0 %v3791
        %v4300 = vpop.f32.mrb[0].mxu0
        %v4301 = vadd.f32 %v3904, %v4300
        %v4302 = vpop.f32.mrb[0].mxu0
        %v4303 = vpop.f32.mrb[0].mxu0
        %v4304 = vadd.f32 %v3904, %v4303
        %v4305 = vpop.f32.mrb[0].mxu0
        %4306 = vmatprep.mubr.bf16.mxu0 %v3796
        %4307 = vmatmul.mubr.bf16.gmra.mrb[0].mxu0 %v3795
        %v4308 = vpop.f32.mrb[0].mxu0
        %v4309 = vadd.f32 %v3904, %v4308
        %v4310 = vpop.f32.mrb[0].mxu0
        %v4311 = vpop.f32.mrb[0].mxu0
        %v4312 = vadd.f32 %v3904, %v4311
        %v4313 = vpop.f32.mrb[0].mxu0
        %4314 = vmatprep.mubr.bf16.mxu0 %v3800
        %4315 = vmatmul.mubr.bf16.gmra.mrb[0].mxu0 %v3799
        %v4316 = vpop.f32.mrb[0].mxu0
        %v4317 = vadd.f32 %v3904, %v4316
        %v4318 = vpop.f32.mrb[0].mxu0
        %v4319 = vpop.f32.mrb[0].mxu0
        %v4320 = vadd.f32 %v3904, %v4319
        %v4321 = vpop.f32.mrb[0].mxu0
        %4322 = vmatprep.mubr.bf16.mxu0 %v3804
        %4323 = vmatmul.mubr.bf16.gmra.mrb[0].mxu0 %v3803
        %v4324 = vpop.f32.mrb[0].mxu0
        %v4325 = vadd.f32 %v3904, %v4324
        %v4326 = vpop.f32.mrb[0].mxu0
        %v4327 = vpop.f32.mrb[0].mxu0
        %v4328 = vadd.f32 %v3904, %v4327
        %v4329 = vpop.f32.mrb[0].mxu0
        %4330 = vmatprep.mubr.bf16.mxu0 %v3808
        %4331 = vmatmul.mubr.bf16.gmra.mrb[0].mxu0 %v3807
        %v4332 = vpop.f32.mrb[0].mxu0
        %v4333 = vadd.f32 %v3904, %v4332
        %v4334 = vpop.f32.mrb[0].mxu0
        %v4335 = vpop.f32.mrb[0].mxu0
        %v4336 = vadd.f32 %v3904, %v4335
        %v4337 = vpop.f32.mrb[0].mxu0
        %4338 = vmatprep.mubr.bf16.mxu0 %v3812
        %4339 = vmatmul.mubr.bf16.gmra.mrb[0].mxu0 %v3811
        %v4340 = vpop.f32.mrb[0].mxu0
        %v4341 = vadd.f32 %v3904, %v4340
        %v4342 = vpop.f32.mrb[0].mxu0
        %v4343 = vpop.f32.mrb[0].mxu0
        %v4344 = vadd.f32 %v3904, %v4343
        %v4345 = vpop.f32.mrb[0].mxu0
        %4346 = vmatprep.mubr.bf16.mxu0 %v3816
        %4347 = vmatmul.mubr.bf16.gmra.mrb[0].mxu0 %v3815
        %v4348 = vpop.f32.mrb[0].mxu0
        %v4349 = vadd.f32 %v3904, %v4348
        %v4350 = vpop.f32.mrb[0].mxu0
        %v4351 = vpop.f32.mrb[0].mxu0
        %v4352 = vadd.f32 %v3904, %v4351
        %v4353 = vpop.f32.mrb[0].mxu0
        %4354 = vmatprep.mubr.bf16.mxu0 %v3820
        %4355 = vmatmul.mubr.bf16.gmra.mrb[0].mxu0 %v3819
        %v4356 = vpop.f32.mrb[0].mxu0
        %v4357 = vadd.f32 %v3904, %v4356
        %v4358 = vpop.f32.mrb[0].mxu0
        %v4359 = vpop.f32.mrb[0].mxu0
        %v4360 = vadd.f32 %v3904, %v4359
        %v4361 = vpop.f32.mrb[0].mxu0
        %4362 = vmatprep.mubr.bf16.mxu0 %v3824
        %4363 = vmatmul.mubr.bf16.gmra.mrb[0].mxu0 %v3823
        %v4364 = vpop.f32.mrb[0].mxu0
        %v4365 = vadd.f32 %v3904, %v4364
        %v4366 = vpop.f32.mrb[0].mxu0
        %v4367 = vpop.f32.mrb[0].mxu0
        %v4368 = vadd.f32 %v3904, %v4367
        %v4369 = vpop.f32.mrb[0].mxu0
        %4370 = vmatprep.mubr.bf16.mxu0 %v3828
        %4371 = vmatmul.mubr.bf16.gmra.mrb[0].mxu0 %v3827
        %v4372 = vpop.f32.mrb[0].mxu0
        %v4373 = vadd.f32 %v3904, %v4372
        %v4374 = vpop.f32.mrb[0].mxu0
        %v4375 = vpop.f32.mrb[0].mxu0
        %v4376 = vadd.f32 %v3904, %v4375
        %v4377 = vpop.f32.mrb[0].mxu0
        %4378 = vmatprep.mubr.bf16.mxu0 %v3832
        %4379 = vmatmul.mubr.bf16.gmra.mrb[0].mxu0 %v3831
        %v4380 = vpop.f32.mrb[0].mxu0
        %v4381 = vadd.f32 %v3904, %v4380
        %v4382 = vpop.f32.mrb[0].mxu0
        %v4383 = vpop.f32.mrb[0].mxu0
        %v4384 = vadd.f32 %v3904, %v4383
        %v4385 = vpop.f32.mrb[0].mxu0
        %4386 = vdwg.mxu0
        %4387 = vmatprep.subr.bf16.mxu0 0
        %4388 = vmatpush1.bf16.msra.mxu0 %v4050
        %4389 = vmatprep.subr.bf16.mxu0 0
        %4390 = vmatpush1.bf16.msra.mxu0 %v4051
        %4391 = vmatprep.subr.bf16.mxu0 0
        %4392 = vmatpush1.bf16.msra.mxu0 %v4052
        %4393 = vmatprep.subr.bf16.mxu0 0
        %4394 = vmatpush1.bf16.msra.mxu0 %v4053
        %4395 = vmatprep.subr.bf16.mxu0 0
        %4396 = vmatpush1.bf16.msra.mxu0 %v4054
        %4397 = vmatprep.subr.bf16.mxu0 0
        %4398 = vmatpush1.bf16.msra.mxu0 %v4055
        %4399 = vmatprep.subr.bf16.mxu0 0
        %4400 = vmatpush1.bf16.msra.mxu0 %v4056
        %4401 = vmatprep.subr.bf16.mxu0 0
        %4402 = vmatpush1.bf16.msra.mxu0 %v4057
        %4403 = vmatprep.subr.bf16.mxu0 0
        %4404 = vmatpush1.bf16.msra.mxu0 %v4058
        %4405 = vmatprep.subr.bf16.mxu0 0
        %4406 = vmatpush1.bf16.msra.mxu0 %v4059
        %4407 = vmatprep.subr.bf16.mxu0 0
        %4408 = vmatpush1.bf16.msra.mxu0 %v4060
        %4409 = vmatprep.subr.bf16.mxu0 0
        %4410 = vmatpush1.bf16.msra.mxu0 %v4061
        %4411 = vmatprep.subr.bf16.mxu0 0
        %4412 = vmatpush1.bf16.msra.mxu0 %v4062
        %4413 = vmatprep.subr.bf16.mxu0 0
        %4414 = vmatpush1.bf16.msra.mxu0 %v4063
        %4415 = vmatprep.subr.bf16.mxu0 0
        %4416 = vmatpush1.bf16.msra.mxu0 %v4064
        %4417 = vmatprep.subr.bf16.mxu0 0
        %4418 = vmatpush1.bf16.msra.mxu0 %v4065
        %4419 = vmatprep.mubr.bf16.mxu0 %v3710
        %4420 = vmatmul.mubr.bf16.gmra.mrb[0].mxu0 %v3709
        %v4421 = vpop.f32.mrb[0].mxu0
        %v4422 = vadd.f32 %v4133, %v4421
        %v4423 = vpop.f32.mrb[0].mxu0
        %v4424 = vpop.f32.mrb[0].mxu0
        %v4425 = vadd.f32 %v4136, %v4424
        %v4426 = vpop.f32.mrb[0].mxu0
        %4427 = vmatprep.mubr.bf16.mxu0 %v3714
        %4428 = vmatmul.mubr.bf16.gmra.mrb[0].mxu0 %v3713
        %v4429 = vpop.f32.mrb[0].mxu0
        %v4430 = vadd.f32 %v4141, %v4429
        %v4431 = vpop.f32.mrb[0].mxu0
        %v4432 = vpop.f32.mrb[0].mxu0
        %v4433 = vadd.f32 %v4144, %v4432
        %v4434 = vpop.f32.mrb[0].mxu0
        %4435 = vmatprep.mubr.bf16.mxu0 %v3718
        %4436 = vmatmul.mubr.bf16.gmra.mrb[0].mxu0 %v3717
        %v4437 = vpop.f32.mrb[0].mxu0
        %v4438 = vadd.f32 %v4149, %v4437
        %v4439 = vpop.f32.mrb[0].mxu0
        %v4440 = vpop.f32.mrb[0].mxu0
        %v4441 = vadd.f32 %v4152, %v4440
        %v4442 = vpop.f32.mrb[0].mxu0
        %4443 = vmatprep.mubr.bf16.mxu0 %v3722
        %4444 = vmatmul.mubr.bf16.gmra.mrb[0].mxu0 %v3721
        %v4445 = vpop.f32.mrb[0].mxu0
        %v4446 = vadd.f32 %v4157, %v4445
        %v4447 = vpop.f32.mrb[0].mxu0
        %v4448 = vpop.f32.mrb[0].mxu0
        %v4449 = vadd.f32 %v4160, %v4448
        %v4450 = vpop.f32.mrb[0].mxu0
        %4451 = vmatprep.mubr.bf16.mxu0 %v3726
        %4452 = vmatmul.mubr.bf16.gmra.mrb[0].mxu0 %v3725
        %v4453 = vpop.f32.mrb[0].mxu0
        %v4454 = vadd.f32 %v4165, %v4453
        %v4455 = vpop.f32.mrb[0].mxu0
        %v4456 = vpop.f32.mrb[0].mxu0
        %v4457 = vadd.f32 %v4168, %v4456
        %v4458 = vpop.f32.mrb[0].mxu0
        %4459 = vmatprep.mubr.bf16.mxu0 %v3730
        %4460 = vmatmul.mubr.bf16.gmra.mrb[0].mxu0 %v3729
        %v4461 = vpop.f32.mrb[0].mxu0
        %v4462 = vadd.f32 %v4173, %v4461
        %v4463 = vpop.f32.mrb[0].mxu0
        %v4464 = vpop.f32.mrb[0].mxu0
        %v4465 = vadd.f32 %v4176, %v4464
        %v4466 = vpop.f32.mrb[0].mxu0
        %4467 = vmatprep.mubr.bf16.mxu0 %v3734
        %4468 = vmatmul.mubr.bf16.gmra.mrb[0].mxu0 %v3733
        %v4469 = vpop.f32.mrb[0].mxu0
        %v4470 = vadd.f32 %v4181, %v4469
        %v4471 = vpop.f32.mrb[0].mxu0
        %v4472 = vpop.f32.mrb[0].mxu0
        %v4473 = vadd.f32 %v4184, %v4472
        %v4474 = vpop.f32.mrb[0].mxu0
        %4475 = vmatprep.mubr.bf16.mxu0 %v3738
        %4476 = vmatmul.mubr.bf16.gmra.mrb[0].mxu0 %v3737
        %v4477 = vpop.f32.mrb[0].mxu0
        %v4478 = vadd.f32 %v4189, %v4477
        %v4479 = vpop.f32.mrb[0].mxu0
        %v4480 = vpop.f32.mrb[0].mxu0
        %v4481 = vadd.f32 %v4192, %v4480
        %v4482 = vpop.f32.mrb[0].mxu0
        %4483 = vmatprep.mubr.bf16.mxu0 %v3742
        %4484 = vmatmul.mubr.bf16.gmra.mrb[0].mxu0 %v3741
        %v4485 = vpop.f32.mrb[0].mxu0
        %v4486 = vadd.f32 %v4197, %v4485
        %v4487 = vpop.f32.mrb[0].mxu0
        %v4488 = vpop.f32.mrb[0].mxu0
        %v4489 = vadd.f32 %v4200, %v4488
        %v4490 = vpop.f32.mrb[0].mxu0
        %4491 = vmatprep.mubr.bf16.mxu0 %v3746
        %4492 = vmatmul.mubr.bf16.gmra.mrb[0].mxu0 %v3745
        %v4493 = vpop.f32.mrb[0].mxu0
        %v4494 = vadd.f32 %v4205, %v4493
        %v4495 = vpop.f32.mrb[0].mxu0
        %v4496 = vpop.f32.mrb[0].mxu0
        %v4497 = vadd.f32 %v4208, %v4496
        %v4498 = vpop.f32.mrb[0].mxu0
        %4499 = vmatprep.mubr.bf16.mxu0 %v3750
        %4500 = vmatmul.mubr.bf16.gmra.mrb[0].mxu0 %v3749
        %v4501 = vpop.f32.mrb[0].mxu0
        %v4502 = vadd.f32 %v4213, %v4501
        %v4503 = vpop.f32.mrb[0].mxu0
        %v4504 = vpop.f32.mrb[0].mxu0
        %v4505 = vadd.f32 %v4216, %v4504
        %v4506 = vpop.f32.mrb[0].mxu0
        %4507 = vmatprep.mubr.bf16.mxu0 %v3754
        %4508 = vmatmul.mubr.bf16.gmra.mrb[0].mxu0 %v3753
        %v4509 = vpop.f32.mrb[0].mxu0
        %v4510 = vadd.f32 %v4221, %v4509
        %v4511 = vpop.f32.mrb[0].mxu0
        %v4512 = vpop.f32.mrb[0].mxu0
        %v4513 = vadd.f32 %v4224, %v4512
        %v4514 = vpop.f32.mrb[0].mxu0
        %4515 = vmatprep.mubr.bf16.mxu0 %v3758
        %4516 = vmatmul.mubr.bf16.gmra.mrb[0].mxu0 %v3757
        %v4517 = vpop.f32.mrb[0].mxu0
        %v4518 = vadd.f32 %v4229, %v4517
        %v4519 = vpop.f32.mrb[0].mxu0
        %v4520 = vpop.f32.mrb[0].mxu0
        %v4521 = vadd.f32 %v4232, %v4520
        %v4522 = vpop.f32.mrb[0].mxu0
        %4523 = vmatprep.mubr.bf16.mxu0 %v3762
        %4524 = vmatmul.mubr.bf16.gmra.mrb[0].mxu0 %v3761
        %v4525 = vpop.f32.mrb[0].mxu0
        %v4526 = vadd.f32 %v4237, %v4525
        %v4527 = vpop.f32.mrb[0].mxu0
        %v4528 = vpop.f32.mrb[0].mxu0
        %v4529 = vadd.f32 %v4240, %v4528
        %v4530 = vpop.f32.mrb[0].mxu0
        %4531 = vmatprep.mubr.bf16.mxu0 %v3766
        %4532 = vmatmul.mubr.bf16.gmra.mrb[0].mxu0 %v3765
        %v4533 = vpop.f32.mrb[0].mxu0
        %v4534 = vadd.f32 %v4245, %v4533
        %v4535 = vpop.f32.mrb[0].mxu0
        %v4536 = vpop.f32.mrb[0].mxu0
        %v4537 = vadd.f32 %v4248, %v4536
        %v4538 = vpop.f32.mrb[0].mxu0
        %4539 = vmatprep.mubr.bf16.mxu0 %v3770
        %4540 = vmatmul.mubr.bf16.gmra.mrb[0].mxu0 %v3769
        %v4541 = vpop.f32.mrb[0].mxu0
        %v4542 = vadd.f32 %v4253, %v4541
        %v4543 = vpop.f32.mrb[0].mxu0
        %v4544 = vpop.f32.mrb[0].mxu0
        %v4545 = vadd.f32 %v4256, %v4544
        %v4546 = vpop.f32.mrb[0].mxu0
        %4547 = vmatprep.mubr.bf16.mxu0 %v3774
        %4548 = vmatmul.mubr.bf16.gmra.mrb[0].mxu0 %v3773
        %v4549 = vpop.f32.mrb[0].mxu0
        %v4550 = vadd.f32 %v4261, %v4549
        %v4551 = vpop.f32.mrb[0].mxu0
        %v4552 = vpop.f32.mrb[0].mxu0
        %v4553 = vadd.f32 %v4264, %v4552
        %v4554 = vpop.f32.mrb[0].mxu0
        %4555 = vmatprep.mubr.bf16.mxu0 %v3778
        %4556 = vmatmul.mubr.bf16.gmra.mrb[0].mxu0 %v3777
        %v4557 = vpop.f32.mrb[0].mxu0
        %v4558 = vadd.f32 %v4269, %v4557
        %v4559 = vpop.f32.mrb[0].mxu0
        %v4560 = vpop.f32.mrb[0].mxu0
        %v4561 = vadd.f32 %v4272, %v4560
        %v4562 = vpop.f32.mrb[0].mxu0
        %4563 = vmatprep.mubr.bf16.mxu0 %v3782
        %4564 = vmatmul.mubr.bf16.gmra.mrb[0].mxu0 %v3781
        %v4565 = vpop.f32.mrb[0].mxu0
        %v4566 = vadd.f32 %v4277, %v4565
        %v4567 = vpop.f32.mrb[0].mxu0
        %v4568 = vpop.f32.mrb[0].mxu0
        %v4569 = vadd.f32 %v4280, %v4568
        %v4570 = vpop.f32.mrb[0].mxu0
        %4571 = vmatprep.mubr.bf16.mxu0 %v3786
        %4572 = vmatmul.mubr.bf16.gmra.mrb[0].mxu0 %v3785
        %v4573 = vpop.f32.mrb[0].mxu0
        %v4574 = vadd.f32 %v4285, %v4573
        %v4575 = vpop.f32.mrb[0].mxu0
        %v4576 = vpop.f32.mrb[0].mxu0
        %v4577 = vadd.f32 %v4288, %v4576
        %v4578 = vpop.f32.mrb[0].mxu0
        %4579 = vmatprep.mubr.bf16.mxu0 %v3790
        %4580 = vmatmul.mubr.bf16.gmra.mrb[0].mxu0 %v3789
        %v4581 = vpop.f32.mrb[0].mxu0
        %v4582 = vadd.f32 %v4293, %v4581
        %v4583 = vpop.f32.mrb[0].mxu0
        %v4584 = vpop.f32.mrb[0].mxu0
        %v4585 = vadd.f32 %v4296, %v4584
        %v4586 = vpop.f32.mrb[0].mxu0
        %4587 = vmatprep.mubr.bf16.mxu0 %v3794
        %4588 = vmatmul.mubr.bf16.gmra.mrb[0].mxu0 %v3793
        %v4589 = vpop.f32.mrb[0].mxu0
        %v4590 = vadd.f32 %v4301, %v4589
        %v4591 = vpop.f32.mrb[0].mxu0
        %v4592 = vpop.f32.mrb[0].mxu0
        %v4593 = vadd.f32 %v4304, %v4592
        %v4594 = vpop.f32.mrb[0].mxu0
        %4595 = vmatprep.mubr.bf16.mxu0 %v3798
        %4596 = vmatmul.mubr.bf16.gmra.mrb[0].mxu0 %v3797
        %v4597 = vpop.f32.mrb[0].mxu0
        %v4598 = vadd.f32 %v4309, %v4597
        %v4599 = vpop.f32.mrb[0].mxu0
        %v4600 = vpop.f32.mrb[0].mxu0
        %v4601 = vadd.f32 %v4312, %v4600
        %v4602 = vpop.f32.mrb[0].mxu0
        %4603 = vmatprep.mubr.bf16.mxu0 %v3802
        %4604 = vmatmul.mubr.bf16.gmra.mrb[0].mxu0 %v3801
        %v4605 = vpop.f32.mrb[0].mxu0
        %v4606 = vadd.f32 %v4317, %v4605
        %v4607 = vpop.f32.mrb[0].mxu0
        %v4608 = vpop.f32.mrb[0].mxu0
        %v4609 = vadd.f32 %v4320, %v4608
        %v4610 = vpop.f32.mrb[0].mxu0
        %4611 = vmatprep.mubr.bf16.mxu0 %v3806
        %4612 = vmatmul.mubr.bf16.gmra.mrb[0].mxu0 %v3805
        %v4613 = vpop.f32.mrb[0].mxu0
        %v4614 = vadd.f32 %v4325, %v4613
        %v4615 = vpop.f32.mrb[0].mxu0
        %v4616 = vpop.f32.mrb[0].mxu0
        %v4617 = vadd.f32 %v4328, %v4616
        %v4618 = vpop.f32.mrb[0].mxu0
        %4619 = vmatprep.mubr.bf16.mxu0 %v3810
        %4620 = vmatmul.mubr.bf16.gmra.mrb[0].mxu0 %v3809
        %v4621 = vpop.f32.mrb[0].mxu0
        %v4622 = vadd.f32 %v4333, %v4621
        %v4623 = vpop.f32.mrb[0].mxu0
        %v4624 = vpop.f32.mrb[0].mxu0
        %v4625 = vadd.f32 %v4336, %v4624
        %v4626 = vpop.f32.mrb[0].mxu0
        %4627 = vmatprep.mubr.bf16.mxu0 %v3814
        %4628 = vmatmul.mubr.bf16.gmra.mrb[0].mxu0 %v3813
        %v4629 = vpop.f32.mrb[0].mxu0
        %v4630 = vadd.f32 %v4341, %v4629
        %v4631 = vpop.f32.mrb[0].mxu0
        %v4632 = vpop.f32.mrb[0].mxu0
        %v4633 = vadd.f32 %v4344, %v4632
        %v4634 = vpop.f32.mrb[0].mxu0
        %4635 = vmatprep.mubr.bf16.mxu0 %v3818
        %4636 = vmatmul.mubr.bf16.gmra.mrb[0].mxu0 %v3817
        %v4637 = vpop.f32.mrb[0].mxu0
        %v4638 = vadd.f32 %v4349, %v4637
        %v4639 = vpop.f32.mrb[0].mxu0
        %v4640 = vpop.f32.mrb[0].mxu0
        %v4641 = vadd.f32 %v4352, %v4640
        %v4642 = vpop.f32.mrb[0].mxu0
        %4643 = vmatprep.mubr.bf16.mxu0 %v3822
        %4644 = vmatmul.mubr.bf16.gmra.mrb[0].mxu0 %v3821
        %v4645 = vpop.f32.mrb[0].mxu0
        %v4646 = vadd.f32 %v4357, %v4645
        %v4647 = vpop.f32.mrb[0].mxu0
        %v4648 = vpop.f32.mrb[0].mxu0
        %v4649 = vadd.f32 %v4360, %v4648
        %v4650 = vpop.f32.mrb[0].mxu0
        %4651 = vmatprep.mubr.bf16.mxu0 %v3826
        %4652 = vmatmul.mubr.bf16.gmra.mrb[0].mxu0 %v3825
        %v4653 = vpop.f32.mrb[0].mxu0
        %v4654 = vadd.f32 %v4365, %v4653
        %v4655 = vpop.f32.mrb[0].mxu0
        %v4656 = vpop.f32.mrb[0].mxu0
        %v4657 = vadd.f32 %v4368, %v4656
        %v4658 = vpop.f32.mrb[0].mxu0
        %4659 = vmatprep.mubr.bf16.mxu0 %v3830
        %4660 = vmatmul.mubr.bf16.gmra.mrb[0].mxu0 %v3829
        %v4661 = vpop.f32.mrb[0].mxu0
        %v4662 = vadd.f32 %v4373, %v4661
        %v4663 = vpop.f32.mrb[0].mxu0
        %v4664 = vpop.f32.mrb[0].mxu0
        %v4665 = vadd.f32 %v4376, %v4664
        %v4666 = vpop.f32.mrb[0].mxu0
        %4667 = vmatprep.mubr.bf16.mxu0 %v3834
        %4668 = vmatmul.mubr.bf16.gmra.mrb[0].mxu0 %v3833
        %v4669 = vpop.f32.mrb[0].mxu0
        %v4670 = vadd.f32 %v4381, %v4669
        %v4671 = vpop.f32.mrb[0].mxu0
        %v4672 = vpop.f32.mrb[0].mxu0
        %v4673 = vadd.f32 %v4384, %v4672
        %v4674 = vpop.f32.mrb[0].mxu0
        %4675 = vdwg.mxu0
        %4676 = vst [vmem:[%s218] sm:$0xff] %v4422
        %4677 = vst [vmem:[%s218 + $0x8] sm:$0xff] %v4425
        %4678 = vst [vmem:[%s218 + $0x10] sm:$0xff] %v4430
        %4679 = vst [vmem:[%s218 + $0x18] sm:$0xff] %v4433
        %4680 = vst [vmem:[%s218 + $0x20] sm:$0xff] %v4438
        %4681 = vst [vmem:[%s218 + $0x28] sm:$0xff] %v4441
        %4682 = vst [vmem:[%s218 + $0x30] sm:$0xff] %v4446
        %4683 = vst [vmem:[%s218 + $0x38] sm:$0xff] %v4449
        %4684 = vst [vmem:[%s218 + $0x40] sm:$0xff] %v4454
        %4685 = vst [vmem:[%s218 + $0x48] sm:$0xff] %v4457
        %4686 = vst [vmem:[%s218 + $0x50] sm:$0xff] %v4462
        %4687 = vst [vmem:[%s218 + $0x58] sm:$0xff] %v4465
        %4688 = vst [vmem:[%s218 + $0x60] sm:$0xff] %v4470
        %4689 = vst [vmem:[%s218 + $0x68] sm:$0xff] %v4473
        %4690 = vst [vmem:[%s218 + $0x70] sm:$0xff] %v4478
        %4691 = vst [vmem:[%s218 + $0x78] sm:$0xff] %v4481
        %4692 = vst [vmem:[%s218 + $0x80] sm:$0xff] %v4486
        %4693 = vst [vmem:[%s218 + $0x88] sm:$0xff] %v4489
        %4694 = vst [vmem:[%s218 + $0x90] sm:$0xff] %v4494
        %4695 = vst [vmem:[%s218 + $0x98] sm:$0xff] %v4497
        %4696 = vst [vmem:[%s218 + $0xa0] sm:$0xff] %v4502
        %4697 = vst [vmem:[%s218 + $0xa8] sm:$0xff] %v4505
        %4698 = vst [vmem:[%s218 + $0xb0] sm:$0xff] %v4510
        %4699 = vst [vmem:[%s218 + $0xb8] sm:$0xff] %v4513
        %4700 = vst [vmem:[%s218 + $0xc0] sm:$0xff] %v4518
        %4701 = vst [vmem:[%s218 + $0xc8] sm:$0xff] %v4521
        %4702 = vst [vmem:[%s218 + $0xd0] sm:$0xff] %v4526
        %4703 = vst [vmem:[%s218 + $0xd8] sm:$0xff] %v4529
        %4704 = vst [vmem:[%s218 + $0xe0] sm:$0xff] %v4534
        %4705 = vst [vmem:[%s218 + $0xe8] sm:$0xff] %v4537
        %4706 = vst [vmem:[%s218 + $0xf0] sm:$0xff] %v4542
        %4707 = vst [vmem:[%s218 + $0xf8] sm:$0xff] %v4545
        %4708 = vst [vmem:[%s218 + $0x100] sm:$0xff] %v4550
        %4709 = vst [vmem:[%s218 + $0x108] sm:$0xff] %v4553
        %4710 = vst [vmem:[%s218 + $0x110] sm:$0xff] %v4558
        %4711 = vst [vmem:[%s218 + $0x118] sm:$0xff] %v4561
        %4712 = vst [vmem:[%s218 + $0x120] sm:$0xff] %v4566
        %4713 = vst [vmem:[%s218 + $0x128] sm:$0xff] %v4569
        %4714 = vst [vmem:[%s218 + $0x130] sm:$0xff] %v4574
        %4715 = vst [vmem:[%s218 + $0x138] sm:$0xff] %v4577
        %4716 = vst [vmem:[%s218 + $0x140] sm:$0xff] %v4582
        %4717 = vst [vmem:[%s218 + $0x148] sm:$0xff] %v4585
        %4718 = vst [vmem:[%s218 + $0x150] sm:$0xff] %v4590
        %4719 = vst [vmem:[%s218 + $0x158] sm:$0xff] %v4593
        %4720 = vst [vmem:[%s218 + $0x160] sm:$0xff] %v4598
        %4721 = vst [vmem:[%s218 + $0x168] sm:$0xff] %v4601
        %4722 = vst [vmem:[%s218 + $0x170] sm:$0xff] %v4606
        %4723 = vst [vmem:[%s218 + $0x178] sm:$0xff] %v4609
        %4724 = vst [vmem:[%s218 + $0x180] sm:$0xff] %v4614
        %4725 = vst [vmem:[%s218 + $0x188] sm:$0xff] %v4617
        %4726 = vst [vmem:[%s218 + $0x190] sm:$0xff] %v4622
        %4727 = vst [vmem:[%s218 + $0x198] sm:$0xff] %v4625
        %4728 = vst [vmem:[%s218 + $0x1a0] sm:$0xff] %v4630
        %4729 = vst [vmem:[%s218 + $0x1a8] sm:$0xff] %v4633
        %4730 = vst [vmem:[%s218 + $0x1b0] sm:$0xff] %v4638
        %4731 = vst [vmem:[%s218 + $0x1b8] sm:$0xff] %v4641
        %4732 = vst [vmem:[%s218 + $0x1c0] sm:$0xff] %v4646
        %4733 = vst [vmem:[%s218 + $0x1c8] sm:$0xff] %v4649
        %4734 = vst [vmem:[%s218 + $0x1d0] sm:$0xff] %v4654
        %4735 = vst [vmem:[%s218 + $0x1d8] sm:$0xff] %v4657
        %4736 = vst [vmem:[%s218 + $0x1e0] sm:$0xff] %v4662
        %4737 = vst [vmem:[%s218 + $0x1e8] sm:$0xff] %v4665
        %4738 = vst [vmem:[%s218 + $0x1f0] sm:$0xff] %v4670
        %4739 = vst [vmem:[%s218 + $0x1f8] sm:$0xff] %v4673
        %s4740 = sand.u32 %s137, 1
        %s4741 = scalar_lea.sflag [#allocation3], %s4740
        %s4742 = sand.u32 %s137, 1
        %s4743 = smul.addr %s4742, 512
        %s4744 = scalar_lea.vmem [#allocation2], %s4743
        // Predicated region
        $region41: #{mlp_forward.1} parent=39 // pred_check
          %p4745 = pneg %p147
        $region42: #{mlp_forward.1} parent=39 // pred_check_branch
          %4747 = sbr.rel (%p4745) target = $region44
        $region43: #{mlp_forward.1} parent=39 // pred_region
          %s4748 = smul.u32 64, %s19
          %s4750 = ssub.s32 8192, 8192
          %4751 = vsyncadd %s4741, %s4750
          %s4752 = smul.addr %s4748, 128
          %s4753 = scalar_lea.hbm %s5, %s4752
          %s4754 = sshll.u32 %s4744, 4
          %s4755 = int_to_ptr.vmem [resolvable:$true] %s4754
          %4760 = dma.vmem_to_hbm [thread:$0]  %s4755, 8192, %s4753, %s4741, 128, 128, 8
        $region44: #{mlp_forward.1} parent=39 // pred_fallthru
          _
      $region40: #{mlp_forward.1} parent=5 // pred_fallthru
        _
      %p4761 = scmp.le.s32.totalorder 2, %s14
      // Predicated region
      $region45: #{mlp_forward.1} parent=5 // pred_check
        %p4762 = pneg %p4761
      $region46: #{mlp_forward.1} parent=5 // pred_check_branch
        %4764 = sbr.rel (%p4762) target = $region48
      $region47: #{mlp_forward.1} parent=5 // pred_region
        %s4765 = ssub.s32 %s14, 2
        // Predicated region
        $region49: #{mlp_forward.1} parent=47 // pred_check
          %p4766 = pneg %p153
        $region50: #{mlp_forward.1} parent=47 // pred_check_branch
          %4768 = sbr.rel (%p4766) target = $region52
        $region51: #{mlp_forward.1} parent=47 // pred_region
          %s4769 = sand.u32 %s138, 1
          %s4770 = scalar_lea.sflag [#allocation3], %s4769
          %s4771 = sand.u32 %s138, 1
          %s4772 = smul.addr %s4771, 512
          %s4773 = scalar_lea.vmem [#allocation2], %s4772
          %4774 = dma.done %s4770, 8192
        $region52: #{mlp_forward.1} parent=47 // pred_fallthru
          _
      $region48: #{mlp_forward.1} parent=5 // pred_fallthru
        _
    $region6: #{mlp_forward.1} parent=1 // loop_footer
      %s18 = sadd.s32 1, %s14
    $region7: #{mlp_forward.1} parent=1 // loop_footer_branch
      %13 = sbr.rel target = $region3
    $region8: #{mlp_forward.1} parent=1 // loop_exit
      _
    %4775 = vsyncpa [#allocation3], 1
    %s4776 = scalar_lea.sflag [#allocation3], 1
    %4777 = vsyncpa %s4776, 1

</llo_original>
